<compile_context>
chip_gen: v5e
topology: v5e:2x2
jax: 0.10.0
libtpu: 0.0.40
codegen_flags: <defaults>
</compile_context>

<pallas_src>
import math

import jax
import jax.numpy as jnp
from jax.experimental import pallas as pl
from jax.experimental.pallas import tpu as pltpu

# ---------------- config (small synthetic T5) -------------------------------
VOCAB = 64
D_MODEL = 32
N_HEADS = 2
D_KV = 16
INNER = N_HEADS * D_KV
D_FF = 64
N_LAYERS = 2
REL_BUCKETS = 32
REL_MAX_DIST = 128
NEG = -1e9  # additive mask value

_STACK_PARAMS = pltpu.CompilerParams(dimension_semantics=("parallel", "arbitrary"))
_BATCH_PARALLEL = pltpu.CompilerParams(dimension_semantics=("parallel",))


# ---------------- in-kernel helpers ------------------------------------------
def _rms(x, w):
    """T5 LayerNorm (RMSNorm). x: (S, D) f32, w: (1, D) f32."""
    var = jnp.mean(x * x, axis=-1, keepdims=True)
    return x * jax.lax.rsqrt(var + 1e-6) * w


def _bdot(a, b):
    """bf16 MXU matmul with f32 accumulation."""
    return jnp.dot(a.astype(jnp.bfloat16), b.astype(jnp.bfloat16),
                   preferred_element_type=jnp.float32)


def _proj_heads(x, w):
    """Head-major projection: x (S, D), w (H, D, E) -> (H, S, E) f32.

    One batched MXU einsum; x is broadcast over the head axis so the result
    is already head-leading (no transposes / lane concatenation needed)."""
    xb = jnp.broadcast_to(x.astype(jnp.bfloat16)[None], (N_HEADS,) + x.shape)
    return jnp.einsum("hsd,hde->hse", xb, w.astype(jnp.bfloat16),
                      preferred_element_type=jnp.float32)


def _mha(qh, kh, vh, bias, mask, *, approx=True):
    """Head-batched attention core (softmax in f32).

    qh: (H, Sq, d), kh/vh: (H, Sk, d) f32; bias: (H, Sq, Sk) additive or None;
    mask: (1, Sk) additive or None.  Returns (H, Sq, d) f32."""
    s = jnp.einsum("hqd,hkd->hqk", qh.astype(jnp.bfloat16), kh.astype(jnp.bfloat16),
                   preferred_element_type=jnp.float32)
    if bias is not None:
        s = s + bias
    if mask is not None:
        s = s + mask
    m = jnp.max(s, axis=-1, keepdims=True)
    p = jnp.exp(s - m)
    denom = jnp.sum(p, axis=-1, keepdims=True)
    if approx:
        p = p * pl.reciprocal(denom, approx=True)   # EUP slot (training path)
    else:
        p = p / denom                               # exact divide (greedy decode)
    return jnp.einsum("hqk,hkd->hqd", p.astype(jnp.bfloat16), vh.astype(jnp.bfloat16),
                      preferred_element_type=jnp.float32)


def _proj_out(ctx_h, wo):
    """Output projection fused over heads: ctx (H,S,d), wo (H,d,D) -> (S,D)."""
    o = jnp.einsum("hqd,hdm->hqm", ctx_h.astype(jnp.bfloat16), wo.astype(jnp.bfloat16),
                   preferred_element_type=jnp.float32)
    return jnp.sum(o, axis=0)


# ---------------- fused Pallas kernels ----------------------------------------
def _enc_stack_kernel(x_ref, bias_ref, mask_ref,
                      ln_sa_ref, wqkv_ref, wo_sa_ref,
                      ln_ff_ref, wi_ref, wo_ff_ref, final_ln_ref,
                      o_ref, x_sc):
    """One grid step = one (batch item, layer).  Activation lives in VMEM scratch."""
    l = pl.program_id(1)
    last = pl.num_programs(1) - 1

    @pl.when(l == 0)
    def _():
        x_sc[...] = x_ref[0]

    x = x_sc[...]                       # (S, D) residual stream
    bias = bias_ref[...]                # (H, S, S) shared rel-pos bias
    mask = mask_ref[0]                  # (1, S) additive padding mask

    # self-attention sub-block
    h = _rms(x, ln_sa_ref[0])
    qkv = _proj_heads(h, wqkv_ref[0])                       # (H, S, 3*D_KV)
    ctx = _mha(qkv[..., :D_KV], qkv[..., D_KV:2 * D_KV], qkv[..., 2 * D_KV:],
               bias, mask)
    x = x + _proj_out(ctx, wo_sa_ref[0])

    # feed-forward sub-block (dropout omitted: eval-mode equivalent)
    h = _rms(x, ln_ff_ref[0])
    h = jnp.maximum(_bdot(h, wi_ref[0]), 0.0)
    x = x + _bdot(h, wo_ff_ref[0])

    x_sc[...] = x
    # final encoder RMSNorm fused into the last layer step
    o_ref[0] = jnp.where(l == last, _rms(x, final_ln_ref[...]), x)


def _dec_stack_kernel(x_ref, enc_ref, sbias_ref, cmask_ref,
                      ln_sa_ref, wqkv_ref, wo_sa_ref,
                      ln_ca_ref, wq_ca_ref, wkv_ca_ref, wo_ca_ref,
                      ln_ff_ref, wi_ref, wo_ff_ref,
                      o_ref, x_sc):
    l = pl.program_id(1)

    @pl.when(l == 0)
    def _():
        x_sc[...] = x_ref[0]

    x = x_sc[...]                       # (St, D)
    enc = enc_ref[0]                    # (Ss, D)
    sbias = sbias_ref[...]              # (H, St, St) rel-pos bias + causal NEG
    cmask = cmask_ref[0]                # (1, Ss)

    # masked self-attention
    h = _rms(x, ln_sa_ref[0])
    qkv = _proj_heads(h, wqkv_ref[0])
    ctx = _mha(qkv[..., :D_KV], qkv[..., D_KV:2 * D_KV], qkv[..., 2 * D_KV:],
               sbias, None)
    x = x + _proj_out(ctx, wo_sa_ref[0])

    # cross-attention (K/V from encoder output, no position bias)
    h = _rms(x, ln_ca_ref[0])
    q = _proj_heads(h, wq_ca_ref[0])                        # (H, St, D_KV)
    kv = _proj_heads(enc, wkv_ca_ref[0])                    # (H, Ss, 2*D_KV)
    ctx = _mha(q, kv[..., :D_KV], kv[..., D_KV:], None, cmask)
    x = x + _proj_out(ctx, wo_ca_ref[0])

    # feed-forward
    h = _rms(x, ln_ff_ref[0])
    h = jnp.maximum(_bdot(h, wi_ref[0]), 0.0)
    x = x + _bdot(h, wo_ff_ref[0])

    x_sc[...] = x
    o_ref[0] = x


def _lmhead_ce_kernel(x_ref, ln_ref, w_ref, lab_ref, o_ref):
    """Fused final-RMSNorm + tied LM head + mean cross-entropy (ignore=-100).

    Logits stay in VMEM; CE is fully vectorized (no per-row loop)."""
    x = _rms(x_ref[...], ln_ref[...])                       # (N, D)
    logits = _bdot(x, w_ref[...])                           # (N, V) f32
    lab = lab_ref[...]                                      # (N, 1) int32
    m = jnp.max(logits, axis=-1, keepdims=True)
    lse = jnp.log(jnp.sum(jnp.exp(logits - m), axis=-1, keepdims=True)) + m
    iota = jax.lax.broadcasted_iota(jnp.int32, logits.shape, 1)
    tgt = jnp.sum(jnp.where(iota == lab, logits, 0.0), axis=-1, keepdims=True)
    valid = (lab >= 0).astype(jnp.float32)
    total = jnp.sum((lse - tgt) * valid, axis=0, keepdims=True)   # (1, 1)
    cnt = jnp.maximum(jnp.sum(valid, axis=0, keepdims=True), 1.0)
    o_ref[0, 0] = (total / cnt)[0, 0]


def _greedy_decode_kernel(enc_ref, cmask_ref, sbias_ref, shared_ref, fln_ref, lmw_ref,
                          ln_sa_ref, wqkv_ref, wo_sa_ref,
                          ln_ca_ref, wq_ca_ref, wkv_ca_ref, wo_ca_ref,
                          ln_ff_ref, wi_ref, wo_ff_ref,
                          ids_ref, kc_ref, vc_ref, ek_ref, ev_ref):
    """Entire greedy decode for one batch item in a single kernel.

    KV cache and cross-attention K/V live in VMEM scratch; token embedding,
    all decoder layers, LM head, argmax and the ids write-back happen
    in-kernel inside a pl.loop over positions."""
    T = ids_ref.shape[1]
    enc = enc_ref[0]                                        # (Ss, D)
    cmask = cmask_ref[0]                                    # (1, Ss)
    emb = shared_ref[...].astype(jnp.bfloat16)              # (V, D)
    fln = fln_ref[...]                                      # (1, D)
    vio = jax.lax.broadcasted_iota(jnp.int32, (1, VOCAB), 1)

    # cross-attention K/V never change while decoding: project once per layer
    for li in range(N_LAYERS):
        kv = _proj_heads(enc, wkv_ca_ref[li])               # (H, Ss, 2*D_KV)
        ek_ref[li] = kv[..., :D_KV]
        ev_ref[li] = kv[..., D_KV:]

    kc_ref[...] = jnp.zeros_like(kc_ref)
    vc_ref[...] = jnp.zeros_like(vc_ref)
    ids_ref[...] = jnp.zeros_like(ids_ref)                  # decoder_start_token_id = 0

    @pl.loop(0, T - 1)
    def _(t):
        # current token -> embedding via one-hot matmul (in-VMEM gather)
        tok = ids_ref[:, pl.ds(t, 1), :].reshape(1, 1)      # (1, 1) int32
        onehot = (vio == tok).astype(jnp.bfloat16)          # (1, V)
        x = jnp.dot(onehot, emb, preferred_element_type=jnp.float32)   # (1, D)
        sbias_t = sbias_ref[:, pl.ds(t, 1), :]              # (H, 1, T) incl. causal NEG

        for li in range(N_LAYERS):
            # masked self-attention against the in-VMEM KV cache
            h = _rms(x, ln_sa_ref[li])
            qkv = _proj_heads(h, wqkv_ref[li])              # (H, 1, 3*D_KV)
            kc_ref[li, :, pl.ds(t, 1), :] = qkv[..., D_KV:2 * D_KV]
            vc_ref[li, :, pl.ds(t, 1), :] = qkv[..., 2 * D_KV:]
            ctx = _mha(qkv[..., :D_KV], kc_ref[li], vc_ref[li], sbias_t, None,
                       approx=False)
            x = x + _proj_out(ctx, wo_sa_ref[li])
            # cross-attention against the precomputed encoder K/V
            h = _rms(x, ln_ca_ref[li])
            q = _proj_heads(h, wq_ca_ref[li])
            ctx = _mha(q, ek_ref[li], ev_ref[li], None, cmask, approx=False)
            x = x + _proj_out(ctx, wo_ca_ref[li])
            # feed-forward
            h = _rms(x, ln_ff_ref[li])
            h = jnp.maximum(_bdot(h, wi_ref[li]), 0.0)
            x = x + _bdot(h, wo_ff_ref[li])

        # fused final-LN + tied LM head on the single new position + greedy argmax
        logits = _bdot(_rms(x, fln), lmw_ref[...])          # (1, V) f32
        mx = jnp.max(logits, axis=-1, keepdims=True)
        nxt = jnp.min(jnp.where(logits >= mx, vio, VOCAB), axis=-1, keepdims=True)
        ids_ref[:, pl.ds(t + 1, 1), :] = nxt.astype(jnp.int32)[:, :, None]


# ---------------- pallas_call wrappers ----------------------------------------
def encoder_forward(params, input_ids, attention_mask):
    B, S = input_ids.shape
    D, L, H = D_MODEL, N_LAYERS, N_HEADS
    x = params["shared"][input_ids]                         # (B, S, D) f32
    bias = compute_position_bias(params["enc_rel_bias"], S, S, True)
    mask_add = additive_mask(attention_mask)
    enc = params["enc"]
    return pl.pallas_call(
        _enc_stack_kernel,
        grid=(B, L),
        in_specs=[
            pl.BlockSpec((1, S, D), lambda b, l: (b, 0, 0)),                     # x (emb)
            pl.BlockSpec((H, S, S), lambda b, l: (0, 0, 0)),                     # rel bias
            pl.BlockSpec((1, 1, S), lambda b, l: (b, 0, 0)),                     # pad mask
            pl.BlockSpec((1, 1, D), lambda b, l: (l, 0, 0)),                     # ln_sa
            pl.BlockSpec((1, H, D, 3 * D_KV), lambda b, l: (l, 0, 0, 0)),        # wqkv
            pl.BlockSpec((1, H, D_KV, D), lambda b, l: (l, 0, 0, 0)),            # wo_sa
            pl.BlockSpec((1, 1, D), lambda b, l: (l, 0, 0)),                     # ln_ff
            pl.BlockSpec((1, D, D_FF), lambda b, l: (l, 0, 0)),                  # wi
            pl.BlockSpec((1, D_FF, D), lambda b, l: (l, 0, 0)),                  # wo_ff
            pl.BlockSpec((1, D), lambda b, l: (0, 0)),                           # final ln
        ],
        out_specs=pl.BlockSpec((1, S, D), lambda b, l: (b, 0, 0)),
        out_shape=jax.ShapeDtypeStruct((B, S, D), jnp.float32),
        scratch_shapes=[pltpu.VMEM((S, D), jnp.float32)],
        compiler_params=_STACK_PARAMS,
    )(x, bias, mask_add,
      enc["ln_sa"], enc["wqkv"], enc["wo_sa"],
      enc["ln_ff"], enc["wi"], enc["wo_ff"], params["enc_final_ln"])


def decoder_forward_train(params, dec_ids, enc_out, enc_mask):
    B, St = dec_ids.shape
    Ss = enc_out.shape[1]
    D, L, H = D_MODEL, N_LAYERS, N_HEADS
    x = params["shared"][dec_ids]
    causal_neg = (1.0 - jnp.tril(jnp.ones((St, St), jnp.float32))) * NEG
    sbias = compute_position_bias(params["dec_rel_bias"], St, St, False) + causal_neg[None]
    cmask_add = additive_mask(enc_mask)
    dec = params["dec"]
    return pl.pallas_call(
        _dec_stack_kernel,
        grid=(B, L),
        in_specs=[
            pl.BlockSpec((1, St, D), lambda b, l: (b, 0, 0)),
            pl.BlockSpec((1, Ss, D), lambda b, l: (b, 0, 0)),
            pl.BlockSpec((H, St, St), lambda b, l: (0, 0, 0)),
            pl.BlockSpec((1, 1, Ss), lambda b, l: (b, 0, 0)),
            pl.BlockSpec((1, 1, D), lambda b, l: (l, 0, 0)),
            pl.BlockSpec((1, H, D, 3 * D_KV), lambda b, l: (l, 0, 0, 0)),
            pl.BlockSpec((1, H, D_KV, D), lambda b, l: (l, 0, 0, 0)),
            pl.BlockSpec((1, 1, D), lambda b, l: (l, 0, 0)),
            pl.BlockSpec((1, H, D, D_KV), lambda b, l: (l, 0, 0, 0)),
            pl.BlockSpec((1, H, D, 2 * D_KV), lambda b, l: (l, 0, 0, 0)),
            pl.BlockSpec((1, H, D_KV, D), lambda b, l: (l, 0, 0, 0)),
            pl.BlockSpec((1, 1, D), lambda b, l: (l, 0, 0)),
            pl.BlockSpec((1, D, D_FF), lambda b, l: (l, 0, 0)),
            pl.BlockSpec((1, D_FF, D), lambda b, l: (l, 0, 0)),
        ],
        out_specs=pl.BlockSpec((1, St, D), lambda b, l: (b, 0, 0)),
        out_shape=jax.ShapeDtypeStruct((B, St, D), jnp.float32),
        scratch_shapes=[pltpu.VMEM((St, D), jnp.float32)],
        compiler_params=_STACK_PARAMS,
    )(x, enc_out, sbias, cmask_add,
      dec["ln_sa"], dec["wqkv"], dec["wo_sa"],
      dec["ln_ca"], dec["wq_ca"], dec["wkv_ca"], dec["wo_ca"],
      dec["ln_ff"], dec["wi"], dec["wo_ff"])


def lmhead_ce_loss(dec_h, ln_w, lm_w, labels):
    B, St, D = dec_h.shape
    N = B * St
    x2d = dec_h.reshape(N, D)
    lab = labels.reshape(N, 1).astype(jnp.int32)
    loss = pl.pallas_call(
        _lmhead_ce_kernel,
        grid=(1,),
        in_specs=[
            pl.BlockSpec((N, D), lambda i: (0, 0)),
            pl.BlockSpec((1, D), lambda i: (0, 0)),
            pl.BlockSpec((D, VOCAB), lambda i: (0, 0)),
            pl.BlockSpec((N, 1), lambda i: (0, 0)),
        ],
        out_specs=pl.BlockSpec(memory_space=pltpu.SMEM),
        out_shape=jax.ShapeDtypeStruct((1, 1), jnp.float32),
    )(x2d, ln_w, lm_w, lab)
    return loss[0, 0]


def greedy_decode(params, enc_out, enc_mask, max_len):
    B, Ss, _ = enc_out.shape
    T = max_len
    D, L, H = D_MODEL, N_LAYERS, N_HEADS
    cmask_add = additive_mask(enc_mask)
    causal_neg = (1.0 - jnp.tril(jnp.ones((T, T), jnp.float32))) * NEG
    sbias = compute_position_bias(params["dec_rel_bias"], T, T, False) + causal_neg[None]
    dec = params["dec"]

    def _c2(b): return (0, 0)
    def _c3(b): return (0, 0, 0)
    def _c4(b): return (0, 0, 0, 0)
    def _b3(b): return (b, 0, 0)

    ids = pl.pallas_call(
        _greedy_decode_kernel,
        grid=(B,),
        in_specs=[
            pl.BlockSpec((1, Ss, D), _b3),                      # encoder output
            pl.BlockSpec((1, 1, Ss), _b3),                      # cross additive mask
            pl.BlockSpec((H, T, T), _c3),                       # self bias + causal
            pl.BlockSpec((VOCAB, D), _c2),                      # shared embedding
            pl.BlockSpec((1, D), _c2),                          # decoder final LN
            pl.BlockSpec((D, VOCAB), _c2),                      # tied LM head weight
            pl.BlockSpec((L, 1, D), _c3),                       # ln_sa (stacked)
            pl.BlockSpec((L, H, D, 3 * D_KV), _c4),             # wqkv
            pl.BlockSpec((L, H, D_KV, D), _c4),                 # wo_sa
            pl.BlockSpec((L, 1, D), _c3),                       # ln_ca
            pl.BlockSpec((L, H, D, D_KV), _c4),                 # wq_ca
            pl.BlockSpec((L, H, D, 2 * D_KV), _c4),             # wkv_ca
            pl.BlockSpec((L, H, D_KV, D), _c4),                 # wo_ca
            pl.BlockSpec((L, 1, D), _c3),                       # ln_ff
            pl.BlockSpec((L, D, D_FF), _c3),                    # wi
            pl.BlockSpec((L, D_FF, D), _c3),                    # wo_ff
        ],
        out_specs=pl.BlockSpec((1, T, 1), _b3),
        out_shape=jax.ShapeDtypeStruct((B, T, 1), jnp.int32),
        scratch_shapes=[
            pltpu.VMEM((L, H, T, D_KV), jnp.float32),           # self-attn K cache
            pltpu.VMEM((L, H, T, D_KV), jnp.float32),           # self-attn V cache
            pltpu.VMEM((L, H, Ss, D_KV), jnp.float32),          # cross K (once)
            pltpu.VMEM((L, H, Ss, D_KV), jnp.float32),          # cross V (once)
        ],
        compiler_params=_BATCH_PARALLEL,
    )(enc_out, cmask_add, sbias, params["shared"], params["dec_final_ln"], params["lm_w"],
      dec["ln_sa"], dec["wqkv"], dec["wo_sa"],
      dec["ln_ca"], dec["wq_ca"], dec["wkv_ca"], dec["wo_ca"],
      dec["ln_ff"], dec["wi"], dec["wo_ff"])
    # TODO(synk): no EOS early-stopping (HF generate stops at eos); fixed-length greedy.
    return ids[:, :, 0]


# ---------------- T5 glue (plain JAX, tiny) -----------------------------------
def relative_position_bucket(rel_pos, bidirectional):
    n = REL_BUCKETS
    ret = jnp.zeros_like(rel_pos)
    if bidirectional:
        n = n // 2
        ret = ret + (rel_pos > 0).astype(jnp.int32) * n
        rel_pos = jnp.abs(rel_pos)
    else:
        rel_pos = -jnp.minimum(rel_pos, 0)
    max_exact = n // 2
    is_small = rel_pos < max_exact
    safe = jnp.maximum(rel_pos, 1).astype(jnp.float32)
    val_if_large = max_exact + (
        jnp.log(safe / max_exact) / math.log(REL_MAX_DIST / max_exact) * (n - max_exact)
    ).astype(jnp.int32)
    val_if_large = jnp.minimum(val_if_large, n - 1)
    return ret + jnp.where(is_small, rel_pos, val_if_large)


def compute_position_bias(rel_emb, q_len, k_len, bidirectional):
    ctx = jnp.arange(q_len)[:, None]
    mem = jnp.arange(k_len)[None, :]
    buckets = relative_position_bucket(mem - ctx, bidirectional)
    values = rel_emb[buckets]                          # (q, k, H)
    return jnp.transpose(values, (2, 0, 1))            # (H, q, k)


def additive_mask(mask):
    return (1.0 - mask.astype(jnp.float32))[:, None, :] * NEG   # (B, 1, S)


def shift_right(labels, decoder_start=0, pad=0):
    B = labels.shape[0]
    shifted = jnp.concatenate(
        [jnp.full((B, 1), decoder_start, labels.dtype), labels[:, :-1]], axis=1)
    return jnp.where(shifted == -100, pad, shifted)


def my_t5_forward(params, input_ids, input_masks, output_ids, do_train=False):
    enc_out = encoder_forward(params, input_ids, input_masks)
    if do_train:
        dec_in = shift_right(output_ids)
        dec_h = decoder_forward_train(params, dec_in, enc_out, input_masks)
        # fused final-LN + tied LM head + cross-entropy (logits never hit HBM)
        return lmhead_ce_loss(dec_h, params["dec_final_ln"], params["lm_w"], output_ids)
    return greedy_decode(params, enc_out, input_masks, output_ids.shape[1])


# ---------------- deterministic synthetic parameters -------------------------
def init_params(key):
    ks = iter(jax.random.split(key, 64))

    def w(shape, scale=0.02, dtype=jnp.bfloat16):
        return (jax.random.normal(next(ks), shape, jnp.float32) * scale).astype(dtype)

    def ln_stack():
        return jnp.ones((N_LAYERS, 1, D_MODEL), jnp.float32)

    # Attention weights are stored head-major (L, H, D, E) so the kernels can
    # produce head-leading Q/K/V with a single batched einsum.
    enc = dict(
        ln_sa=ln_stack(),
        wqkv=w((N_LAYERS, N_HEADS, D_MODEL, 3 * D_KV)),
        wo_sa=w((N_LAYERS, N_HEADS, D_KV, D_MODEL)),
        ln_ff=ln_stack(),
        wi=w((N_LAYERS, D_MODEL, D_FF)),
        wo_ff=w((N_LAYERS, D_FF, D_MODEL)),
    )
    dec = dict(
        ln_sa=ln_stack(),
        wqkv=w((N_LAYERS, N_HEADS, D_MODEL, 3 * D_KV)),
        wo_sa=w((N_LAYERS, N_HEADS, D_KV, D_MODEL)),
        ln_ca=ln_stack(),
        wq_ca=w((N_LAYERS, N_HEADS, D_MODEL, D_KV)),
        wkv_ca=w((N_LAYERS, N_HEADS, D_MODEL, 2 * D_KV)),
        wo_ca=w((N_LAYERS, N_HEADS, D_KV, D_MODEL)),
        ln_ff=ln_stack(),
        wi=w((N_LAYERS, D_MODEL, D_FF)),
        wo_ff=w((N_LAYERS, D_FF, D_MODEL)),
    )
    shared = w((VOCAB, D_MODEL), 1.0, jnp.float32)
    return dict(
        shared=shared,
        # tied LM head: embedding^T with d_model**-0.5 folded in, bf16 for the MXU
        lm_w=(shared.T * (D_MODEL ** -0.5)).astype(jnp.bfloat16),
        enc_rel_bias=w((REL_BUCKETS, N_HEADS), 0.02, jnp.float32),
        dec_rel_bias=w((REL_BUCKETS, N_HEADS), 0.02, jnp.float32),
        enc_final_ln=jnp.ones((1, D_MODEL), jnp.float32),
        dec_final_ln=jnp.ones((1, D_MODEL), jnp.float32),
        enc=enc, dec=dec)


if __name__ == "__main__":
    key = jax.random.PRNGKey(0)
    k_p, k_in, k_out = jax.random.split(key, 3)
    params = init_params(k_p)

    B, S_IN, S_OUT = 2, 8, 8
    input_ids = jax.random.randint(k_in, (B, S_IN), 2, VOCAB, dtype=jnp.int32)
    input_masks = jnp.ones((B, S_IN), jnp.int32).at[1, -2:].set(0)
    output_ids = jax.random.randint(k_out, (B, S_OUT), 2, VOCAB, dtype=jnp.int32)

    train_fn = jax.jit(lambda p, i, m, o: my_t5_forward(p, i, m, o, do_train=True))
    gen_fn = jax.jit(lambda p, i, m, o: my_t5_forward(p, i, m, o, do_train=False))

    # training path: scalar cross-entropy loss (3 Pallas launches total)
    loss = jax.block_until_ready(train_fn(params, input_ids, input_masks, output_ids))
    # inference path: fully in-kernel KV-cached greedy decode (2 Pallas launches)
    seqs = jax.block_until_ready(gen_fn(params, input_ids, input_masks, output_ids))

    assert jnp.isfinite(loss) and seqs.shape == (B, S_OUT)
    print("KERNEL_OK")
</pallas_src>

<mosaic_0001>
module attributes {stable_mosaic.version = 11 : i64} {
  func.func @_enc_stack_kernel(%arg0: i32, %arg1: i32, %arg2: memref<1x8x32xf32, #tpu.memory_space<vmem>>, %arg3: memref<2x8x8xf32, #tpu.memory_space<vmem>>, %arg4: memref<1x1x8xf32, #tpu.memory_space<vmem>>, %arg5: memref<1x1x32xf32, #tpu.memory_space<vmem>>, %arg6: memref<1x2x32x48xbf16, #tpu.memory_space<vmem>>, %arg7: memref<1x2x16x32xbf16, #tpu.memory_space<vmem>>, %arg8: memref<1x1x32xf32, #tpu.memory_space<vmem>>, %arg9: memref<1x32x64xbf16, #tpu.memory_space<vmem>>, %arg10: memref<1x64x32xbf16, #tpu.memory_space<vmem>>, %arg11: memref<1x32xf32, #tpu.memory_space<vmem>>, %arg12: memref<1x8x32xf32, #tpu.memory_space<vmem>>, %arg13: memref<8x32xf32, #tpu.memory_space<vmem>>) attributes {dimension_semantics = [#tpu.dimension_semantics<parallel>, #tpu.dimension_semantics<arbitrary>], iteration_bounds = array<i64: 2, 2>, scalar_prefetch = 0 : i64, scratch_operands = 1 : i64, tpu.core_type = #tpu.core_type<tc>, window_params = [{transform_indices = @transform_0, window_bounds = array<i64: 1, 8, 32>}, {pipeline_mode = #tpu.pipeline_mode<synchronous>, transform_indices = @transform_1, window_bounds = array<i64: 2, 8, 8>}, {transform_indices = @transform_2, window_bounds = array<i64: 1, 1, 8>}, {transform_indices = @transform_3, window_bounds = array<i64: 1, 1, 32>}, {transform_indices = @transform_4, window_bounds = array<i64: 1, 2, 32, 48>}, {transform_indices = @transform_5, window_bounds = array<i64: 1, 2, 16, 32>}, {transform_indices = @transform_6, window_bounds = array<i64: 1, 1, 32>}, {transform_indices = @transform_7, window_bounds = array<i64: 1, 32, 64>}, {transform_indices = @transform_8, window_bounds = array<i64: 1, 64, 32>}, {pipeline_mode = #tpu.pipeline_mode<synchronous>, transform_indices = @transform_9, window_bounds = array<i64: 1, 32>}, {transform_indices = @transform_10, window_bounds = array<i64: 1, 8, 32>}]} {
    %c0_i32 = arith.constant 0 : i32
    %0 = arith.cmpi eq, %arg1, %c0_i32 : i32
    %1 = arith.extui %0 : i1 to i32
    %c0_i32_0 = arith.constant 0 : i32
    %2 = arith.cmpi ne, %1, %c0_i32_0 : i32
    scf.if %2 {
      %c0_53 = arith.constant 0 : index
      %c0_54 = arith.constant 0 : index
      %c0_55 = arith.constant 0 : index
      %101 = vector.load %arg2[%c0_53, %c0_54, %c0_55] : memref<1x8x32xf32, #tpu.memory_space<vmem>>, vector<1x8x32xf32>
      %102 = vector.shape_cast %101 : vector<1x8x32xf32> to vector<8x32xf32>
      %c0_56 = arith.constant 0 : index
      %c0_57 = arith.constant 0 : index
      %103 = vector.load %arg13[%c0_56, %c0_57] : memref<8x32xf32, #tpu.memory_space<vmem>>, vector<8x32xf32>
      tpu.vector_store %arg13[%c0_56, %c0_57], %102 {strides = array<i32>} : memref<8x32xf32, #tpu.memory_space<vmem>>, vector<8x32xf32>,
    } else {
    }
    %c0 = arith.constant 0 : index
    %c0_1 = arith.constant 0 : index
    %3 = vector.load %arg13[%c0, %c0_1] : memref<8x32xf32, #tpu.memory_space<vmem>>, vector<8x32xf32>
    %c0_2 = arith.constant 0 : index
    %c0_3 = arith.constant 0 : index
    %c0_4 = arith.constant 0 : index
    %4 = vector.load %arg3[%c0_2, %c0_3, %c0_4] : memref<2x8x8xf32, #tpu.memory_space<vmem>>, vector<2x8x8xf32>
    %c0_5 = arith.constant 0 : index
    %c0_6 = arith.constant 0 : index
    %c0_7 = arith.constant 0 : index
    %5 = vector.load %arg4[%c0_5, %c0_6, %c0_7] : memref<1x1x8xf32, #tpu.memory_space<vmem>>, vector<1x1x8xf32>
    %6 = vector.shape_cast %5 : vector<1x1x8xf32> to vector<1x8xf32>
    %c0_8 = arith.constant 0 : index
    %c0_9 = arith.constant 0 : index
    %c0_10 = arith.constant 0 : index
    %7 = vector.load %arg5[%c0_8, %c0_9, %c0_10] : memref<1x1x32xf32, #tpu.memory_space<vmem>>, vector<1x1x32xf32>
    %8 = vector.shape_cast %7 : vector<1x1x32xf32> to vector<1x32xf32>
    %9 = arith.mulf %3, %3 : vector<8x32xf32>
    %cst = arith.constant dense<0.000000e+00> : vector<8xf32>
    %10 = vector.multi_reduction <add>, %9, %cst [1] : vector<8x32xf32> to vector<8xf32>
    %11 = vector.shape_cast %10 : vector<8xf32> to vector<8x1xf32>
    %cst_11 = arith.constant 3.200000e+01 : f32
    %12 = vector.broadcast %cst_11 : f32 to vector<8x1xf32>
    %13 = arith.divf %11, %12 : vector<8x1xf32>
    %cst_12 = arith.constant 9.99999997E-7 : f32
    %14 = vector.broadcast %cst_12 : f32 to vector<8x1xf32>
    %15 = arith.addf %13, %14 : vector<8x1xf32>
    %16 = math.rsqrt %15 : vector<8x1xf32>
    %17 = vector.broadcast %16 : vector<8x1xf32> to vector<8x32xf32>
    %18 = arith.mulf %3, %17 : vector<8x32xf32>
    %19 = vector.broadcast %8 : vector<1x32xf32> to vector<8x32xf32>
    %20 = arith.mulf %18, %19 : vector<8x32xf32>
    %c0_13 = arith.constant 0 : index
    %c0_14 = arith.constant 0 : index
    %c0_15 = arith.constant 0 : index
    %c0_16 = arith.constant 0 : index
    %21 = vector.load %arg6[%c0_13, %c0_14, %c0_15, %c0_16] : memref<1x2x32x48xbf16, #tpu.memory_space<vmem>>, vector<1x2x32x48xbf16>
    %22 = vector.shape_cast %21 : vector<1x2x32x48xbf16> to vector<2x32x48xbf16>
    %23 = arith.truncf %20 : vector<8x32xf32> to vector<8x32xbf16>
    %24 = vector.shape_cast %23 : vector<8x32xbf16> to vector<1x8x32xbf16>
    %25 = vector.shape_cast %24 : vector<1x8x32xbf16> to vector<1x8x32xbf16>
    %26 = vector.broadcast %25 : vector<1x8x32xbf16> to vector<2x8x32xbf16>
    "tpu.trace_start"() <{level = 10 : i32, message = "hsd,hde->hse"}> : () -> ()
    %cst_17 = arith.constant dense<0.000000e+00> : vector<2x8x48xf32>
    %27 = tpu.matmul %26, %22, %cst_17 {dimension_numbers = #tpu.dot_dimension_numbers<[2], [1], [1], [2], [0, 0, 0, 1, 1, 2], [0], [0]>} : vector<2x8x32xbf16>, vector<2x32x48xbf16>, vector<2x8x48xf32> -> vector<2x8x48xf32>
    "tpu.trace_stop"() : () -> ()
    %28 = vector.extract_strided_slice %27 {offsets = [0, 0, 0], sizes = [2, 8, 16], strides = [1, 1, 1]} : vector<2x8x48xf32> to vector<2x8x16xf32>
    %29 = vector.extract_strided_slice %27 {offsets = [0, 0, 16], sizes = [2, 8, 16], strides = [1, 1, 1]} : vector<2x8x48xf32> to vector<2x8x16xf32>
    %30 = vector.extract_strided_slice %27 {offsets = [0, 0, 32], sizes = [2, 8, 16], strides = [1, 1, 1]} : vector<2x8x48xf32> to vector<2x8x16xf32>
    %31 = arith.truncf %28 : vector<2x8x16xf32> to vector<2x8x16xbf16>
    %32 = arith.truncf %29 : vector<2x8x16xf32> to vector<2x8x16xbf16>
    "tpu.trace_start"() <{level = 10 : i32, message = "hqd,hkd->hqk"}> : () -> ()
    %cst_18 = arith.constant dense<0.000000e+00> : vector<2x8x8xf32>
    %33 = tpu.matmul %31, %32, %cst_18 {dimension_numbers = #tpu.dot_dimension_numbers<[2], [2], [1], [1], [0, 0, 0, 1, 1, 1], [0], [0]>} : vector<2x8x16xbf16>, vector<2x8x16xbf16>, vector<2x8x8xf32> -> vector<2x8x8xf32>
    "tpu.trace_stop"() : () -> ()
    %34 = arith.addf %33, %4 : vector<2x8x8xf32>
    %35 = vector.shape_cast %6 : vector<1x8xf32> to vector<1x1x8xf32>
    %36 = vector.broadcast %35 : vector<1x1x8xf32> to vector<2x8x8xf32>
    %37 = arith.addf %34, %36 : vector<2x8x8xf32>
    %cst_19 = arith.constant dense<0xFF800000> : vector<2x8xf32>
    %38 = vector.multi_reduction <maximumf>, %37, %cst_19 [2] : vector<2x8x8xf32> to vector<2x8xf32>
    %39 = vector.shape_cast %38 : vector<2x8xf32> to vector<2x8x1xf32>
    %40 = vector.broadcast %39 : vector<2x8x1xf32> to vector<2x8x8xf32>
    %41 = arith.subf %37, %40 : vector<2x8x8xf32>
    %42 = math.exp %41 : vector<2x8x8xf32>
    %cst_20 = arith.constant dense<0.000000e+00> : vector<2x8xf32>
    %43 = vector.multi_reduction <add>, %42, %cst_20 [2] : vector<2x8x8xf32> to vector<2x8xf32>
    %44 = vector.shape_cast %43 : vector<2x8xf32> to vector<2x8x1xf32>
    %45 = tpu.reciprocal %44 {approx = true} : vector<2x8x1xf32> -> vector<2x8x1xf32>
    %46 = vector.broadcast %45 : vector<2x8x1xf32> to vector<2x8x8xf32>
    %47 = arith.mulf %42, %46 : vector<2x8x8xf32>
    %48 = arith.truncf %47 : vector<2x8x8xf32> to vector<2x8x8xbf16>
    %49 = arith.truncf %30 : vector<2x8x16xf32> to vector<2x8x16xbf16>
    "tpu.trace_start"() <{level = 10 : i32, message = "hqk,hkd->hqd"}> : () -> ()
    %cst_21 = arith.constant dense<0.000000e+00> : vector<2x8x16xf32>
    %50 = tpu.matmul %48, %49, %cst_21 {dimension_numbers = #tpu.dot_dimension_numbers<[2], [1], [1], [2], [0, 0, 0, 1, 1, 2], [0], [0]>} : vector<2x8x8xbf16>, vector<2x8x16xbf16>, vector<2x8x16xf32> -> vector<2x8x16xf32>
    "tpu.trace_stop"() : () -> ()
    %c0_22 = arith.constant 0 : index
    %c0_23 = arith.constant 0 : index
    %c0_24 = arith.constant 0 : index
    %c0_25 = arith.constant 0 : index
    %51 = vector.load %arg7[%c0_22, %c0_23, %c0_24, %c0_25] : memref<1x2x16x32xbf16, #tpu.memory_space<vmem>>, vector<1x2x16x32xbf16>
    %52 = vector.shape_cast %51 : vector<1x2x16x32xbf16> to vector<2x16x32xbf16>
    %53 = arith.truncf %50 : vector<2x8x16xf32> to vector<2x8x16xbf16>
    "tpu.trace_start"() <{level = 10 : i32, message = "hqd,hdm->hqm"}> : () -> ()
    %cst_26 = arith.constant dense<0.000000e+00> : vector<2x8x32xf32>
    %54 = tpu.matmul %53, %52, %cst_26 {dimension_numbers = #tpu.dot_dimension_numbers<[2], [1], [1], [2], [0, 0, 0, 1, 1, 2], [0], [0]>} : vector<2x8x16xbf16>, vector<2x16x32xbf16>, vector<2x8x32xf32> -> vector<2x8x32xf32>
    "tpu.trace_stop"() : () -> ()
    %cst_27 = arith.constant dense<0.000000e+00> : vector<8x32xf32>
    %55 = vector.multi_reduction <add>, %54, %cst_27 [0] : vector<2x8x32xf32> to vector<8x32xf32>
    %56 = arith.addf %3, %55 : vector<8x32xf32>
    %c0_28 = arith.constant 0 : index
    %c0_29 = arith.constant 0 : index
    %c0_30 = arith.constant 0 : index
    %57 = vector.load %arg8[%c0_28, %c0_29, %c0_30] : memref<1x1x32xf32, #tpu.memory_space<vmem>>, vector<1x1x32xf32>
    %58 = vector.shape_cast %57 : vector<1x1x32xf32> to vector<1x32xf32>
    %59 = arith.mulf %56, %56 : vector<8x32xf32>
    %cst_31 = arith.constant dense<0.000000e+00> : vector<8xf32>
    %60 = vector.multi_reduction <add>, %59, %cst_31 [1] : vector<8x32xf32> to vector<8xf32>
    %61 = vector.shape_cast %60 : vector<8xf32> to vector<8x1xf32>
    %cst_32 = arith.constant 3.200000e+01 : f32
    %62 = vector.broadcast %cst_32 : f32 to vector<8x1xf32>
    %63 = arith.divf %61, %62 : vector<8x1xf32>
    %cst_33 = arith.constant 9.99999997E-7 : f32
    %64 = vector.broadcast %cst_33 : f32 to vector<8x1xf32>
    %65 = arith.addf %63, %64 : vector<8x1xf32>
    %66 = math.rsqrt %65 : vector<8x1xf32>
    %67 = vector.broadcast %66 : vector<8x1xf32> to vector<8x32xf32>
    %68 = arith.mulf %56, %67 : vector<8x32xf32>
    %69 = vector.broadcast %58 : vector<1x32xf32> to vector<8x32xf32>
    %70 = arith.mulf %68, %69 : vector<8x32xf32>
    %c0_34 = arith.constant 0 : index
    %c0_35 = arith.constant 0 : index
    %c0_36 = arith.constant 0 : index
    %71 = vector.load %arg9[%c0_34, %c0_35, %c0_36] : memref<1x32x64xbf16, #tpu.memory_space<vmem>>, vector<1x32x64xbf16>
    %72 = vector.shape_cast %71 : vector<1x32x64xbf16> to vector<32x64xbf16>
    %73 = arith.truncf %70 : vector<8x32xf32> to vector<8x32xbf16>
    %cst_37 = arith.constant dense<0.000000e+00> : vector<8x64xf32>
    %74 = tpu.matmul %73, %72, %cst_37 {dimension_numbers = #tpu.dot_dimension_numbers<[1], [0], [0], [1], [0, 0, 1, 1], [], []>} : vector<8x32xbf16>, vector<32x64xbf16>, vector<8x64xf32> -> vector<8x64xf32>
    %cst_38 = arith.constant 0.000000e+00 : f32
    %75 = vector.broadcast %cst_38 : f32 to vector<8x64xf32>
    %76 = arith.maximumf %74, %75 : vector<8x64xf32>
    %c0_39 = arith.constant 0 : index
    %c0_40 = arith.constant 0 : index
    %c0_41 = arith.constant 0 : index
    %77 = vector.load %arg10[%c0_39, %c0_40, %c0_41] : memref<1x64x32xbf16, #tpu.memory_space<vmem>>, vector<1x64x32xbf16>
    %78 = vector.shape_cast %77 : vector<1x64x32xbf16> to vector<64x32xbf16>
    %79 = arith.truncf %76 : vector<8x64xf32> to vector<8x64xbf16>
    %cst_42 = arith.constant dense<0.000000e+00> : vector<8x32xf32>
    %80 = tpu.matmul %79, %78, %cst_42 {dimension_numbers = #tpu.dot_dimension_numbers<[1], [0], [0], [1], [0, 0, 1, 1], [], []>} : vector<8x64xbf16>, vector<64x32xbf16>, vector<8x32xf32> -> vector<8x32xf32>
    %81 = arith.addf %56, %80 : vector<8x32xf32>
    %c0_43 = arith.constant 0 : index
    %c0_44 = arith.constant 0 : index
    %82 = vector.load %arg13[%c0_43, %c0_44] : memref<8x32xf32, #tpu.memory_space<vmem>>, vector<8x32xf32>
    tpu.vector_store %arg13[%c0_43, %c0_44], %81 {strides = array<i32>} : memref<8x32xf32, #tpu.memory_space<vmem>>, vector<8x32xf32>,
    %c1_i32 = arith.constant 1 : i32
    %83 = arith.cmpi eq, %arg1, %c1_i32 : i32
    %c0_45 = arith.constant 0 : index
    %c0_46 = arith.constant 0 : index
    %84 = vector.load %arg11[%c0_45, %c0_46] : memref<1x32xf32, #tpu.memory_space<vmem>>, vector<1x32xf32>
    %85 = arith.mulf %81, %81 : vector<8x32xf32>
    %cst_47 = arith.constant dense<0.000000e+00> : vector<8xf32>
    %86 = vector.multi_reduction <add>, %85, %cst_47 [1] : vector<8x32xf32> to vector<8xf32>
    %87 = vector.shape_cast %86 : vector<8xf32> to vector<8x1xf32>
    %cst_48 = arith.constant 3.200000e+01 : f32
    %88 = vector.broadcast %cst_48 : f32 to vector<8x1xf32>
    %89 = arith.divf %87, %88 : vector<8x1xf32>
    %cst_49 = arith.constant 9.99999997E-7 : f32
    %90 = vector.broadcast %cst_49 : f32 to vector<8x1xf32>
    %91 = arith.addf %89, %90 : vector<8x1xf32>
    %92 = math.rsqrt %91 : vector<8x1xf32>
    %93 = vector.broadcast %92 : vector<8x1xf32> to vector<8x32xf32>
    %94 = arith.mulf %81, %93 : vector<8x32xf32>
    %95 = vector.broadcast %84 : vector<1x32xf32> to vector<8x32xf32>
    %96 = arith.mulf %94, %95 : vector<8x32xf32>
    %97 = arith.select %83, %96, %81 : vector<8x32xf32>
    %c0_50 = arith.constant 0 : index
    %c0_51 = arith.constant 0 : index
    %c0_52 = arith.constant 0 : index
    %98 = vector.load %arg12[%c0_50, %c0_51, %c0_52] : memref<1x8x32xf32, #tpu.memory_space<vmem>>, vector<1x8x32xf32>
    %99 = vector.shape_cast %98 : vector<1x8x32xf32> to vector<8x32xf32>
    %100 = vector.shape_cast %97 : vector<8x32xf32> to vector<1x8x32xf32>
    tpu.vector_store %arg12[%c0_50, %c0_51, %c0_52], %100 {strides = array<i32>} : memref<1x8x32xf32, #tpu.memory_space<vmem>>, vector<1x8x32xf32>,
    return
  }
  func.func @transform_0(%arg0: i32, %arg1: i32) -> (i32, i32, i32) {
    %c0_i32 = arith.constant 0 : i32
    %c0_i32_0 = arith.constant 0 : i32
    %c0_i32_1 = arith.constant 0 : i32
    return %arg0, %c0_i32, %c0_i32_0 : i32, i32, i32
  }
  func.func @transform_1(%arg0: i32, %arg1: i32) -> (i32, i32, i32) {
    %c0_i32 = arith.constant 0 : i32
    %c0_i32_0 = arith.constant 0 : i32
    %c0_i32_1 = arith.constant 0 : i32
    %c0_i32_2 = arith.constant 0 : i32
    return %c0_i32, %c0_i32_0, %c0_i32_1 : i32, i32, i32
  }
  func.func @transform_2(%arg0: i32, %arg1: i32) -> (i32, i32, i32) {
    %c0_i32 = arith.constant 0 : i32
    %c0_i32_0 = arith.constant 0 : i32
    %c0_i32_1 = arith.constant 0 : i32
    return %arg0, %c0_i32, %c0_i32_0 : i32, i32, i32
  }
  func.func @transform_3(%arg0: i32, %arg1: i32) -> (i32, i32, i32) {
    %c0_i32 = arith.constant 0 : i32
    %c0_i32_0 = arith.constant 0 : i32
    %c0_i32_1 = arith.constant 0 : i32
    return %arg1, %c0_i32, %c0_i32_0 : i32, i32, i32
  }
  func.func @transform_4(%arg0: i32, %arg1: i32) -> (i32, i32, i32, i32) {
    %c0_i32 = arith.constant 0 : i32
    %c0_i32_0 = arith.constant 0 : i32
    %c0_i32_1 = arith.constant 0 : i32
    %c0_i32_2 = arith.constant 0 : i32
    return %arg1, %c0_i32, %c0_i32_0, %c0_i32_1 : i32, i32, i32, i32
  }
  func.func @transform_5(%arg0: i32, %arg1: i32) -> (i32, i32, i32, i32) {
    %c0_i32 = arith.constant 0 : i32
    %c0_i32_0 = arith.constant 0 : i32
    %c0_i32_1 = arith.constant 0 : i32
    %c0_i32_2 = arith.constant 0 : i32
    return %arg1, %c0_i32, %c0_i32_0, %c0_i32_1 : i32, i32, i32, i32
  }
  func.func @transform_6(%arg0: i32, %arg1: i32) -> (i32, i32, i32) {
    %c0_i32 = arith.constant 0 : i32
    %c0_i32_0 = arith.constant 0 : i32
    %c0_i32_1 = arith.constant 0 : i32
    return %arg1, %c0_i32, %c0_i32_0 : i32, i32, i32
  }
  func.func @transform_7(%arg0: i32, %arg1: i32) -> (i32, i32, i32) {
    %c0_i32 = arith.constant 0 : i32
    %c0_i32_0 = arith.constant 0 : i32
    %c0_i32_1 = arith.constant 0 : i32
    return %arg1, %c0_i32, %c0_i32_0 : i32, i32, i32
  }
  func.func @transform_8(%arg0: i32, %arg1: i32) -> (i32, i32, i32) {
    %c0_i32 = arith.constant 0 : i32
    %c0_i32_0 = arith.constant 0 : i32
    %c0_i32_1 = arith.constant 0 : i32
    return %arg1, %c0_i32, %c0_i32_0 : i32, i32, i32
  }
  func.func @transform_9(%arg0: i32, %arg1: i32) -> (i32, i32) {
    %c0_i32 = arith.constant 0 : i32
    %c0_i32_0 = arith.constant 0 : i32
    %c0_i32_1 = arith.constant 0 : i32
    return %c0_i32, %c0_i32_0 : i32, i32
  }
  func.func @transform_10(%arg0: i32, %arg1: i32) -> (i32, i32, i32) {
    %c0_i32 = arith.constant 0 : i32
    %c0_i32_0 = arith.constant 0 : i32
    %c0_i32_1 = arith.constant 0 : i32
    return %arg0, %c0_i32, %c0_i32_0 : i32, i32, i32
  }
}

module attributes {stable_mosaic.version = 11 : i64} {
  func.func @_dec_stack_kernel(%arg0: i32, %arg1: i32, %arg2: memref<1x8x32xf32, #tpu.memory_space<vmem>>, %arg3: memref<1x8x32xf32, #tpu.memory_space<vmem>>, %arg4: memref<2x8x8xf32, #tpu.memory_space<vmem>>, %arg5: memref<1x1x8xf32, #tpu.memory_space<vmem>>, %arg6: memref<1x1x32xf32, #tpu.memory_space<vmem>>, %arg7: memref<1x2x32x48xbf16, #tpu.memory_space<vmem>>, %arg8: memref<1x2x16x32xbf16, #tpu.memory_space<vmem>>, %arg9: memref<1x1x32xf32, #tpu.memory_space<vmem>>, %arg10: memref<1x2x32x16xbf16, #tpu.memory_space<vmem>>, %arg11: memref<1x2x32x32xbf16, #tpu.memory_space<vmem>>, %arg12: memref<1x2x16x32xbf16, #tpu.memory_space<vmem>>, %arg13: memref<1x1x32xf32, #tpu.memory_space<vmem>>, %arg14: memref<1x32x64xbf16, #tpu.memory_space<vmem>>, %arg15: memref<1x64x32xbf16, #tpu.memory_space<vmem>>, %arg16: memref<1x8x32xf32, #tpu.memory_space<vmem>>, %arg17: memref<8x32xf32, #tpu.memory_space<vmem>>) attributes {dimension_semantics = [#tpu.dimension_semantics<parallel>, #tpu.dimension_semantics<arbitrary>], iteration_bounds = array<i64: 2, 2>, scalar_prefetch = 0 : i64, scratch_operands = 1 : i64, tpu.core_type = #tpu.core_type<tc>, window_params = [{transform_indices = @transform_0, window_bounds = array<i64: 1, 8, 32>}, {transform_indices = @transform_1, window_bounds = array<i64: 1, 8, 32>}, {pipeline_mode = #tpu.pipeline_mode<synchronous>, transform_indices = @transform_2, window_bounds = array<i64: 2, 8, 8>}, {transform_indices = @transform_3, window_bounds = array<i64: 1, 1, 8>}, {transform_indices = @transform_4, window_bounds = array<i64: 1, 1, 32>}, {transform_indices = @transform_5, window_bounds = array<i64: 1, 2, 32, 48>}, {transform_indices = @transform_6, window_bounds = array<i64: 1, 2, 16, 32>}, {transform_indices = @transform_7, window_bounds = array<i64: 1, 1, 32>}, {transform_indices = @transform_8, window_bounds = array<i64: 1, 2, 32, 16>}, {transform_indices = @transform_9, window_bounds = array<i64: 1, 2, 32, 32>}, {transform_indices = @transform_10, window_bounds = array<i64: 1, 2, 16, 32>}, {transform_indices = @transform_11, window_bounds = array<i64: 1, 1, 32>}, {transform_indices = @transform_12, window_bounds = array<i64: 1, 32, 64>}, {transform_indices = @transform_13, window_bounds = array<i64: 1, 64, 32>}, {transform_indices = @transform_14, window_bounds = array<i64: 1, 8, 32>}]} {
    %c0_i32 = arith.constant 0 : i32
    %0 = arith.cmpi eq, %arg1, %c0_i32 : i32
    %1 = arith.extui %0 : i1 to i32
    %c0_i32_0 = arith.constant 0 : i32
    %2 = arith.cmpi ne, %1, %c0_i32_0 : i32
    scf.if %2 {
      %c0_77 = arith.constant 0 : index
      %c0_78 = arith.constant 0 : index
      %c0_79 = arith.constant 0 : index
      %140 = vector.load %arg2[%c0_77, %c0_78, %c0_79] : memref<1x8x32xf32, #tpu.memory_space<vmem>>, vector<1x8x32xf32>
      %141 = vector.shape_cast %140 : vector<1x8x32xf32> to vector<8x32xf32>
      %c0_80 = arith.constant 0 : index
      %c0_81 = arith.constant 0 : index
      %142 = vector.load %arg17[%c0_80, %c0_81] : memref<8x32xf32, #tpu.memory_space<vmem>>, vector<8x32xf32>
      tpu.vector_store %arg17[%c0_80, %c0_81], %141 {strides = array<i32>} : memref<8x32xf32, #tpu.memory_space<vmem>>, vector<8x32xf32>,
    } else {
    }
    %c0 = arith.constant 0 : index
    %c0_1 = arith.constant 0 : index
    %3 = vector.load %arg17[%c0, %c0_1] : memref<8x32xf32, #tpu.memory_space<vmem>>, vector<8x32xf32>
    %c0_2 = arith.constant 0 : index
    %c0_3 = arith.constant 0 : index
    %c0_4 = arith.constant 0 : index
    %4 = vector.load %arg3[%c0_2, %c0_3, %c0_4] : memref<1x8x32xf32, #tpu.memory_space<vmem>>, vector<1x8x32xf32>
    %5 = vector.shape_cast %4 : vector<1x8x32xf32> to vector<8x32xf32>
    %c0_5 = arith.constant 0 : index
    %c0_6 = arith.constant 0 : index
    %c0_7 = arith.constant 0 : index
    %6 = vector.load %arg4[%c0_5, %c0_6, %c0_7] : memref<2x8x8xf32, #tpu.memory_space<vmem>>, vector<2x8x8xf32>
    %c0_8 = arith.constant 0 : index
    %c0_9 = arith.constant 0 : index
    %c0_10 = arith.constant 0 : index
    %7 = vector.load %arg5[%c0_8, %c0_9, %c0_10] : memref<1x1x8xf32, #tpu.memory_space<vmem>>, vector<1x1x8xf32>
    %8 = vector.shape_cast %7 : vector<1x1x8xf32> to vector<1x8xf32>
    %c0_11 = arith.constant 0 : index
    %c0_12 = arith.constant 0 : index
    %c0_13 = arith.constant 0 : index
    %9 = vector.load %arg6[%c0_11, %c0_12, %c0_13] : memref<1x1x32xf32, #tpu.memory_space<vmem>>, vector<1x1x32xf32>
    %10 = vector.shape_cast %9 : vector<1x1x32xf32> to vector<1x32xf32>
    %11 = arith.mulf %3, %3 : vector<8x32xf32>
    %cst = arith.constant dense<0.000000e+00> : vector<8xf32>
    %12 = vector.multi_reduction <add>, %11, %cst [1] : vector<8x32xf32> to vector<8xf32>
    %13 = vector.shape_cast %12 : vector<8xf32> to vector<8x1xf32>
    %cst_14 = arith.constant 3.200000e+01 : f32
    %14 = vector.broadcast %cst_14 : f32 to vector<8x1xf32>
    %15 = arith.divf %13, %14 : vector<8x1xf32>
    %cst_15 = arith.constant 9.99999997E-7 : f32
    %16 = vector.broadcast %cst_15 : f32 to vector<8x1xf32>
    %17 = arith.addf %15, %16 : vector<8x1xf32>
    %18 = math.rsqrt %17 : vector<8x1xf32>
    %19 = vector.broadcast %18 : vector<8x1xf32> to vector<8x32xf32>
    %20 = arith.mulf %3, %19 : vector<8x32xf32>
    %21 = vector.broadcast %10 : vector<1x32xf32> to vector<8x32xf32>
    %22 = arith.mulf %20, %21 : vector<8x32xf32>
    %c0_16 = arith.constant 0 : index
    %c0_17 = arith.constant 0 : index
    %c0_18 = arith.constant 0 : index
    %c0_19 = arith.constant 0 : index
    %23 = vector.load %arg7[%c0_16, %c0_17, %c0_18, %c0_19] : memref<1x2x32x48xbf16, #tpu.memory_space<vmem>>, vector<1x2x32x48xbf16>
    %24 = vector.shape_cast %23 : vector<1x2x32x48xbf16> to vector<2x32x48xbf16>
    %25 = arith.truncf %22 : vector<8x32xf32> to vector<8x32xbf16>
    %26 = vector.shape_cast %25 : vector<8x32xbf16> to vector<1x8x32xbf16>
    %27 = vector.shape_cast %26 : vector<1x8x32xbf16> to vector<1x8x32xbf16>
    %28 = vector.broadcast %27 : vector<1x8x32xbf16> to vector<2x8x32xbf16>
    "tpu.trace_start"() <{level = 10 : i32, message = "hsd,hde->hse"}> : () -> ()
    %cst_20 = arith.constant dense<0.000000e+00> : vector<2x8x48xf32>
    %29 = tpu.matmul %28, %24, %cst_20 {dimension_numbers = #tpu.dot_dimension_numbers<[2], [1], [1], [2], [0, 0, 0, 1, 1, 2], [0], [0]>} : vector<2x8x32xbf16>, vector<2x32x48xbf16>, vector<2x8x48xf32> -> vector<2x8x48xf32>
    "tpu.trace_stop"() : () -> ()
    %30 = vector.extract_strided_slice %29 {offsets = [0, 0, 0], sizes = [2, 8, 16], strides = [1, 1, 1]} : vector<2x8x48xf32> to vector<2x8x16xf32>
    %31 = vector.extract_strided_slice %29 {offsets = [0, 0, 16], sizes = [2, 8, 16], strides = [1, 1, 1]} : vector<2x8x48xf32> to vector<2x8x16xf32>
    %32 = vector.extract_strided_slice %29 {offsets = [0, 0, 32], sizes = [2, 8, 16], strides = [1, 1, 1]} : vector<2x8x48xf32> to vector<2x8x16xf32>
    %33 = arith.truncf %30 : vector<2x8x16xf32> to vector<2x8x16xbf16>
    %34 = arith.truncf %31 : vector<2x8x16xf32> to vector<2x8x16xbf16>
    "tpu.trace_start"() <{level = 10 : i32, message = "hqd,hkd->hqk"}> : () -> ()
    %cst_21 = arith.constant dense<0.000000e+00> : vector<2x8x8xf32>
    %35 = tpu.matmul %33, %34, %cst_21 {dimension_numbers = #tpu.dot_dimension_numbers<[2], [2], [1], [1], [0, 0, 0, 1, 1, 1], [0], [0]>} : vector<2x8x16xbf16>, vector<2x8x16xbf16>, vector<2x8x8xf32> -> vector<2x8x8xf32>
    "tpu.trace_stop"() : () -> ()
    %36 = arith.addf %35, %6 : vector<2x8x8xf32>
    %cst_22 = arith.constant dense<0xFF800000> : vector<2x8xf32>
    %37 = vector.multi_reduction <maximumf>, %36, %cst_22 [2] : vector<2x8x8xf32> to vector<2x8xf32>
    %38 = vector.shape_cast %37 : vector<2x8xf32> to vector<2x8x1xf32>
    %39 = vector.broadcast %38 : vector<2x8x1xf32> to vector<2x8x8xf32>
    %40 = arith.subf %36, %39 : vector<2x8x8xf32>
    %41 = math.exp %40 : vector<2x8x8xf32>
    %cst_23 = arith.constant dense<0.000000e+00> : vector<2x8xf32>
    %42 = vector.multi_reduction <add>, %41, %cst_23 [2] : vector<2x8x8xf32> to vector<2x8xf32>
    %43 = vector.shape_cast %42 : vector<2x8xf32> to vector<2x8x1xf32>
    %44 = tpu.reciprocal %43 {approx = true} : vector<2x8x1xf32> -> vector<2x8x1xf32>
    %45 = vector.broadcast %44 : vector<2x8x1xf32> to vector<2x8x8xf32>
    %46 = arith.mulf %41, %45 : vector<2x8x8xf32>
    %47 = arith.truncf %46 : vector<2x8x8xf32> to vector<2x8x8xbf16>
    %48 = arith.truncf %32 : vector<2x8x16xf32> to vector<2x8x16xbf16>
    "tpu.trace_start"() <{level = 10 : i32, message = "hqk,hkd->hqd"}> : () -> ()
    %cst_24 = arith.constant dense<0.000000e+00> : vector<2x8x16xf32>
    %49 = tpu.matmul %47, %48, %cst_24 {dimension_numbers = #tpu.dot_dimension_numbers<[2], [1], [1], [2], [0, 0, 0, 1, 1, 2], [0], [0]>} : vector<2x8x8xbf16>, vector<2x8x16xbf16>, vector<2x8x16xf32> -> vector<2x8x16xf32>
    "tpu.trace_stop"() : () -> ()
    %c0_25 = arith.constant 0 : index
    %c0_26 = arith.constant 0 : index
    %c0_27 = arith.constant 0 : index
    %c0_28 = arith.constant 0 : index
    %50 = vector.load %arg8[%c0_25, %c0_26, %c0_27, %c0_28] : memref<1x2x16x32xbf16, #tpu.memory_space<vmem>>, vector<1x2x16x32xbf16>
    %51 = vector.shape_cast %50 : vector<1x2x16x32xbf16> to vector<2x16x32xbf16>
    %52 = arith.truncf %49 : vector<2x8x16xf32> to vector<2x8x16xbf16>
    "tpu.trace_start"() <{level = 10 : i32, message = "hqd,hdm->hqm"}> : () -> ()
    %cst_29 = arith.constant dense<0.000000e+00> : vector<2x8x32xf32>
    %53 = tpu.matmul %52, %51, %cst_29 {dimension_numbers = #tpu.dot_dimension_numbers<[2], [1], [1], [2], [0, 0, 0, 1, 1, 2], [0], [0]>} : vector<2x8x16xbf16>, vector<2x16x32xbf16>, vector<2x8x32xf32> -> vector<2x8x32xf32>
    "tpu.trace_stop"() : () -> ()
    %cst_30 = arith.constant dense<0.000000e+00> : vector<8x32xf32>
    %54 = vector.multi_reduction <add>, %53, %cst_30 [0] : vector<2x8x32xf32> to vector<8x32xf32>
    %55 = arith.addf %3, %54 : vector<8x32xf32>
    %c0_31 = arith.constant 0 : index
    %c0_32 = arith.constant 0 : index
    %c0_33 = arith.constant 0 : index
    %56 = vector.load %arg9[%c0_31, %c0_32, %c0_33] : memref<1x1x32xf32, #tpu.memory_space<vmem>>, vector<1x1x32xf32>
    %57 = vector.shape_cast %56 : vector<1x1x32xf32> to vector<1x32xf32>
    %58 = arith.mulf %55, %55 : vector<8x32xf32>
    %cst_34 = arith.constant dense<0.000000e+00> : vector<8xf32>
    %59 = vector.multi_reduction <add>, %58, %cst_34 [1] : vector<8x32xf32> to vector<8xf32>
    %60 = vector.shape_cast %59 : vector<8xf32> to vector<8x1xf32>
    %cst_35 = arith.constant 3.200000e+01 : f32
    %61 = vector.broadcast %cst_35 : f32 to vector<8x1xf32>
    %62 = arith.divf %60, %61 : vector<8x1xf32>
    %cst_36 = arith.constant 9.99999997E-7 : f32
    %63 = vector.broadcast %cst_36 : f32 to vector<8x1xf32>
    %64 = arith.addf %62, %63 : vector<8x1xf32>
    %65 = math.rsqrt %64 : vector<8x1xf32>
    %66 = vector.broadcast %65 : vector<8x1xf32> to vector<8x32xf32>
    %67 = arith.mulf %55, %66 : vector<8x32xf32>
    %68 = vector.broadcast %57 : vector<1x32xf32> to vector<8x32xf32>
    %69 = arith.mulf %67, %68 : vector<8x32xf32>
    %c0_37 = arith.constant 0 : index
    %c0_38 = arith.constant 0 : index
    %c0_39 = arith.constant 0 : index
    %c0_40 = arith.constant 0 : index
    %70 = vector.load %arg10[%c0_37, %c0_38, %c0_39, %c0_40] : memref<1x2x32x16xbf16, #tpu.memory_space<vmem>>, vector<1x2x32x16xbf16>
    %71 = vector.shape_cast %70 : vector<1x2x32x16xbf16> to vector<2x32x16xbf16>
    %72 = arith.truncf %69 : vector<8x32xf32> to vector<8x32xbf16>
    %73 = vector.shape_cast %72 : vector<8x32xbf16> to vector<1x8x32xbf16>
    %74 = vector.shape_cast %73 : vector<1x8x32xbf16> to vector<1x8x32xbf16>
    %75 = vector.broadcast %74 : vector<1x8x32xbf16> to vector<2x8x32xbf16>
    "tpu.trace_start"() <{level = 10 : i32, message = "hsd,hde->hse"}> : () -> ()
    %cst_41 = arith.constant dense<0.000000e+00> : vector<2x8x16xf32>
    %76 = tpu.matmul %75, %71, %cst_41 {dimension_numbers = #tpu.dot_dimension_numbers<[2], [1], [1], [2], [0, 0, 0, 1, 1, 2], [0], [0]>} : vector<2x8x32xbf16>, vector<2x32x16xbf16>, vector<2x8x16xf32> -> vector<2x8x16xf32>
    "tpu.trace_stop"() : () -> ()
    %c0_42 = arith.constant 0 : index
    %c0_43 = arith.constant 0 : index
    %c0_44 = arith.constant 0 : index
    %c0_45 = arith.constant 0 : index
    %77 = vector.load %arg11[%c0_42, %c0_43, %c0_44, %c0_45] : memref<1x2x32x32xbf16, #tpu.memory_space<vmem>>, vector<1x2x32x32xbf16>
    %78 = vector.shape_cast %77 : vector<1x2x32x32xbf16> to vector<2x32x32xbf16>
    %79 = arith.truncf %5 : vector<8x32xf32> to vector<8x32xbf16>
    %80 = vector.shape_cast %79 : vector<8x32xbf16> to vector<1x8x32xbf16>
    %81 = vector.shape_cast %80 : vector<1x8x32xbf16> to vector<1x8x32xbf16>
    %82 = vector.broadcast %81 : vector<1x8x32xbf16> to vector<2x8x32xbf16>
    "tpu.trace_start"() <{level = 10 : i32, message = "hsd,hde->hse"}> : () -> ()
    %cst_46 = arith.constant dense<0.000000e+00> : vector<2x8x32xf32>
    %83 = tpu.matmul %82, %78, %cst_46 {dimension_numbers = #tpu.dot_dimension_numbers<[2], [1], [1], [2], [0, 0, 0, 1, 1, 2], [0], [0]>} : vector<2x8x32xbf16>, vector<2x32x32xbf16>, vector<2x8x32xf32> -> vector<2x8x32xf32>
    "tpu.trace_stop"() : () -> ()
    %84 = vector.extract_strided_slice %83 {offsets = [0, 0, 0], sizes = [2, 8, 16], strides = [1, 1, 1]} : vector<2x8x32xf32> to vector<2x8x16xf32>
    %85 = vector.extract_strided_slice %83 {offsets = [0, 0, 16], sizes = [2, 8, 16], strides = [1, 1, 1]} : vector<2x8x32xf32> to vector<2x8x16xf32>
    %86 = arith.truncf %76 : vector<2x8x16xf32> to vector<2x8x16xbf16>
    %87 = arith.truncf %84 : vector<2x8x16xf32> to vector<2x8x16xbf16>
    "tpu.trace_start"() <{level = 10 : i32, message = "hqd,hkd->hqk"}> : () -> ()
    %cst_47 = arith.constant dense<0.000000e+00> : vector<2x8x8xf32>
    %88 = tpu.matmul %86, %87, %cst_47 {dimension_numbers = #tpu.dot_dimension_numbers<[2], [2], [1], [1], [0, 0, 0, 1, 1, 1], [0], [0]>} : vector<2x8x16xbf16>, vector<2x8x16xbf16>, vector<2x8x8xf32> -> vector<2x8x8xf32>
    "tpu.trace_stop"() : () -> ()
    %89 = vector.shape_cast %8 : vector<1x8xf32> to vector<1x1x8xf32>
    %90 = vector.broadcast %89 : vector<1x1x8xf32> to vector<2x8x8xf32>
    %91 = arith.addf %88, %90 : vector<2x8x8xf32>
    %cst_48 = arith.constant dense<0xFF800000> : vector<2x8xf32>
    %92 = vector.multi_reduction <maximumf>, %91, %cst_48 [2] : vector<2x8x8xf32> to vector<2x8xf32>
    %93 = vector.shape_cast %92 : vector<2x8xf32> to vector<2x8x1xf32>
    %94 = vector.broadcast %93 : vector<2x8x1xf32> to vector<2x8x8xf32>
    %95 = arith.subf %91, %94 : vector<2x8x8xf32>
    %96 = math.exp %95 : vector<2x8x8xf32>
    %cst_49 = arith.constant dense<0.000000e+00> : vector<2x8xf32>
    %97 = vector.multi_reduction <add>, %96, %cst_49 [2] : vector<2x8x8xf32> to vector<2x8xf32>
    %98 = vector.shape_cast %97 : vector<2x8xf32> to vector<2x8x1xf32>
    %99 = tpu.reciprocal %98 {approx = true} : vector<2x8x1xf32> -> vector<2x8x1xf32>
    %100 = vector.broadcast %99 : vector<2x8x1xf32> to vector<2x8x8xf32>
    %101 = arith.mulf %96, %100 : vector<2x8x8xf32>
    %102 = arith.truncf %101 : vector<2x8x8xf32> to vector<2x8x8xbf16>
    %103 = arith.truncf %85 : vector<2x8x16xf32> to vector<2x8x16xbf16>
    "tpu.trace_start"() <{level = 10 : i32, message = "hqk,hkd->hqd"}> : () -> ()
    %cst_50 = arith.constant dense<0.000000e+00> : vector<2x8x16xf32>
    %104 = tpu.matmul %102, %103, %cst_50 {dimension_numbers = #tpu.dot_dimension_numbers<[2], [1], [1], [2], [0, 0, 0, 1, 1, 2], [0], [0]>} : vector<2x8x8xbf16>, vector<2x8x16xbf16>, vector<2x8x16xf32> -> vector<2x8x16xf32>
    "tpu.trace_stop"() : () -> ()
    %c0_51 = arith.constant 0 : index
    %c0_52 = arith.constant 0 : index
    %c0_53 = arith.constant 0 : index
    %c0_54 = arith.constant 0 : index
    %105 = vector.load %arg12[%c0_51, %c0_52, %c0_53, %c0_54] : memref<1x2x16x32xbf16, #tpu.memory_space<vmem>>, vector<1x2x16x32xbf16>
    %106 = vector.shape_cast %105 : vector<1x2x16x32xbf16> to vector<2x16x32xbf16>
    %107 = arith.truncf %104 : vector<2x8x16xf32> to vector<2x8x16xbf16>
    "tpu.trace_start"() <{level = 10 : i32, message = "hqd,hdm->hqm"}> : () -> ()
    %cst_55 = arith.constant dense<0.000000e+00> : vector<2x8x32xf32>
    %108 = tpu.matmul %107, %106, %cst_55 {dimension_numbers = #tpu.dot_dimension_numbers<[2], [1], [1], [2], [0, 0, 0, 1, 1, 2], [0], [0]>} : vector<2x8x16xbf16>, vector<2x16x32xbf16>, vector<2x8x32xf32> -> vector<2x8x32xf32>
    "tpu.trace_stop"() : () -> ()
    %cst_56 = arith.constant dense<0.000000e+00> : vector<8x32xf32>
    %109 = vector.multi_reduction <add>, %108, %cst_56 [0] : vector<2x8x32xf32> to vector<8x32xf32>
    %110 = arith.addf %55, %109 : vector<8x32xf32>
    %c0_57 = arith.constant 0 : index
    %c0_58 = arith.constant 0 : index
    %c0_59 = arith.constant 0 : index
    %111 = vector.load %arg13[%c0_57, %c0_58, %c0_59] : memref<1x1x32xf32, #tpu.memory_space<vmem>>, vector<1x1x32xf32>
    %112 = vector.shape_cast %111 : vector<1x1x32xf32> to vector<1x32xf32>
    %113 = arith.mulf %110, %110 : vector<8x32xf32>
    %cst_60 = arith.constant dense<0.000000e+00> : vector<8xf32>
    %114 = vector.multi_reduction <add>, %113, %cst_60 [1] : vector<8x32xf32> to vector<8xf32>
    %115 = vector.shape_cast %114 : vector<8xf32> to vector<8x1xf32>
    %cst_61 = arith.constant 3.200000e+01 : f32
    %116 = vector.broadcast %cst_61 : f32 to vector<8x1xf32>
    %117 = arith.divf %115, %116 : vector<8x1xf32>
    %cst_62 = arith.constant 9.99999997E-7 : f32
    %118 = vector.broadcast %cst_62 : f32 to vector<8x1xf32>
    %119 = arith.addf %117, %118 : vector<8x1xf32>
    %120 = math.rsqrt %119 : vector<8x1xf32>
    %121 = vector.broadcast %120 : vector<8x1xf32> to vector<8x32xf32>
    %122 = arith.mulf %110, %121 : vector<8x32xf32>
    %123 = vector.broadcast %112 : vector<1x32xf32> to vector<8x32xf32>
    %124 = arith.mulf %122, %123 : vector<8x32xf32>
    %c0_63 = arith.constant 0 : index
    %c0_64 = arith.constant 0 : index
    %c0_65 = arith.constant 0 : index
    %125 = vector.load %arg14[%c0_63, %c0_64, %c0_65] : memref<1x32x64xbf16, #tpu.memory_space<vmem>>, vector<1x32x64xbf16>
    %126 = vector.shape_cast %125 : vector<1x32x64xbf16> to vector<32x64xbf16>
    %127 = arith.truncf %124 : vector<8x32xf32> to vector<8x32xbf16>
    %cst_66 = arith.constant dense<0.000000e+00> : vector<8x64xf32>
    %128 = tpu.matmul %127, %126, %cst_66 {dimension_numbers = #tpu.dot_dimension_numbers<[1], [0], [0], [1], [0, 0, 1, 1], [], []>} : vector<8x32xbf16>, vector<32x64xbf16>, vector<8x64xf32> -> vector<8x64xf32>
    %cst_67 = arith.constant 0.000000e+00 : f32
    %129 = vector.broadcast %cst_67 : f32 to vector<8x64xf32>
    %130 = arith.maximumf %128, %129 : vector<8x64xf32>
    %c0_68 = arith.constant 0 : index
    %c0_69 = arith.constant 0 : index
    %c0_70 = arith.constant 0 : index
    %131 = vector.load %arg15[%c0_68, %c0_69, %c0_70] : memref<1x64x32xbf16, #tpu.memory_space<vmem>>, vector<1x64x32xbf16>
    %132 = vector.shape_cast %131 : vector<1x64x32xbf16> to vector<64x32xbf16>
    %133 = arith.truncf %130 : vector<8x64xf32> to vector<8x64xbf16>
    %cst_71 = arith.constant dense<0.000000e+00> : vector<8x32xf32>
    %134 = tpu.matmul %133, %132, %cst_71 {dimension_numbers = #tpu.dot_dimension_numbers<[1], [0], [0], [1], [0, 0, 1, 1], [], []>} : vector<8x64xbf16>, vector<64x32xbf16>, vector<8x32xf32> -> vector<8x32xf32>
    %135 = arith.addf %110, %134 : vector<8x32xf32>
    %c0_72 = arith.constant 0 : index
    %c0_73 = arith.constant 0 : index
    %136 = vector.load %arg17[%c0_72, %c0_73] : memref<8x32xf32, #tpu.memory_space<vmem>>, vector<8x32xf32>
    tpu.vector_store %arg17[%c0_72, %c0_73], %135 {strides = array<i32>} : memref<8x32xf32, #tpu.memory_space<vmem>>, vector<8x32xf32>,
    %c0_74 = arith.constant 0 : index
    %c0_75 = arith.constant 0 : index
    %c0_76 = arith.constant 0 : index
    %137 = vector.load %arg16[%c0_74, %c0_75, %c0_76] : memref<1x8x32xf32, #tpu.memory_space<vmem>>, vector<1x8x32xf32>
    %138 = vector.shape_cast %137 : vector<1x8x32xf32> to vector<8x32xf32>
    %139 = vector.shape_cast %135 : vector<8x32xf32> to vector<1x8x32xf32>
    tpu.vector_store %arg16[%c0_74, %c0_75, %c0_76], %139 {strides = array<i32>} : memref<1x8x32xf32, #tpu.memory_space<vmem>>, vector<1x8x32xf32>,
    return
  }
  func.func @transform_0(%arg0: i32, %arg1: i32) -> (i32, i32, i32) {
    %c0_i32 = arith.constant 0 : i32
    %c0_i32_0 = arith.constant 0 : i32
    %c0_i32_1 = arith.constant 0 : i32
    return %arg0, %c0_i32, %c0_i32_0 : i32, i32, i32
  }
  func.func @transform_1(%arg0: i32, %arg1: i32) -> (i32, i32, i32) {
    %c0_i32 = arith.constant 0 : i32
    %c0_i32_0 = arith.constant 0 : i32
    %c0_i32_1 = arith.constant 0 : i32
    return %arg0, %c0_i32, %c0_i32_0 : i32, i32, i32
  }
  func.func @transform_2(%arg0: i32, %arg1: i32) -> (i32, i32, i32) {
    %c0_i32 = arith.constant 0 : i32
    %c0_i32_0 = arith.constant 0 : i32
    %c0_i32_1 = arith.constant 0 : i32
    %c0_i32_2 = arith.constant 0 : i32
    return %c0_i32, %c0_i32_0, %c0_i32_1 : i32, i32, i32
  }
  func.func @transform_3(%arg0: i32, %arg1: i32) -> (i32, i32, i32) {
    %c0_i32 = arith.constant 0 : i32
    %c0_i32_0 = arith.constant 0 : i32
    %c0_i32_1 = arith.constant 0 : i32
    return %arg0, %c0_i32, %c0_i32_0 : i32, i32, i32
  }
  func.func @transform_4(%arg0: i32, %arg1: i32) -> (i32, i32, i32) {
    %c0_i32 = arith.constant 0 : i32
    %c0_i32_0 = arith.constant 0 : i32
    %c0_i32_1 = arith.constant 0 : i32
    return %arg1, %c0_i32, %c0_i32_0 : i32, i32, i32
  }
  func.func @transform_5(%arg0: i32, %arg1: i32) -> (i32, i32, i32, i32) {
    %c0_i32 = arith.constant 0 : i32
    %c0_i32_0 = arith.constant 0 : i32
    %c0_i32_1 = arith.constant 0 : i32
    %c0_i32_2 = arith.constant 0 : i32
    return %arg1, %c0_i32, %c0_i32_0, %c0_i32_1 : i32, i32, i32, i32
  }
  func.func @transform_6(%arg0: i32, %arg1: i32) -> (i32, i32, i32, i32) {
    %c0_i32 = arith.constant 0 : i32
    %c0_i32_0 = arith.constant 0 : i32
    %c0_i32_1 = arith.constant 0 : i32
    %c0_i32_2 = arith.constant 0 : i32
    return %arg1, %c0_i32, %c0_i32_0, %c0_i32_1 : i32, i32, i32, i32
  }
  func.func @transform_7(%arg0: i32, %arg1: i32) -> (i32, i32, i32) {
    %c0_i32 = arith.constant 0 : i32
    %c0_i32_0 = arith.constant 0 : i32
    %c0_i32_1 = arith.constant 0 : i32
    return %arg1, %c0_i32, %c0_i32_0 : i32, i32, i32
  }
  func.func @transform_8(%arg0: i32, %arg1: i32) -> (i32, i32, i32, i32) {
    %c0_i32 = arith.constant 0 : i32
    %c0_i32_0 = arith.constant 0 : i32
    %c0_i32_1 = arith.constant 0 : i32
    %c0_i32_2 = arith.constant 0 : i32
    return %arg1, %c0_i32, %c0_i32_0, %c0_i32_1 : i32, i32, i32, i32
  }
  func.func @transform_9(%arg0: i32, %arg1: i32) -> (i32, i32, i32, i32) {
    %c0_i32 = arith.constant 0 : i32
    %c0_i32_0 = arith.constant 0 : i32
    %c0_i32_1 = arith.constant 0 : i32
    %c0_i32_2 = arith.constant 0 : i32
    return %arg1, %c0_i32, %c0_i32_0, %c0_i32_1 : i32, i32, i32, i32
  }
  func.func @transform_10(%arg0: i32, %arg1: i32) -> (i32, i32, i32, i32) {
    %c0_i32 = arith.constant 0 : i32
    %c0_i32_0 = arith.constant 0 : i32
    %c0_i32_1 = arith.constant 0 : i32
    %c0_i32_2 = arith.constant 0 : i32
    return %arg1, %c0_i32, %c0_i32_0, %c0_i32_1 : i32, i32, i32, i32
  }
  func.func @transform_11(%arg0: i32, %arg1: i32) -> (i32, i32, i32) {
    %c0_i32 = arith.constant 0 : i32
    %c0_i32_0 = arith.constant 0 : i32
    %c0_i32_1 = arith.constant 0 : i32
    return %arg1, %c0_i32, %c0_i32_0 : i32, i32, i32
  }
  func.func @transform_12(%arg0: i32, %arg1: i32) -> (i32, i32, i32) {
    %c0_i32 = arith.constant 0 : i32
    %c0_i32_0 = arith.constant 0 : i32
    %c0_i32_1 = arith.constant 0 : i32
    return %arg1, %c0_i32, %c0_i32_0 : i32, i32, i32
  }
  func.func @transform_13(%arg0: i32, %arg1: i32) -> (i32, i32, i32) {
    %c0_i32 = arith.constant 0 : i32
    %c0_i32_0 = arith.constant 0 : i32
    %c0_i32_1 = arith.constant 0 : i32
    return %arg1, %c0_i32, %c0_i32_0 : i32, i32, i32
  }
  func.func @transform_14(%arg0: i32, %arg1: i32) -> (i32, i32, i32) {
    %c0_i32 = arith.constant 0 : i32
    %c0_i32_0 = arith.constant 0 : i32
    %c0_i32_1 = arith.constant 0 : i32
    return %arg0, %c0_i32, %c0_i32_0 : i32, i32, i32
  }
}

module attributes {stable_mosaic.version = 11 : i64} {
  func.func @_lmhead_ce_kernel(%arg0: i32, %arg1: memref<16x32xf32, #tpu.memory_space<vmem>>, %arg2: memref<1x32xf32, #tpu.memory_space<vmem>>, %arg3: memref<32x64xbf16, #tpu.memory_space<vmem>>, %arg4: memref<16x1xi32, #tpu.memory_space<vmem>>, %arg5: memref<1x1xf32, #tpu.memory_space<smem>>) attributes {dimension_semantics = [#tpu.dimension_semantics<arbitrary>], iteration_bounds = array<i64: 1>, scalar_prefetch = 0 : i64, scratch_operands = 0 : i64, tpu.core_type = #tpu.core_type<tc>, window_params = [{pipeline_mode = #tpu.pipeline_mode<synchronous>, transform_indices = @transform_0, window_bounds = array<i64: 16, 32>}, {pipeline_mode = #tpu.pipeline_mode<synchronous>, transform_indices = @transform_1, window_bounds = array<i64: 1, 32>}, {pipeline_mode = #tpu.pipeline_mode<synchronous>, transform_indices = @transform_2, window_bounds = array<i64: 32, 64>}, {pipeline_mode = #tpu.pipeline_mode<synchronous>, transform_indices = @transform_3, window_bounds = array<i64: 16, 1>}, {transform_indices = @transform_4, window_bounds = array<i64: 1, 1>}]} {
    %c0 = arith.constant 0 : index
    %c0_0 = arith.constant 0 : index
    %0 = vector.load %arg1[%c0, %c0_0] : memref<16x32xf32, #tpu.memory_space<vmem>>, vector<16x32xf32>
    %c0_1 = arith.constant 0 : index
    %c0_2 = arith.constant 0 : index
    %1 = vector.load %arg2[%c0_1, %c0_2] : memref<1x32xf32, #tpu.memory_space<vmem>>, vector<1x32xf32>
    %2 = arith.mulf %0, %0 : vector<16x32xf32>
    %cst = arith.constant dense<0.000000e+00> : vector<16xf32>
    %3 = vector.multi_reduction <add>, %2, %cst [1] : vector<16x32xf32> to vector<16xf32>
    %4 = vector.shape_cast %3 : vector<16xf32> to vector<16x1xf32>
    %cst_3 = arith.constant 3.200000e+01 : f32
    %5 = vector.broadcast %cst_3 : f32 to vector<16x1xf32>
    %6 = arith.divf %4, %5 : vector<16x1xf32>
    %cst_4 = arith.constant 9.99999997E-7 : f32
    %7 = vector.broadcast %cst_4 : f32 to vector<16x1xf32>
    %8 = arith.addf %6, %7 : vector<16x1xf32>
    %9 = math.rsqrt %8 : vector<16x1xf32>
    %10 = vector.broadcast %9 : vector<16x1xf32> to vector<16x32xf32>
    %11 = arith.mulf %0, %10 : vector<16x32xf32>
    %12 = vector.broadcast %1 : vector<1x32xf32> to vector<16x32xf32>
    %13 = arith.mulf %11, %12 : vector<16x32xf32>
    %c0_5 = arith.constant 0 : index
    %c0_6 = arith.constant 0 : index
    %14 = vector.load %arg3[%c0_5, %c0_6] : memref<32x64xbf16, #tpu.memory_space<vmem>>, vector<32x64xbf16>
    %15 = arith.truncf %13 : vector<16x32xf32> to vector<16x32xbf16>
    %cst_7 = arith.constant dense<0.000000e+00> : vector<16x64xf32>
    %16 = tpu.matmul %15, %14, %cst_7 {dimension_numbers = #tpu.dot_dimension_numbers<[1], [0], [0], [1], [0, 0, 1, 1], [], []>} : vector<16x32xbf16>, vector<32x64xbf16>, vector<16x64xf32> -> vector<16x64xf32>
    %c0_8 = arith.constant 0 : index
    %c0_9 = arith.constant 0 : index
    %17 = vector.load %arg4[%c0_8, %c0_9] : memref<16x1xi32, #tpu.memory_space<vmem>>, vector<16x1xi32>
    %cst_10 = arith.constant dense<0xFF800000> : vector<16xf32>
    %18 = vector.multi_reduction <maximumf>, %16, %cst_10 [1] : vector<16x64xf32> to vector<16xf32>
    %19 = vector.shape_cast %18 : vector<16xf32> to vector<16x1xf32>
    %20 = vector.broadcast %19 : vector<16x1xf32> to vector<16x64xf32>
    %21 = arith.subf %16, %20 : vector<16x64xf32>
    %22 = math.exp %21 : vector<16x64xf32>
    %cst_11 = arith.constant dense<0.000000e+00> : vector<16xf32>
    %23 = vector.multi_reduction <add>, %22, %cst_11 [1] : vector<16x64xf32> to vector<16xf32>
    %24 = vector.shape_cast %23 : vector<16xf32> to vector<16x1xf32>
    %25 = math.log %24 : vector<16x1xf32>
    %26 = arith.addf %25, %19 : vector<16x1xf32>
    %27 = tpu.iota {dimensions = array<i32: 1>} : vector<16x64xi32>
    %28 = vector.broadcast %17 : vector<16x1xi32> to vector<16x64xi32>
    %29 = arith.cmpi eq, %27, %28 : vector<16x64xi32>
    %cst_12 = arith.constant 0.000000e+00 : f32
    %30 = vector.broadcast %cst_12 : f32 to vector<16x64xf32>
    %31 = arith.select %29, %16, %30 : vector<16x64xi1>, vector<16x64xf32>
    %cst_13 = arith.constant dense<0.000000e+00> : vector<16xf32>
    %32 = vector.multi_reduction <add>, %31, %cst_13 [1] : vector<16x64xf32> to vector<16xf32>
    %33 = vector.shape_cast %32 : vector<16xf32> to vector<16x1xf32>
    %c0_i32 = arith.constant 0 : i32
    %34 = vector.broadcast %c0_i32 : i32 to vector<16x1xi32>
    %35 = arith.cmpi sge, %17, %34 : vector<16x1xi32>
    %36 = arith.extui %35 : vector<16x1xi1> to vector<16x1xi32>
    %37 = arith.sitofp %36 : vector<16x1xi32> to vector<16x1xf32>
    %38 = arith.subf %26, %33 : vector<16x1xf32>
    %39 = arith.mulf %38, %37 : vector<16x1xf32>
    %cst_14 = arith.constant dense<0.000000e+00> : vector<1xf32>
    %40 = vector.multi_reduction <add>, %39, %cst_14 [0] : vector<16x1xf32> to vector<1xf32>
    %41 = vector.shape_cast %40 : vector<1xf32> to vector<1x1xf32>
    %cst_15 = arith.constant dense<0.000000e+00> : vector<1xf32>
    %42 = vector.multi_reduction <add>, %37, %cst_15 [0] : vector<16x1xf32> to vector<1xf32>
    %43 = vector.shape_cast %42 : vector<1xf32> to vector<1x1xf32>
    %cst_16 = arith.constant 1.000000e+00 : f32
    %44 = vector.broadcast %cst_16 : f32 to vector<1x1xf32>
    %45 = arith.maximumf %43, %44 : vector<1x1xf32>
    %46 = arith.divf %41, %45 : vector<1x1xf32>
    %47 = vector.extract %46[0, 0] : f32 from vector<1x1xf32>
    %c0_17 = arith.constant 0 : index
    %c0_18 = arith.constant 0 : index
    %48 = memref.load %arg5[%c0_17, %c0_18] : memref<1x1xf32, #tpu.memory_space<smem>>
    memref.store %47, %arg5[%c0_17, %c0_18] : memref<1x1xf32, #tpu.memory_space<smem>>
    return
  }
  func.func @transform_0(%arg0: i32) -> (i32, i32) {
    %c0_i32 = arith.constant 0 : i32
    %c0_i32_0 = arith.constant 0 : i32
    %c0_i32_1 = arith.constant 0 : i32
    return %c0_i32, %c0_i32_0 : i32, i32
  }
  func.func @transform_1(%arg0: i32) -> (i32, i32) {
    %c0_i32 = arith.constant 0 : i32
    %c0_i32_0 = arith.constant 0 : i32
    %c0_i32_1 = arith.constant 0 : i32
    return %c0_i32, %c0_i32_0 : i32, i32
  }
  func.func @transform_2(%arg0: i32) -> (i32, i32) {
    %c0_i32 = arith.constant 0 : i32
    %c0_i32_0 = arith.constant 0 : i32
    %c0_i32_1 = arith.constant 0 : i32
    return %c0_i32, %c0_i32_0 : i32, i32
  }
  func.func @transform_3(%arg0: i32) -> (i32, i32) {
    %c0_i32 = arith.constant 0 : i32
    %c0_i32_0 = arith.constant 0 : i32
    %c0_i32_1 = arith.constant 0 : i32
    return %c0_i32, %c0_i32_0 : i32, i32
  }
  func.func @transform_4(%arg0: i32) -> (i32, i32) {
    %c0_i32 = arith.constant 0 : i32
    %c0_i32_0 = arith.constant 0 : i32
    %c0_i32_1 = arith.constant 0 : i32
    return %c0_i32, %c0_i32_0 : i32, i32
  }
}

</mosaic_0001>

<llo_original>
// kernel: _lambda_.5
$region0: #{_lambda_.5}
  #allocation0 [shape = 'u32[]', space=smem, size = 0x4, offset = 0x4, fixed_abs, tag = 'smem constant byte address 0x4 - core index']
  #allocation1 [shape = 'u32[72,128]{1,0:T(1,128)}', space=vmem, size = 0x9000, scoped, tag = 'internal scratch']
  %s0 = inlined_call_operand.vmem [shape: f32[16,32], index: 0, kind: input, shape index: {}]
  %s1 = inlined_call_operand.vmem [shape: f32[1,32], index: 1, kind: input, shape index: {}]
  %s2 = inlined_call_operand.vmem [shape: bf16[32,64], index: 2, kind: input, shape index: {}]
  %s3 = inlined_call_operand.vmem [shape: s32[16,1], index: 3, kind: input, shape index: {}]
  %s4 = inlined_call_operand.hbm [shape: f32[1,1], index: 4, kind: output, shape index: {}]
  %s5 = sld [smem:[#allocation0]]
  $region26: #{_lambda_.5} parent=0
    _
  %s7 = ssub.s32 1, %s5
  %s8 = scalar_select 0, %s7, %s5
  $region1: #{_lambda_.5} parent=0
    #allocation2 [shape = 'u8[512]{0}', space=smem, size = 0x200, scoped, tag = 'output window, operand 0, single buffered']
    #allocation3 [shape = 's32[1]{0}', space=sflag, size = 0x4, scoped, tag = 'scoped memory for _lambda_.5']
    %9 = vsyncpa [#allocation3], 0
    // Predicated region
    $region2: #{_lambda_.5} parent=1 // pred_check
      _
    $region3: #{_lambda_.5} parent=1 // pred_check_branch
      %11 = sbr.rel (0) target = $region5
    $region4: #{_lambda_.5} parent=1 // pred_region
      _
    $region5: #{_lambda_.5} parent=1 // pred_fallthru
      _
    // Predicated region
    $region6: #{_lambda_.5} parent=1 // pred_check
      _
    $region7: #{_lambda_.5} parent=1 // pred_check_branch
      %13 = sbr.rel (0) target = $region9
    $region8: #{_lambda_.5} parent=1 // pred_region
      _
    $region9: #{_lambda_.5} parent=1 // pred_fallthru
      _
    // Predicated region
    $region10: #{_lambda_.5} parent=1 // pred_check
      _
    $region11: #{_lambda_.5} parent=1 // pred_check_branch
      %15 = sbr.rel (0) target = $region13
    $region12: #{_lambda_.5} parent=1 // pred_region
      _
    $region13: #{_lambda_.5} parent=1 // pred_fallthru
      _
    // Predicated region
    $region14: #{_lambda_.5} parent=1 // pred_check
      _
    $region15: #{_lambda_.5} parent=1 // pred_check_branch
      %17 = sbr.rel (0) target = $region17
    $region16: #{_lambda_.5} parent=1 // pred_region
      _
    $region17: #{_lambda_.5} parent=1 // pred_fallthru
      _
    %v19 = vld [vmem:[%s0] sm:$0xff]
    %v20 = vld [vmem:[%s0 + $0x8] sm:$0xff]
    %v21 = vld [vmem:[%s1] sm:$0x1]
    %v22 = vmul.f32 %v19, %v19
    %v23 = vmul.f32 %v20, %v20
    %vm24 = vcmask 261120
    %v25 = vsel %vm24, %v22, 0.0
    %26 = vadd.xlane.f32.xlu0 %v25
    %v27 = vpop.xlane.xlu0 %26
    %v28 = vsel %vm24, %v23, 0.0
    %29 = vadd.xlane.f32.xlu0 %v28
    %v30 = vpop.xlane.xlu0 %29
    %v31 = vrcp.pop 32.0
    %v32 = vmul.f32 32.0, %v31
    %v33 = vsub.f32 1.0, %v32
    %v34 = vmul.f32 %v31, %v33
    %v35 = vadd.f32 %v31, %v34
    %vm36 = vweird.f32 %v31
    %v37 = vsel %vm36, %v31, %v35
    %v38 = vmul.f32 %v27, %v37
    %v39 = vmul.f32 %v30, %v37
    %v40 = vadd.f32 %v38, 1e-06
    %v41 = vadd.f32 %v39, 1e-06
    %v42 = vrsqrt.pop %v40
    %v43 = vmul.f32 %v42, %v40
    %v44 = vmul.f32 %v43, %v42
    %v45 = vmul.f32 0.5, %v44
    %v46 = vsub.f32 1.5, %v45
    %v47 = vmul.f32 %v42, %v46
    %vm48 = vweird.f32 %v40
    %vm49 = vweird.f32 %v42
    %vm50 = vmor %vm48, %vm49
    %v51 = vsel %vm50, %v42, %v47
    %v52 = vrsqrt.pop %v41
    %v53 = vmul.f32 %v52, %v41
    %v54 = vmul.f32 %v53, %v52
    %v55 = vmul.f32 0.5, %v54
    %v56 = vsub.f32 1.5, %v55
    %v57 = vmul.f32 %v52, %v56
    %vm58 = vweird.f32 %v41
    %vm59 = vweird.f32 %v52
    %vm60 = vmor %vm58, %vm59
    %v61 = vsel %vm60, %v52, %v57
    %v62 = vmul.f32 %v19, %v51
    %v63 = vmul.f32 %v20, %v61
    %v65 = vperm.slane %v21, 0
    %v67 = vmul.f32 %v62, %v65
    %v68 = vmul.f32 %v63, %v65
    %v69 = vld [vmem:[%s2] sm:$0xf]
    %v70 = vld [vmem:[%s2 + $0x4] sm:$0xf]
    %v71 = vld [vmem:[%s2 + $0x8] sm:$0xf]
    %v72 = vld [vmem:[%s2 + $0xc] sm:$0xf]
    %v73 = vpack.c.bf16 %v68, %v67
    %v78 = vunpack.c.l.b16 %v69
    %v79 = vunpack.c.l.b16 %v70
    %v80 = vunpack.c.l.b16 %v71
    %v81 = vunpack.c.l.b16 %v72
    %v82 = vpack.c.b16 %v79, %v78
    %v83 = vpack.c.b16 %v81, %v80
    %v87 = vsel %vm24, %v73, 0
    %89 = vmatpush.bf16.msra.mxu0 0
    %90 = vmatpush.bf16.msra.mxu0 0
    %91 = vmatpush.bf16.msra.mxu0 0
    %92 = vmatpush.bf16.msra.mxu0 0
    %93 = vmatpush.bf16.msra.mxu0 0
    %94 = vmatpush.bf16.msra.mxu0 0
    %95 = vmatpush.bf16.msra.mxu0 %v83
    %96 = vmatpush.bf16.msra.mxu0 %v82
    %97 = vmatmul.bf16.gmra.mxu0 %v87
    %v98 = vpop.f32.mrf.mxu0
    %v99 = vadd.f32 0.0, %v98
    %v100 = vpop.f32.mrf.mxu0
    %v101 = vadd.f32 0.0, %v100
    %102 = vdwg.mxu0
    %v103 = vld [vmem:[%s3] sm:$0xff]
    %v104 = vld [vmem:[%s3 + $0x8] sm:$0xff]
    %vm105 = vcmask 523264
    %v106 = vsel %vm105, %v99, -inf
    %107 = vmax.xlane.f32.xlu0 %v106
    %v108 = vpop.xlane.xlu0 %107
    %v109 = vsel %vm105, %v101, -inf
    %110 = vmax.xlane.f32.xlu0 %v109
    %v111 = vpop.xlane.xlu0 %110
    %v112 = vsub.f32 %v99, %v108
    %v113 = vsub.f32 %v101, %v111
    %v114 = vmul.f32 %v112, 1.442695
    %v115 = vpow.pop %v114
    %v116 = vmul.f32 %v113, 1.442695
    %v117 = vpow.pop %v116
    %v118 = vsel %vm105, %v115, 0.0
    %119 = vadd.xlane.f32.xlu0 %v118
    %v120 = vpop.xlane.xlu0 %119
    %v121 = vsel %vm105, %v117, 0.0
    %122 = vadd.xlane.f32.xlu0 %v121
    %v123 = vpop.xlane.xlu0 %122
    %v124 = vlog2.pop %v120
    %v125 = vmul.f32 %v124, 0.6931472
    %v126 = vlog2.pop %v123
    %v127 = vmul.f32 %v126, 0.6931472
    %v128 = vadd.f32 %v125, %v108
    %v129 = vadd.f32 %v127, %v111
    %v130 = vlaneseq
    %v131 = vand.u32 %v130, 127
    %132 = vset.pattern.permute.xlu0 0
    %133 = vperm.xlu0 %132, %v103
    %v134 = vpop.permute.xlu0 %133
    %135 = vset.pattern.permute.xlu0 0
    %136 = vperm.xlu0 %135, %v104
    %v137 = vpop.permute.xlu0 %136
    %vm138 = vcmp.eq.s32.totalorder %v131, %v134
    %vm139 = vcmp.eq.s32.totalorder %v131, %v137
    %v140 = vsel %vm138, %v99, 0.0
    %v141 = vsel %vm139, %v101, 0.0
    %v142 = vsel %vm105, %v140, 0.0
    %143 = vadd.xlane.f32.xlu0 %v142
    %v144 = vpop.xlane.xlu0 %143
    %v145 = vsel %vm105, %v141, 0.0
    %146 = vadd.xlane.f32.xlu0 %v145
    %v147 = vpop.xlane.xlu0 %146
    %vm148 = vcmp.ge.s32.totalorder %v103, 0
    %vm149 = vcmp.ge.s32.totalorder %v104, 0
    %v150 = vsel %vm148, 1, 0
    %v151 = vsel %vm149, 1, 0
    %v152 = vcvt.s32.f32 %v150
    %v153 = vcvt.s32.f32 %v151
    %v154 = vsub.f32 %v128, %v144
    %v155 = vsub.f32 %v129, %v147
    %v156 = vmul.f32 %v154, %v152
    %v157 = vmul.f32 %v155, %v153
    %vm158 = vcmask 7168
    %v159 = vsel %vm158, %v156, 0.0
    %v160 = vsel %vm158, %v157, 0.0
    %v161 = vadd.f32 %v159, %v160
    %v162 = vrot.slane %v161, 4
    %v163 = vadd.f32 %v161, %v162
    %v164 = vrot.slane %v163, 2
    %v165 = vadd.f32 %v163, %v164
    %v166 = vrot.slane %v165, 1
    %v167 = vadd.f32 %v165, %v166
    %v168 = vsel %vm158, %v152, 0.0
    %v169 = vsel %vm158, %v153, 0.0
    %v170 = vadd.f32 %v168, %v169
    %v171 = vrot.slane %v170, 4
    %v172 = vadd.f32 %v170, %v171
    %v173 = vrot.slane %v172, 2
    %v174 = vadd.f32 %v172, %v173
    %v175 = vrot.slane %v174, 1
    %v176 = vadd.f32 %v174, %v175
    %v177 = vmax.f32 %v176, 1.0
    %v178 = vrcp.pop %v177
    %v179 = vmul.f32 %v177, %v178
    %v180 = vsub.f32 1.0, %v179
    %v181 = vmul.f32 %v178, %v180
    %v182 = vadd.f32 %v178, %v181
    %vm183 = vweird.f32 %v177
    %vm184 = vweird.f32 %v178
    %vm185 = vmor %vm183, %vm184
    %v186 = vsel %vm185, %v178, %v182
    %v187 = vand.u32 2147483647, %v177
    %vm188 = vcmp.eq.f32.partialorder %v187, 8.507059e+37
    %v189 = vand.u32 %v177, 2147483648
    %v190 = vor.u32 1.1754944e-38, %v189
    %v191 = vsel %vm188, %v190, %v186
    %v192 = vmul.f32 %v167, %v191
    %s193 = vtos %v192
    %s194 = scalar_lea.smem [#allocation2], 0
    %195 = sst [smem:[%s194]] %s193
    // Predicated region
    $region18: #{_lambda_.5} parent=1 // pred_check
      _
    $region19: #{_lambda_.5} parent=1 // pred_check_branch
      %197 = sbr.rel (0) target = $region21
    $region20: #{_lambda_.5} parent=1 // pred_region
      %199 = vsyncadd [#allocation3], 0
      %s201 = sshll.u32 %s4, 4
      %s202 = int_to_ptr.hbm [resolvable:$true] %s201
      %204 = dma.smem_to_hbm [#allocation2], 16, %s202, [#allocation3]
    $region21: #{_lambda_.5} parent=1 // pred_fallthru
      _
    // Predicated region
    $region22: #{_lambda_.5} parent=1 // pred_check
      _
    $region23: #{_lambda_.5} parent=1 // pred_check_branch
      %206 = sbr.rel (0) target = $region25
    $region24: #{_lambda_.5} parent=1 // pred_region
      %208 = dma.done [#allocation3], 16
    $region25: #{_lambda_.5} parent=1 // pred_fallthru
      _
    %209 = sfence
    %210 = vsyncpa [#allocation3], 1

// kernel: _lambda_.3
$region0: #{_lambda_.3}
  #allocation0 [shape = 'u32[]', space=smem, size = 0x4, offset = 0x4, fixed_abs, tag = 'smem constant byte address 0x4 - core index']
  #allocation1 [shape = 'u32[72,128]{1,0:T(1,128)}', space=vmem, size = 0x9000, scoped, tag = 'internal scratch']
  #allocation2 [shape = 'f32[8,32]{1,0:T(8,128)}', space=vmem, size = 0x1000, scoped, tag = 'scratch operand']
  %s0 = inlined_call_operand.vmem [shape: f32[2,8,32], index: 0, kind: input, shape index: {}]
  %s1 = inlined_call_operand.vmem [shape: f32[2,8,8], index: 1, kind: input, shape index: {}]
  %s2 = inlined_call_operand.vmem [shape: f32[2,1,8], index: 2, kind: input, shape index: {}]
  %s3 = inlined_call_operand.vmem [shape: f32[2,1,32], index: 3, kind: input, shape index: {}]
  %s4 = inlined_call_operand.vmem [shape: bf16[2,2,32,48], index: 4, kind: input, shape index: {}]
  %s5 = inlined_call_operand.vmem [shape: bf16[2,2,16,32], index: 5, kind: input, shape index: {}]
  %s6 = inlined_call_operand.vmem [shape: f32[2,1,32], index: 6, kind: input, shape index: {}]
  %s7 = inlined_call_operand.vmem [shape: bf16[2,32,64], index: 7, kind: input, shape index: {}]
  %s8 = inlined_call_operand.vmem [shape: bf16[2,64,32], index: 8, kind: input, shape index: {}]
  %s9 = inlined_call_operand.vmem [shape: f32[1,32], index: 9, kind: input, shape index: {}]
  %s10 = inlined_call_operand.vmem [shape: f32[2,8,32], index: 10, kind: output, shape index: {}]
  %s11 = sld [smem:[#allocation0]]
  $region77: #{_lambda_.3} parent=0
    _
  %s13 = ssub.s32 1, %s11
  %s14 = scalar_select 0, %s13, %s11
  loop: start=0, step=1, limit=6
  $region2: #{_lambda_.3} parent=0 // loop_pre_header
    _
  $region3: #{_lambda_.3} parent=0 // loop_header
    %s16 = sphi 0, %s20
    %p17 = scmp.ge.s32.totalorder %s16, 6
    %s23 = sphi 0, %s35
    %s24 = sphi 0, %s31
    %s25 = sphi 0, %s23
    %s26 = sphi 0, %s24
    %s27 = sphi 0, %s25
    %s28 = sphi 0, %s26
    %s38 = sphi 0, %s40
    %s41 = sphi 0, %s38
    %s42 = sphi 0, %s41
    %s58 = sphi 0, %s42
    %s62 = sphi 0, %s62
    %s64 = sphi 0, %s62
    %s65 = sphi 0, %s64
    %s79 = sphi 0, %s65
    %s85 = sphi 0, %s87
    %s88 = sphi 0, %s85
    %s89 = sphi 0, %s88
    %s105 = sphi 0, %s89
    %s111 = sphi 0, %s113
    %s114 = sphi 0, %s111
    %s115 = sphi 0, %s114
    %s131 = sphi 0, %s115
    %s137 = sphi 0, %s139
    %s140 = sphi 0, %s137
    %s141 = sphi 0, %s140
    %s157 = sphi 0, %s141
    %s163 = sphi 0, %s165
    %s166 = sphi 0, %s163
    %s167 = sphi 0, %s166
    %s183 = sphi 0, %s167
    %s189 = sphi 0, %s191
    %s192 = sphi 0, %s189
    %s193 = sphi 0, %s192
    %s209 = sphi 0, %s193
    %s215 = sphi 0, %s217
    %s218 = sphi 0, %s215
    %s219 = sphi 0, %s218
    %s235 = sphi 0, %s219
    %s241 = sphi 0, %s243
    %s244 = sphi 0, %s241
    %s245 = sphi 0, %s244
    %s261 = sphi 0, %s245
    %s265 = sphi 0, %s265
    %s267 = sphi 0, %s265
    %s268 = sphi 0, %s267
    %s282 = sphi 0, %s268
    %s288 = sphi 0, %s290
    %s291 = sphi 0, %s288
    %s292 = sphi 0, %s291
    %s308 = sphi 0, %s292
  $region4: #{_lambda_.3} parent=0 // loop_header_branch
    %19 = sbr.rel (%p17) target = $region8
  $region5: #{_lambda_.3} parent=0 // loop_body
    %s21 = ssub.s32 %s16, 1
    %s22 = ssub.s32 %s16, 2
    %s29 = sadd.s32 1, %s24
    %p30 = scmp.ge.s32.totalorder %s29, 2
    %s31 = scalar_select %p30, 0, %s29
    %s32 = sadd.s32 1, %s23
    %s33 = scalar_select %p30, %s32, %s23
    %p34 = scmp.ge.s32.totalorder %s33, 2
    %s35 = scalar_select %p34, 0, %s33
    %s36 = ssub.s32 %s23, %s35
    %p37 = scmp.eq.s32.totalorder %s36, 0
    %s39 = sadd.s32 %s38, 1
    %s40 = scalar_select %p37, %s38, %s39
    %p43 = pneg %p37
    %p44 = scmp.eq.s32.totalorder %s16, 3
    %p45 = por %p43, %p44
    %p46 = scmp.ne.s32.totalorder %s38, %s41
    %p47 = scmp.eq.s32.totalorder %s16, 0
    %p48 = por %p46, %p47
    %p49 = scmp.ne.s32.totalorder %s38, %s41
    %p50 = scmp.eq.s32.totalorder %s21, 3
    %p51 = por %p49, %p50
    %p52 = scmp.ne.s32.totalorder %s41, %s42
    %p53 = scmp.eq.s32.totalorder %s21, 0
    %p54 = por %p52, %p53
    %p55 = scmp.ne.s32.totalorder %s41, %s42
    %p56 = scmp.eq.s32.totalorder %s22, 3
    %p57 = por %p55, %p56
    %p59 = scmp.ne.s32.totalorder %s42, %s58
    %p60 = scmp.eq.s32.totalorder %s22, 0
    %p61 = por %p59, %p60
    %s63 = sadd.s32 %s62, 1
    %p66 = scmp.eq.s32.totalorder %s16, 3
    %p67 = scmp.ne.s32.totalorder %s62, %s64
    %p68 = scmp.eq.s32.totalorder %s16, 0
    %p69 = por %p67, %p68
    %p70 = scmp.ne.s32.totalorder %s62, %s64
    %p71 = scmp.eq.s32.totalorder %s21, 3
    %p72 = por %p70, %p71
    %p73 = scmp.ne.s32.totalorder %s64, %s65
    %p74 = scmp.eq.s32.totalorder %s21, 0
    %p75 = por %p73, %p74
    %p76 = scmp.ne.s32.totalorder %s64, %s65
    %p77 = scmp.eq.s32.totalorder %s22, 3
    %p78 = por %p76, %p77
    %p80 = scmp.ne.s32.totalorder %s65, %s79
    %p81 = scmp.eq.s32.totalorder %s22, 0
    %p82 = por %p80, %p81
    %s83 = ssub.s32 %s23, %s35
    %p84 = scmp.eq.s32.totalorder %s83, 0
    %s86 = sadd.s32 %s85, 1
    %s87 = scalar_select %p84, %s85, %s86
    %p90 = pneg %p84
    %p91 = scmp.eq.s32.totalorder %s16, 3
    %p92 = por %p90, %p91
    %p93 = scmp.ne.s32.totalorder %s85, %s88
    %p94 = scmp.eq.s32.totalorder %s16, 0
    %p95 = por %p93, %p94
    %p96 = scmp.ne.s32.totalorder %s85, %s88
    %p97 = scmp.eq.s32.totalorder %s21, 3
    %p98 = por %p96, %p97
    %p99 = scmp.ne.s32.totalorder %s88, %s89
    %p100 = scmp.eq.s32.totalorder %s21, 0
    %p101 = por %p99, %p100
    %p102 = scmp.ne.s32.totalorder %s88, %s89
    %p103 = scmp.eq.s32.totalorder %s22, 3
    %p104 = por %p102, %p103
    %p106 = scmp.ne.s32.totalorder %s89, %s105
    %p107 = scmp.eq.s32.totalorder %s22, 0
    %p108 = por %p106, %p107
    %s109 = ssub.s32 %s24, %s31
    %p110 = scmp.eq.s32.totalorder %s109, 0
    %s112 = sadd.s32 %s111, 1
    %s113 = scalar_select %p110, %s111, %s112
    %p116 = pneg %p110
    %p117 = scmp.eq.s32.totalorder %s16, 3
    %p118 = por %p116, %p117
    %p119 = scmp.ne.s32.totalorder %s111, %s114
    %p120 = scmp.eq.s32.totalorder %s16, 0
    %p121 = por %p119, %p120
    %p122 = scmp.ne.s32.totalorder %s111, %s114
    %p123 = scmp.eq.s32.totalorder %s21, 3
    %p124 = por %p122, %p123
    %p125 = scmp.ne.s32.totalorder %s114, %s115
    %p126 = scmp.eq.s32.totalorder %s21, 0
    %p127 = por %p125, %p126
    %p128 = scmp.ne.s32.totalorder %s114, %s115
    %p129 = scmp.eq.s32.totalorder %s22, 3
    %p130 = por %p128, %p129
    %p132 = scmp.ne.s32.totalorder %s115, %s131
    %p133 = scmp.eq.s32.totalorder %s22, 0
    %p134 = por %p132, %p133
    %s135 = ssub.s32 %s24, %s31
    %p136 = scmp.eq.s32.totalorder %s135, 0
    %s138 = sadd.s32 %s137, 1
    %s139 = scalar_select %p136, %s137, %s138
    %p142 = pneg %p136
    %p143 = scmp.eq.s32.totalorder %s16, 3
    %p144 = por %p142, %p143
    %p145 = scmp.ne.s32.totalorder %s137, %s140
    %p146 = scmp.eq.s32.totalorder %s16, 0
    %p147 = por %p145, %p146
    %p148 = scmp.ne.s32.totalorder %s137, %s140
    %p149 = scmp.eq.s32.totalorder %s21, 3
    %p150 = por %p148, %p149
    %p151 = scmp.ne.s32.totalorder %s140, %s141
    %p152 = scmp.eq.s32.totalorder %s21, 0
    %p153 = por %p151, %p152
    %p154 = scmp.ne.s32.totalorder %s140, %s141
    %p155 = scmp.eq.s32.totalorder %s22, 3
    %p156 = por %p154, %p155
    %p158 = scmp.ne.s32.totalorder %s141, %s157
    %p159 = scmp.eq.s32.totalorder %s22, 0
    %p160 = por %p158, %p159
    %s161 = ssub.s32 %s24, %s31
    %p162 = scmp.eq.s32.totalorder %s161, 0
    %s164 = sadd.s32 %s163, 1
    %s165 = scalar_select %p162, %s163, %s164
    %p168 = pneg %p162
    %p169 = scmp.eq.s32.totalorder %s16, 3
    %p170 = por %p168, %p169
    %p171 = scmp.ne.s32.totalorder %s163, %s166
    %p172 = scmp.eq.s32.totalorder %s16, 0
    %p173 = por %p171, %p172
    %p174 = scmp.ne.s32.totalorder %s163, %s166
    %p175 = scmp.eq.s32.totalorder %s21, 3
    %p176 = por %p174, %p175
    %p177 = scmp.ne.s32.totalorder %s166, %s167
    %p178 = scmp.eq.s32.totalorder %s21, 0
    %p179 = por %p177, %p178
    %p180 = scmp.ne.s32.totalorder %s166, %s167
    %p181 = scmp.eq.s32.totalorder %s22, 3
    %p182 = por %p180, %p181
    %p184 = scmp.ne.s32.totalorder %s167, %s183
    %p185 = scmp.eq.s32.totalorder %s22, 0
    %p186 = por %p184, %p185
    %s187 = ssub.s32 %s24, %s31
    %p188 = scmp.eq.s32.totalorder %s187, 0
    %s190 = sadd.s32 %s189, 1
    %s191 = scalar_select %p188, %s189, %s190
    %p194 = pneg %p188
    %p195 = scmp.eq.s32.totalorder %s16, 3
    %p196 = por %p194, %p195
    %p197 = scmp.ne.s32.totalorder %s189, %s192
    %p198 = scmp.eq.s32.totalorder %s16, 0
    %p199 = por %p197, %p198
    %p200 = scmp.ne.s32.totalorder %s189, %s192
    %p201 = scmp.eq.s32.totalorder %s21, 3
    %p202 = por %p200, %p201
    %p203 = scmp.ne.s32.totalorder %s192, %s193
    %p204 = scmp.eq.s32.totalorder %s21, 0
    %p205 = por %p203, %p204
    %p206 = scmp.ne.s32.totalorder %s192, %s193
    %p207 = scmp.eq.s32.totalorder %s22, 3
    %p208 = por %p206, %p207
    %p210 = scmp.ne.s32.totalorder %s193, %s209
    %p211 = scmp.eq.s32.totalorder %s22, 0
    %p212 = por %p210, %p211
    %s213 = ssub.s32 %s24, %s31
    %p214 = scmp.eq.s32.totalorder %s213, 0
    %s216 = sadd.s32 %s215, 1
    %s217 = scalar_select %p214, %s215, %s216
    %p220 = pneg %p214
    %p221 = scmp.eq.s32.totalorder %s16, 3
    %p222 = por %p220, %p221
    %p223 = scmp.ne.s32.totalorder %s215, %s218
    %p224 = scmp.eq.s32.totalorder %s16, 0
    %p225 = por %p223, %p224
    %p226 = scmp.ne.s32.totalorder %s215, %s218
    %p227 = scmp.eq.s32.totalorder %s21, 3
    %p228 = por %p226, %p227
    %p229 = scmp.ne.s32.totalorder %s218, %s219
    %p230 = scmp.eq.s32.totalorder %s21, 0
    %p231 = por %p229, %p230
    %p232 = scmp.ne.s32.totalorder %s218, %s219
    %p233 = scmp.eq.s32.totalorder %s22, 3
    %p234 = por %p232, %p233
    %p236 = scmp.ne.s32.totalorder %s219, %s235
    %p237 = scmp.eq.s32.totalorder %s22, 0
    %p238 = por %p236, %p237
    %s239 = ssub.s32 %s24, %s31
    %p240 = scmp.eq.s32.totalorder %s239, 0
    %s242 = sadd.s32 %s241, 1
    %s243 = scalar_select %p240, %s241, %s242
    %p246 = pneg %p240
    %p247 = scmp.eq.s32.totalorder %s16, 3
    %p248 = por %p246, %p247
    %p249 = scmp.ne.s32.totalorder %s241, %s244
    %p250 = scmp.eq.s32.totalorder %s16, 0
    %p251 = por %p249, %p250
    %p252 = scmp.ne.s32.totalorder %s241, %s244
    %p253 = scmp.eq.s32.totalorder %s21, 3
    %p254 = por %p252, %p253
    %p255 = scmp.ne.s32.totalorder %s244, %s245
    %p256 = scmp.eq.s32.totalorder %s21, 0
    %p257 = por %p255, %p256
    %p258 = scmp.ne.s32.totalorder %s244, %s245
    %p259 = scmp.eq.s32.totalorder %s22, 3
    %p260 = por %p258, %p259
    %p262 = scmp.ne.s32.totalorder %s245, %s261
    %p263 = scmp.eq.s32.totalorder %s22, 0
    %p264 = por %p262, %p263
    %s266 = sadd.s32 %s265, 1
    %p269 = scmp.eq.s32.totalorder %s16, 3
    %p270 = scmp.ne.s32.totalorder %s265, %s267
    %p271 = scmp.eq.s32.totalorder %s16, 0
    %p272 = por %p270, %p271
    %p273 = scmp.ne.s32.totalorder %s265, %s267
    %p274 = scmp.eq.s32.totalorder %s21, 3
    %p275 = por %p273, %p274
    %p276 = scmp.ne.s32.totalorder %s267, %s268
    %p277 = scmp.eq.s32.totalorder %s21, 0
    %p278 = por %p276, %p277
    %p279 = scmp.ne.s32.totalorder %s267, %s268
    %p280 = scmp.eq.s32.totalorder %s22, 3
    %p281 = por %p279, %p280
    %p283 = scmp.ne.s32.totalorder %s268, %s282
    %p284 = scmp.eq.s32.totalorder %s22, 0
    %p285 = por %p283, %p284
    %s286 = ssub.s32 %s23, %s35
    %p287 = scmp.eq.s32.totalorder %s286, 0
    %s289 = sadd.s32 %s288, 1
    %s290 = scalar_select %p287, %s288, %s289
    %p293 = pneg %p287
    %p294 = scmp.eq.s32.totalorder %s16, 3
    %p295 = por %p293, %p294
    %p296 = scmp.ne.s32.totalorder %s288, %s291
    %p297 = scmp.eq.s32.totalorder %s16, 0
    %p298 = por %p296, %p297
    %p299 = scmp.ne.s32.totalorder %s288, %s291
    %p300 = scmp.eq.s32.totalorder %s21, 3
    %p301 = por %p299, %p300
    %p302 = scmp.ne.s32.totalorder %s291, %s292
    %p303 = scmp.eq.s32.totalorder %s21, 0
    %p304 = por %p302, %p303
    %p305 = scmp.ne.s32.totalorder %s291, %s292
    %p306 = scmp.eq.s32.totalorder %s22, 3
    %p307 = por %p305, %p306
    %p309 = scmp.ne.s32.totalorder %s292, %s308
    %p310 = scmp.eq.s32.totalorder %s22, 0
    %p311 = por %p309, %p310
    %p312 = scmp.le.s32.totalorder 1, %s16
    %p313 = scmp.lt.s32.totalorder %s16, 5
    %p314 = pnand %p312, %p313
    %p315 = pneg %p314
    // Predicated region
    $region9: #{_lambda_.3} parent=5 // pred_check
      _
    $region10: #{_lambda_.3} parent=5 // pred_check_branch
      %317 = sbr.rel (%p314) target = $region12
    $region11: #{_lambda_.3} parent=5 // pred_region
      %s318 = ssub.s32 %s16, 1
      // Predicated region
      $region13: #{_lambda_.3} parent=11 // pred_check
        %p319 = pneg %p75
      $region14: #{_lambda_.3} parent=11 // pred_check_branch
        %321 = sbr.rel (%p319) target = $region16
      $region15: #{_lambda_.3} parent=11 // pred_region
        _
      $region16: #{_lambda_.3} parent=11 // pred_fallthru
        _
      // Predicated region
      $region17: #{_lambda_.3} parent=11 // pred_check
        %p322 = pneg %p278
      $region18: #{_lambda_.3} parent=11 // pred_check_branch
        %324 = sbr.rel (%p322) target = $region20
      $region19: #{_lambda_.3} parent=11 // pred_region
        _
      $region20: #{_lambda_.3} parent=11 // pred_fallthru
        _
    $region12: #{_lambda_.3} parent=5 // pred_fallthru
      _
    %p325 = scmp.lt.s32.totalorder %s16, 4
    // Predicated region
    $region21: #{_lambda_.3} parent=5 // pred_check
      %p326 = pneg %p325
    $region22: #{_lambda_.3} parent=5 // pred_check_branch
      %328 = sbr.rel (%p326) target = $region24
    $region23: #{_lambda_.3} parent=5 // pred_region
      // Predicated region
      $region25: #{_lambda_.3} parent=23 // pred_check
        %p329 = pneg %p48
      $region26: #{_lambda_.3} parent=23 // pred_check_branch
        %331 = sbr.rel (%p329) target = $region28
      $region27: #{_lambda_.3} parent=23 // pred_region
        %p332 = scmp.lt.s32.totalorder %s23, 1
        %s333 = scalar_select %p332, %s23, 1
        %s334 = smul.addr %s333, 8
        %s335 = scalar_lea.vmem %s0, %s334
      $region28: #{_lambda_.3} parent=23 // pred_fallthru
        _
      // Predicated region
      $region29: #{_lambda_.3} parent=23 // pred_check
        %p336 = pneg %p95
      $region30: #{_lambda_.3} parent=23 // pred_check_branch
        %338 = sbr.rel (%p336) target = $region32
      $region31: #{_lambda_.3} parent=23 // pred_region
        %p339 = scmp.lt.s32.totalorder %s23, 1
        %s340 = scalar_select %p339, %s23, 1
        %s341 = scalar_lea.vmem %s2, %s340
      $region32: #{_lambda_.3} parent=23 // pred_fallthru
        _
      // Predicated region
      $region33: #{_lambda_.3} parent=23 // pred_check
        %p342 = pneg %p121
      $region34: #{_lambda_.3} parent=23 // pred_check_branch
        %344 = sbr.rel (%p342) target = $region36
      $region35: #{_lambda_.3} parent=23 // pred_region
        %p345 = scmp.lt.s32.totalorder %s24, 1
        %s346 = scalar_select %p345, %s24, 1
        %s347 = scalar_lea.vmem %s3, %s346
      $region36: #{_lambda_.3} parent=23 // pred_fallthru
        _
      // Predicated region
      $region37: #{_lambda_.3} parent=23 // pred_check
        %p348 = pneg %p147
      $region38: #{_lambda_.3} parent=23 // pred_check_branch
        %350 = sbr.rel (%p348) target = $region40
      $region39: #{_lambda_.3} parent=23 // pred_region
        %p351 = scmp.lt.s32.totalorder %s24, 1
        %s352 = scalar_select %p351, %s24, 1
        %s353 = smul.addr %s352, 8
        %s354 = smul.addr %s353, 4
        %s355 = scalar_lea.vmem %s4, %s354
      $region40: #{_lambda_.3} parent=23 // pred_fallthru
        _
      // Predicated region
      $region41: #{_lambda_.3} parent=23 // pred_check
        %p356 = pneg %p173
      $region42: #{_lambda_.3} parent=23 // pred_check_branch
        %358 = sbr.rel (%p356) target = $region44
      $region43: #{_lambda_.3} parent=23 // pred_region
        %p359 = scmp.lt.s32.totalorder %s24, 1
        %s360 = scalar_select %p359, %s24, 1
        %s361 = smul.addr %s360, 4
        %s362 = smul.addr %s361, 4
        %s363 = scalar_lea.vmem %s5, %s362
      $region44: #{_lambda_.3} parent=23 // pred_fallthru
        _
      // Predicated region
      $region45: #{_lambda_.3} parent=23 // pred_check
        %p364 = pneg %p199
      $region46: #{_lambda_.3} parent=23 // pred_check_branch
        %366 = sbr.rel (%p364) target = $region48
      $region47: #{_lambda_.3} parent=23 // pred_region
        %p367 = scmp.lt.s32.totalorder %s24, 1
        %s368 = scalar_select %p367, %s24, 1
        %s369 = scalar_lea.vmem %s6, %s368
      $region48: #{_lambda_.3} parent=23 // pred_fallthru
        _
      // Predicated region
      $region49: #{_lambda_.3} parent=23 // pred_check
        %p370 = pneg %p225
      $region50: #{_lambda_.3} parent=23 // pred_check_branch
        %372 = sbr.rel (%p370) target = $region52
      $region51: #{_lambda_.3} parent=23 // pred_region
        %p373 = scmp.lt.s32.totalorder %s24, 1
        %s374 = scalar_select %p373, %s24, 1
        %s375 = smul.addr %s374, 4
        %s376 = smul.addr %s375, 4
        %s377 = scalar_lea.vmem %s7, %s376
      $region52: #{_lambda_.3} parent=23 // pred_fallthru
        _
      // Predicated region
      $region53: #{_lambda_.3} parent=23 // pred_check
        %p378 = pneg %p251
      $region54: #{_lambda_.3} parent=23 // pred_check_branch
        %380 = sbr.rel (%p378) target = $region56
      $region55: #{_lambda_.3} parent=23 // pred_region
        %p381 = scmp.lt.s32.totalorder %s24, 1
        %s382 = scalar_select %p381, %s24, 1
        %s383 = smul.addr %s382, 8
        %s384 = smul.addr %s383, 4
        %s385 = scalar_lea.vmem %s8, %s384
      $region56: #{_lambda_.3} parent=23 // pred_fallthru
        _
    $region24: #{_lambda_.3} parent=5 // pred_fallthru
      _
    %p386 = scmp.le.s32.totalorder 1, %s16
    %p387 = scmp.lt.s32.totalorder %s16, 5
    %p388 = pnand %p386, %p387
    %p389 = pneg %p388
    // Predicated region
    $region57: #{_lambda_.3} parent=5 // pred_check
      _
    $region58: #{_lambda_.3} parent=5 // pred_check_branch
      %391 = sbr.rel (%p388) target = $region60
    $region59: #{_lambda_.3} parent=5 // pred_region
      %s392 = ssub.s32 %s16, 1
      %p393 = scmp.lt.s32.totalorder %s25, 1
      %s394 = scalar_select %p393, %s25, 1
      %s395 = smul.addr %s394, 8
      %s396 = scalar_lea.vmem %s0, %s395
      %p397 = pneg %p54
      %p398 = pneg %p51
      %p399 = pneg %p75
      %p400 = pneg %p72
      %p401 = scmp.lt.s32.totalorder %s25, 1
      %s402 = scalar_select %p401, %s25, 1
      %s403 = scalar_lea.vmem %s2, %s402
      %p404 = pneg %p101
      %p405 = pneg %p98
      %p406 = scmp.lt.s32.totalorder %s26, 1
      %s407 = scalar_select %p406, %s26, 1
      %s408 = scalar_lea.vmem %s3, %s407
      %p409 = pneg %p127
      %p410 = pneg %p124
      %p411 = scmp.lt.s32.totalorder %s26, 1
      %s412 = scalar_select %p411, %s26, 1
      %s413 = smul.addr %s412, 8
      %s414 = smul.addr %s413, 4
      %s415 = scalar_lea.vmem %s4, %s414
      %p416 = pneg %p153
      %p417 = pneg %p150
      %p418 = scmp.lt.s32.totalorder %s26, 1
      %s419 = scalar_select %p418, %s26, 1
      %s420 = smul.addr %s419, 4
      %s421 = smul.addr %s420, 4
      %s422 = scalar_lea.vmem %s5, %s421
      %p423 = pneg %p179
      %p424 = pneg %p176
      %p425 = scmp.lt.s32.totalorder %s26, 1
      %s426 = scalar_select %p425, %s26, 1
      %s427 = scalar_lea.vmem %s6, %s426
      %p428 = pneg %p205
      %p429 = pneg %p202
      %p430 = scmp.lt.s32.totalorder %s26, 1
      %s431 = scalar_select %p430, %s26, 1
      %s432 = smul.addr %s431, 4
      %s433 = smul.addr %s432, 4
      %s434 = scalar_lea.vmem %s7, %s433
      %p435 = pneg %p231
      %p436 = pneg %p228
      %p437 = scmp.lt.s32.totalorder %s26, 1
      %s438 = scalar_select %p437, %s26, 1
      %s439 = smul.addr %s438, 8
      %s440 = smul.addr %s439, 4
      %s441 = scalar_lea.vmem %s8, %s440
      %p442 = pneg %p257
      %p443 = pneg %p254
      %p444 = pneg %p278
      %p445 = pneg %p275
      %p446 = pneg %p304
      %p447 = pneg %p301
      %p448 = scmp.lt.s32.totalorder %s25, 1
      %s449 = scalar_select %p448, %s25, 1
      %s450 = smul.addr %s449, 8
      %s451 = scalar_lea.vmem %s10, %s450
      %p452 = scmp.lt.s32.totalorder %s25, 1
      %s453 = scalar_select %p452, %s25, 1
      %s454 = smul.addr %s453, 8
      %s455 = scalar_lea.vmem %s0, %s454
      %p456 = scmp.lt.s32.totalorder %s25, 1
      %s457 = scalar_select %p456, %s25, 1
      %s458 = scalar_lea.vmem %s2, %s457
      %p459 = scmp.lt.s32.totalorder %s26, 1
      %s460 = scalar_select %p459, %s26, 1
      %s461 = scalar_lea.vmem %s3, %s460
      %p462 = scmp.lt.s32.totalorder %s26, 1
      %s463 = scalar_select %p462, %s26, 1
      %s464 = smul.addr %s463, 8
      %s465 = smul.addr %s464, 4
      %s466 = scalar_lea.vmem %s4, %s465
      %p467 = scmp.lt.s32.totalorder %s26, 1
      %s468 = scalar_select %p467, %s26, 1
      %s469 = smul.addr %s468, 4
      %s470 = smul.addr %s469, 4
      %s471 = scalar_lea.vmem %s5, %s470
      %p472 = scmp.lt.s32.totalorder %s26, 1
      %s473 = scalar_select %p472, %s26, 1
      %s474 = scalar_lea.vmem %s6, %s473
      %p475 = scmp.lt.s32.totalorder %s26, 1
      %s476 = scalar_select %p475, %s26, 1
      %s477 = smul.addr %s476, 4
      %s478 = smul.addr %s477, 4
      %s479 = scalar_lea.vmem %s7, %s478
      %p480 = scmp.lt.s32.totalorder %s26, 1
      %s481 = scalar_select %p480, %s26, 1
      %s482 = smul.addr %s481, 8
      %s483 = smul.addr %s482, 4
      %s484 = scalar_lea.vmem %s8, %s483
      %p485 = scmp.lt.s32.totalorder %s25, 1
      %s486 = scalar_select %p485, %s25, 1
      %s487 = smul.addr %s486, 8
      %s488 = scalar_lea.vmem %s10, %s487
      %p490 = scmp.eq.s32.totalorder %s26, 0
      // Predicated region
      $region61: #{_lambda_.3} parent=59 // pred_check
        %p491 = pneg %p490
      $region62: #{_lambda_.3} parent=59 // pred_check_branch
        %493 = sbr.rel (%p491) target = $region64
      $region63: #{_lambda_.3} parent=59 // pred_region
        %v494 = vld [vmem:[%s455] sm:$0xff]
        %vm495 = vcmask 261120
        %496 = vst.msk [vmem:[#allocation2] sm:$0xff] %vm495, %v494
      $region64: #{_lambda_.3} parent=59 // pred_fallthru
        _
      %v497 = vld [vmem:[#allocation2] sm:$0xff]
      %v498 = vld [vmem:[%s1] sm:$0xff]
      %v499 = vld [vmem:[%s1 + $0x8] sm:$0xff]
      %v500 = vld [vmem:[%s458] sm:$0x1]
      %v501 = vld [vmem:[%s461] sm:$0x1]
      %v502 = vmul.f32 %v497, %v497
      %vm503 = vcmask 261120
      %v504 = vsel %vm503, %v502, 0.0
      %505 = vadd.xlane.f32.xlu0 %v504
      %v506 = vpop.xlane.xlu0 %505
      %v507 = vrcp.pop 32.0
      %v508 = vmul.f32 32.0, %v507
      %v509 = vsub.f32 1.0, %v508
      %v510 = vmul.f32 %v507, %v509
      %v511 = vadd.f32 %v507, %v510
      %vm512 = vweird.f32 %v507
      %v513 = vsel %vm512, %v507, %v511
      %v514 = vmul.f32 %v506, %v513
      %v515 = vadd.f32 %v514, 1e-06
      %v516 = vrsqrt.pop %v515
      %v517 = vmul.f32 %v516, %v515
      %v518 = vmul.f32 %v517, %v516
      %v519 = vmul.f32 0.5, %v518
      %v520 = vsub.f32 1.5, %v519
      %v521 = vmul.f32 %v516, %v520
      %vm522 = vweird.f32 %v515
      %vm523 = vweird.f32 %v516
      %vm524 = vmor %vm522, %vm523
      %v525 = vsel %vm524, %v516, %v521
      %v526 = vmul.f32 %v497, %v525
      %v528 = vperm.slane %v501, 0
      %v530 = vmul.f32 %v526, %v528
      %v531 = vld [vmem:[%s466] sm:$0xf]
      %v532 = vld [vmem:[%s466 + $0x4] sm:$0xf]
      %v533 = vld [vmem:[%s466 + $0x8] sm:$0xf]
      %v534 = vld [vmem:[%s466 + $0xc] sm:$0xf]
      %v535 = vld [vmem:[%s466 + $0x10] sm:$0xf]
      %v536 = vld [vmem:[%s466 + $0x14] sm:$0xf]
      %v537 = vld [vmem:[%s466 + $0x18] sm:$0xf]
      %v538 = vld [vmem:[%s466 + $0x1c] sm:$0xf]
      %v539 = vpack.c.bf16 %v530, %v530
      %v544 = vunpack.c.l.b16 %v531
      %v545 = vunpack.c.l.b16 %v532
      %v546 = vunpack.c.l.b16 %v533
      %v547 = vunpack.c.l.b16 %v534
      %v548 = vpack.c.b16 %v545, %v544
      %v549 = vpack.c.b16 %v547, %v546
      %v553 = vsel %vm503, %v539, 0
      %555 = vmatpush.bf16.msra.mxu0 0
      %556 = vmatpush.bf16.msra.mxu0 0
      %557 = vmatpush.bf16.msra.mxu0 0
      %558 = vmatpush.bf16.msra.mxu0 0
      %559 = vmatpush.bf16.msra.mxu0 0
      %560 = vmatpush.bf16.msra.mxu0 0
      %561 = vmatpush.bf16.msra.mxu0 %v549
      %562 = vmatpush.bf16.msra.mxu0 %v548
      %563 = vmatmul.bf16.gmra.mxu0 %v553
      %v564 = vpop.f32.mrf.mxu0
      %v565 = vadd.f32 0.0, %v564
      %v566 = vpop.f32.mrf.mxu0
      %567 = vdwg.mxu0
      %v572 = vunpack.c.l.b16 %v535
      %v573 = vunpack.c.l.b16 %v536
      %v574 = vunpack.c.l.b16 %v537
      %v575 = vunpack.c.l.b16 %v538
      %v576 = vpack.c.b16 %v573, %v572
      %v577 = vpack.c.b16 %v575, %v574
      %580 = vmatpush.bf16.msra.mxu0 0
      %581 = vmatpush.bf16.msra.mxu0 0
      %582 = vmatpush.bf16.msra.mxu0 0
      %583 = vmatpush.bf16.msra.mxu0 0
      %584 = vmatpush.bf16.msra.mxu0 0
      %585 = vmatpush.bf16.msra.mxu0 0
      %586 = vmatpush.bf16.msra.mxu0 %v577
      %587 = vmatpush.bf16.msra.mxu0 %v576
      %588 = vmatmul.bf16.gmra.mxu0 %v553
      %v589 = vpop.f32.mrf.mxu0
      %v590 = vadd.f32 0.0, %v589
      %v591 = vpop.f32.mrf.mxu0
      %592 = vdwg.mxu0
      %v593 = vpack.c.bf16 %v565, %v565
      %v594 = vpack.c.bf16 %v590, %v590
      %v596 = vunpack.c.l.b16 %v593
      %v597 = vpack.c.b16 %v596, %v596
      %598 = vrot.lane.b32.xlu0 %v597, 112
      %v599 = vpop.permute.xlu0 %598
      %vm600 = vcmask 130048
      %v602 = vsel %vm600, %v593, 0
      %v605 = vsel %vm600, %v599, 0
      %607 = vmatpush.bf16.xpose.msra.mxu0 0
      %608 = vmatpush.bf16.xpose.msra.mxu0 0
      %609 = vmatpush.bf16.xpose.msra.mxu0 0
      %610 = vmatpush.bf16.xpose.msra.mxu0 0
      %611 = vmatpush.bf16.xpose.msra.mxu0 0
      %612 = vmatpush.bf16.xpose.msra.mxu0 0
      %613 = vmatpush.bf16.xpose.msra.mxu0 0
      %614 = vmatpush.bf16.xpose.msra.mxu0 %v605
      %615 = vmatmul.bf16.gmra.mxu0 %v602
      %v616 = vpop.f32.mrf.mxu0
      %v617 = vadd.f32 %v498, %v616
      %v618 = vpop.f32.mrf.mxu0
      %619 = vdwg.mxu0
      %v621 = vunpack.c.l.b16 %v594
      %v622 = vpack.c.b16 %v621, %v621
      %623 = vrot.lane.b32.xlu0 %v622, 112
      %v624 = vpop.permute.xlu0 %623
      %v626 = vsel %vm600, %v594, 0
      %v629 = vsel %vm600, %v624, 0
      %631 = vmatpush.bf16.xpose.msra.mxu0 0
      %632 = vmatpush.bf16.xpose.msra.mxu0 0
      %633 = vmatpush.bf16.xpose.msra.mxu0 0
      %634 = vmatpush.bf16.xpose.msra.mxu0 0
      %635 = vmatpush.bf16.xpose.msra.mxu0 0
      %636 = vmatpush.bf16.xpose.msra.mxu0 0
      %637 = vmatpush.bf16.xpose.msra.mxu0 0
      %638 = vmatpush.bf16.xpose.msra.mxu0 %v629
      %639 = vmatmul.bf16.gmra.mxu0 %v626
      %v640 = vpop.f32.mrf.mxu0
      %v641 = vadd.f32 %v499, %v640
      %v642 = vpop.f32.mrf.mxu0
      %643 = vdwg.mxu0
      %v645 = vperm.slane %v500, 0
      %v647 = vadd.f32 %v617, %v645
      %v648 = vadd.f32 %v641, %v645
      %vm649 = vcmask 64512
      %v650 = vsel %vm649, %v647, -inf
      %651 = vmax.xlane.f32.xlu0 %v650
      %v652 = vpop.xlane.xlu0 %651
      %v653 = vsel %vm649, %v648, -inf
      %654 = vmax.xlane.f32.xlu0 %v653
      %v655 = vpop.xlane.xlu0 %654
      %v656 = vsub.f32 %v647, %v652
      %v657 = vsub.f32 %v648, %v655
      %v658 = vmul.f32 %v656, 1.442695
      %v659 = vpow.pop %v658
      %v660 = vmul.f32 %v657, 1.442695
      %v661 = vpow.pop %v660
      %v662 = vsel %vm649, %v659, 0.0
      %663 = vadd.xlane.f32.xlu0 %v662
      %v664 = vpop.xlane.xlu0 %663
      %v665 = vsel %vm649, %v661, 0.0
      %666 = vadd.xlane.f32.xlu0 %v665
      %v667 = vpop.xlane.xlu0 %666
      %v668 = vrcp.pop %v664
      %v669 = vrcp.pop %v667
      %v670 = vmul.f32 %v659, %v668
      %v671 = vmul.f32 %v661, %v669
      %v672 = vpack.c.bf16 %v670, %v670
      %v673 = vpack.c.bf16 %v671, %v671
      %674 = vrot.lane.b32.xlu0 %v597, 96
      %v675 = vpop.permute.xlu0 %674
      %v677 = vsel %vm649, %v672, 0
      %vm679 = vcmask 1043456
      %v681 = vsel %vm679, %v675, 0
      %683 = vmatpush.bf16.msra.mxu0 0
      %684 = vmatpush.bf16.msra.mxu0 0
      %685 = vmatpush.bf16.msra.mxu0 0
      %686 = vmatpush.bf16.msra.mxu0 0
      %687 = vmatpush.bf16.msra.mxu0 0
      %688 = vmatpush.bf16.msra.mxu0 0
      %689 = vmatpush.bf16.msra.mxu0 0
      %690 = vmatpush.bf16.msra.mxu0 %v681
      %691 = vmatmul.bf16.gmra.mxu0 %v677
      %v692 = vpop.f32.mrf.mxu0
      %v693 = vadd.f32 0.0, %v692
      %v694 = vpop.f32.mrf.mxu0
      %695 = vdwg.mxu0
      %696 = vrot.lane.b32.xlu0 %v622, 96
      %v697 = vpop.permute.xlu0 %696
      %v699 = vsel %vm649, %v673, 0
      %v702 = vsel %vm679, %v697, 0
      %704 = vmatpush.bf16.msra.mxu0 0
      %705 = vmatpush.bf16.msra.mxu0 0
      %706 = vmatpush.bf16.msra.mxu0 0
      %707 = vmatpush.bf16.msra.mxu0 0
      %708 = vmatpush.bf16.msra.mxu0 0
      %709 = vmatpush.bf16.msra.mxu0 0
      %710 = vmatpush.bf16.msra.mxu0 0
      %711 = vmatpush.bf16.msra.mxu0 %v702
      %712 = vmatmul.bf16.gmra.mxu0 %v699
      %v713 = vpop.f32.mrf.mxu0
      %v714 = vadd.f32 0.0, %v713
      %v715 = vpop.f32.mrf.mxu0
      %716 = vdwg.mxu0
      %v717 = vld [vmem:[%s471] sm:$0xf]
      %v718 = vld [vmem:[%s471 + $0x4] sm:$0xf]
      %v719 = vld [vmem:[%s471 + $0x8] sm:$0xf]
      %v720 = vld [vmem:[%s471 + $0xc] sm:$0xf]
      %v721 = vpack.c.bf16 %v693, %v693
      %v722 = vpack.c.bf16 %v714, %v714
      %v725 = vunpack.c.l.b16 %v717
      %v726 = vunpack.c.l.b16 %v718
      %v727 = vpack.c.b16 %v726, %v725
      %v730 = vsel %vm600, %v721, 0
      %732 = vmatpush.bf16.msra.mxu0 0
      %733 = vmatpush.bf16.msra.mxu0 0
      %734 = vmatpush.bf16.msra.mxu0 0
      %735 = vmatpush.bf16.msra.mxu0 0
      %736 = vmatpush.bf16.msra.mxu0 0
      %737 = vmatpush.bf16.msra.mxu0 0
      %738 = vmatpush.bf16.msra.mxu0 0
      %739 = vmatpush.bf16.msra.mxu0 %v727
      %740 = vmatmul.bf16.gmra.mxu0 %v730
      %v741 = vpop.f32.mrf.mxu0
      %v742 = vadd.f32 0.0, %v741
      %v743 = vpop.f32.mrf.mxu0
      %744 = vdwg.mxu0
      %v747 = vunpack.c.l.b16 %v719
      %v748 = vunpack.c.l.b16 %v720
      %v749 = vpack.c.b16 %v748, %v747
      %v752 = vsel %vm600, %v722, 0
      %754 = vmatpush.bf16.msra.mxu0 0
      %755 = vmatpush.bf16.msra.mxu0 0
      %756 = vmatpush.bf16.msra.mxu0 0
      %757 = vmatpush.bf16.msra.mxu0 0
      %758 = vmatpush.bf16.msra.mxu0 0
      %759 = vmatpush.bf16.msra.mxu0 0
      %760 = vmatpush.bf16.msra.mxu0 0
      %761 = vmatpush.bf16.msra.mxu0 %v749
      %762 = vmatmul.bf16.gmra.mxu0 %v752
      %v763 = vpop.f32.mrf.mxu0
      %v764 = vadd.f32 0.0, %v763
      %v765 = vpop.f32.mrf.mxu0
      %766 = vdwg.mxu0
      %v767 = vsel %vm503, %v742, 0.0
      %v768 = vsel %vm503, %v764, 0.0
      %v769 = vadd.f32 %v767, %v768
      %v770 = vadd.f32 %v497, %v769
      %v771 = vld [vmem:[%s474] sm:$0x1]
      %v772 = vmul.f32 %v770, %v770
      %v773 = vsel %vm503, %v772, 0.0
      %774 = vadd.xlane.f32.xlu0 %v773
      %v775 = vpop.xlane.xlu0 %774
      %v776 = vmul.f32 %v775, %v513
      %v777 = vadd.f32 %v776, 1e-06
      %v778 = vrsqrt.pop %v777
      %v779 = vmul.f32 %v778, %v777
      %v780 = vmul.f32 %v779, %v778
      %v781 = vmul.f32 0.5, %v780
      %v782 = vsub.f32 1.5, %v781
      %v783 = vmul.f32 %v778, %v782
      %vm784 = vweird.f32 %v777
      %vm785 = vweird.f32 %v778
      %vm786 = vmor %vm784, %vm785
      %v787 = vsel %vm786, %v778, %v783
      %v788 = vmul.f32 %v770, %v787
      %v790 = vperm.slane %v771, 0
      %v792 = vmul.f32 %v788, %v790
      %v793 = vld [vmem:[%s479] sm:$0xf]
      %v794 = vld [vmem:[%s479 + $0x4] sm:$0xf]
      %v795 = vld [vmem:[%s479 + $0x8] sm:$0xf]
      %v796 = vld [vmem:[%s479 + $0xc] sm:$0xf]
      %v797 = vpack.c.bf16 %v792, %v792
      %v802 = vunpack.c.l.b16 %v793
      %v803 = vunpack.c.l.b16 %v794
      %v804 = vunpack.c.l.b16 %v795
      %v805 = vunpack.c.l.b16 %v796
      %v806 = vpack.c.b16 %v803, %v802
      %v807 = vpack.c.b16 %v805, %v804
      %v811 = vsel %vm503, %v797, 0
      %813 = vmatpush.bf16.msra.mxu0 0
      %814 = vmatpush.bf16.msra.mxu0 0
      %815 = vmatpush.bf16.msra.mxu0 0
      %816 = vmatpush.bf16.msra.mxu0 0
      %817 = vmatpush.bf16.msra.mxu0 0
      %818 = vmatpush.bf16.msra.mxu0 0
      %819 = vmatpush.bf16.msra.mxu0 %v807
      %820 = vmatpush.bf16.msra.mxu0 %v806
      %821 = vmatmul.bf16.gmra.mxu0 %v811
      %v822 = vpop.f32.mrf.mxu0
      %v823 = vadd.f32 0.0, %v822
      %v824 = vpop.f32.mrf.mxu0
      %825 = vdwg.mxu0
      %v826 = vmax.f32 %v823, 0.0
      %v827 = vld [vmem:[%s484] sm:$0xf]
      %v828 = vld [vmem:[%s484 + $0x4] sm:$0xf]
      %v829 = vld [vmem:[%s484 + $0x8] sm:$0xf]
      %v830 = vld [vmem:[%s484 + $0xc] sm:$0xf]
      %v831 = vld [vmem:[%s484 + $0x10] sm:$0xf]
      %v832 = vld [vmem:[%s484 + $0x14] sm:$0xf]
      %v833 = vld [vmem:[%s484 + $0x18] sm:$0xf]
      %v834 = vld [vmem:[%s484 + $0x1c] sm:$0xf]
      %v835 = vpack.c.bf16 %v826, %v826
      %v844 = vunpack.c.l.b16 %v827
      %v845 = vunpack.c.l.b16 %v828
      %v846 = vunpack.c.l.b16 %v829
      %v847 = vunpack.c.l.b16 %v830
      %v848 = vunpack.c.l.b16 %v831
      %v849 = vunpack.c.l.b16 %v832
      %v850 = vunpack.c.l.b16 %v833
      %v851 = vunpack.c.l.b16 %v834
      %v852 = vpack.c.b16 %v845, %v844
      %v853 = vpack.c.b16 %v847, %v846
      %v854 = vpack.c.b16 %v849, %v848
      %v855 = vpack.c.b16 %v851, %v850
      %vm860 = vcmask 523264
      %v862 = vsel %vm860, %v835, 0
      %864 = vmatpush.bf16.msra.mxu0 0
      %865 = vmatpush.bf16.msra.mxu0 0
      %866 = vmatpush.bf16.msra.mxu0 0
      %867 = vmatpush.bf16.msra.mxu0 0
      %868 = vmatpush.bf16.msra.mxu0 %v855
      %869 = vmatpush.bf16.msra.mxu0 %v854
      %870 = vmatpush.bf16.msra.mxu0 %v853
      %871 = vmatpush.bf16.msra.mxu0 %v852
      %872 = vmatmul.bf16.gmra.mxu0 %v862
      %v873 = vpop.f32.mrf.mxu0
      %v874 = vadd.f32 0.0, %v873
      %v875 = vpop.f32.mrf.mxu0
      %876 = vdwg.mxu0
      %v877 = vadd.f32 %v770, %v874
      %878 = vst.msk [vmem:[#allocation2] sm:$0xff] %vm503, %v877
      %p879 = scmp.eq.s32.totalorder %s26, 1
      %v880 = vld [vmem:[%s9] sm:$0x1]
      %v881 = vmul.f32 %v877, %v877
      %v882 = vsel %vm503, %v881, 0.0
      %883 = vadd.xlane.f32.xlu0 %v882
      %v884 = vpop.xlane.xlu0 %883
      %v885 = vmul.f32 %v884, %v513
      %v886 = vadd.f32 %v885, 1e-06
      %v887 = vrsqrt.pop %v886
      %v888 = vmul.f32 %v887, %v886
      %v889 = vmul.f32 %v888, %v887
      %v890 = vmul.f32 0.5, %v889
      %v891 = vsub.f32 1.5, %v890
      %v892 = vmul.f32 %v887, %v891
      %vm893 = vweird.f32 %v886
      %vm894 = vweird.f32 %v887
      %vm895 = vmor %vm893, %vm894
      %v896 = vsel %vm895, %v887, %v892
      %v897 = vmul.f32 %v877, %v896
      %v899 = vperm.slane %v880, 0
      %v901 = vmul.f32 %v897, %v899
      %s902 = scalar_select %p879, 1, 0
      %v903 = vstv %s902
      %vm904 = vcmp.eq.s32.totalorder %v903, 1
      %v905 = vsel %vm904, %v901, %v877
      %906 = vst.msk [vmem:[%s488] sm:$0xff] %vm503, %v905
      %p907 = scmp.lt.s32.totalorder %s25, 1
      %s908 = scalar_select %p907, %s25, 1
      %s909 = smul.addr %s908, 8
      %s910 = scalar_lea.vmem %s10, %s909
      // Predicated region
      $region65: #{_lambda_.3} parent=59 // pred_check
        %p911 = pneg %p301
      $region66: #{_lambda_.3} parent=59 // pred_check_branch
        %913 = sbr.rel (%p911) target = $region68
      $region67: #{_lambda_.3} parent=59 // pred_region
        _
      $region68: #{_lambda_.3} parent=59 // pred_fallthru
        _
    $region60: #{_lambda_.3} parent=5 // pred_fallthru
      _
    %p914 = scmp.le.s32.totalorder 2, %s16
    // Predicated region
    $region69: #{_lambda_.3} parent=5 // pred_check
      %p915 = pneg %p914
    $region70: #{_lambda_.3} parent=5 // pred_check_branch
      %917 = sbr.rel (%p915) target = $region72
    $region71: #{_lambda_.3} parent=5 // pred_region
      %s918 = ssub.s32 %s16, 2
      // Predicated region
      $region73: #{_lambda_.3} parent=71 // pred_check
        %p919 = pneg %p307
      $region74: #{_lambda_.3} parent=71 // pred_check_branch
        %921 = sbr.rel (%p919) target = $region76
      $region75: #{_lambda_.3} parent=71 // pred_region
        %p922 = scmp.lt.s32.totalorder %s27, 1
        %s923 = scalar_select %p922, %s27, 1
        %s924 = smul.addr %s923, 8
        %s925 = scalar_lea.vmem %s10, %s924
      $region76: #{_lambda_.3} parent=71 // pred_fallthru
        _
    $region72: #{_lambda_.3} parent=5 // pred_fallthru
      _
  $region6: #{_lambda_.3} parent=0 // loop_footer
    %s20 = sadd.s32 1, %s16
  $region7: #{_lambda_.3} parent=0 // loop_footer_branch
    %15 = sbr.rel target = $region3
  $region8: #{_lambda_.3} parent=0 // loop_exit
    _

// kernel: _lambda_.4
$region0: #{_lambda_.4}
  #allocation0 [shape = 'u32[]', space=smem, size = 0x4, offset = 0x4, fixed_abs, tag = 'smem constant byte address 0x4 - core index']
  #allocation1 [shape = 'u32[72,128]{1,0:T(1,128)}', space=vmem, size = 0x9000, scoped, tag = 'internal scratch']
  #allocation2 [shape = 'f32[8,32]{1,0:T(8,128)}', space=vmem, size = 0x1000, scoped, tag = 'scratch operand']
  %s0 = inlined_call_operand.vmem [shape: f32[2,8,32], index: 0, kind: input, shape index: {}]
  %s1 = inlined_call_operand.vmem [shape: f32[2,8,32], index: 1, kind: input, shape index: {}]
  %s2 = inlined_call_operand.vmem [shape: f32[2,8,8], index: 2, kind: input, shape index: {}]
  %s3 = inlined_call_operand.vmem [shape: f32[2,1,8], index: 3, kind: input, shape index: {}]
  %s4 = inlined_call_operand.vmem [shape: f32[2,1,32], index: 4, kind: input, shape index: {}]
  %s5 = inlined_call_operand.vmem [shape: bf16[2,2,32,48], index: 5, kind: input, shape index: {}]
  %s6 = inlined_call_operand.vmem [shape: bf16[2,2,16,32], index: 6, kind: input, shape index: {}]
  %s7 = inlined_call_operand.vmem [shape: f32[2,1,32], index: 7, kind: input, shape index: {}]
  %s8 = inlined_call_operand.vmem [shape: bf16[2,2,32,16], index: 8, kind: input, shape index: {}]
  %s9 = inlined_call_operand.vmem [shape: bf16[2,2,32,32], index: 9, kind: input, shape index: {}]
  %s10 = inlined_call_operand.vmem [shape: bf16[2,2,16,32], index: 10, kind: input, shape index: {}]
  %s11 = inlined_call_operand.vmem [shape: f32[2,1,32], index: 11, kind: input, shape index: {}]
  %s12 = inlined_call_operand.vmem [shape: bf16[2,32,64], index: 12, kind: input, shape index: {}]
  %s13 = inlined_call_operand.vmem [shape: bf16[2,64,32], index: 13, kind: input, shape index: {}]
  %s14 = inlined_call_operand.vmem [shape: f32[2,8,32], index: 14, kind: output, shape index: {}]
  %s15 = sld [smem:[#allocation0]]
  $region93: #{_lambda_.4} parent=0
    _
  %s17 = ssub.s32 1, %s15
  %s18 = scalar_select 0, %s17, %s15
  loop: start=0, step=1, limit=6
  $region2: #{_lambda_.4} parent=0 // loop_pre_header
    _
  $region3: #{_lambda_.4} parent=0 // loop_header
    %s20 = sphi 0, %s24
    %p21 = scmp.ge.s32.totalorder %s20, 6
    %s27 = sphi 0, %s39
    %s28 = sphi 0, %s35
    %s29 = sphi 0, %s27
    %s30 = sphi 0, %s28
    %s31 = sphi 0, %s29
    %s32 = sphi 0, %s30
    %s42 = sphi 0, %s44
    %s45 = sphi 0, %s42
    %s46 = sphi 0, %s45
    %s62 = sphi 0, %s46
    %s68 = sphi 0, %s70
    %s71 = sphi 0, %s68
    %s72 = sphi 0, %s71
    %s88 = sphi 0, %s72
    %s92 = sphi 0, %s92
    %s94 = sphi 0, %s92
    %s95 = sphi 0, %s94
    %s109 = sphi 0, %s95
    %s115 = sphi 0, %s117
    %s118 = sphi 0, %s115
    %s119 = sphi 0, %s118
    %s135 = sphi 0, %s119
    %s141 = sphi 0, %s143
    %s144 = sphi 0, %s141
    %s145 = sphi 0, %s144
    %s161 = sphi 0, %s145
    %s167 = sphi 0, %s169
    %s170 = sphi 0, %s167
    %s171 = sphi 0, %s170
    %s187 = sphi 0, %s171
    %s193 = sphi 0, %s195
    %s196 = sphi 0, %s193
    %s197 = sphi 0, %s196
    %s213 = sphi 0, %s197
    %s219 = sphi 0, %s221
    %s222 = sphi 0, %s219
    %s223 = sphi 0, %s222
    %s239 = sphi 0, %s223
    %s245 = sphi 0, %s247
    %s248 = sphi 0, %s245
    %s249 = sphi 0, %s248
    %s265 = sphi 0, %s249
    %s271 = sphi 0, %s273
    %s274 = sphi 0, %s271
    %s275 = sphi 0, %s274
    %s291 = sphi 0, %s275
    %s297 = sphi 0, %s299
    %s300 = sphi 0, %s297
    %s301 = sphi 0, %s300
    %s317 = sphi 0, %s301
    %s323 = sphi 0, %s325
    %s326 = sphi 0, %s323
    %s327 = sphi 0, %s326
    %s343 = sphi 0, %s327
    %s349 = sphi 0, %s351
    %s352 = sphi 0, %s349
    %s353 = sphi 0, %s352
    %s369 = sphi 0, %s353
    %s375 = sphi 0, %s377
    %s378 = sphi 0, %s375
    %s379 = sphi 0, %s378
    %s395 = sphi 0, %s379
    %s401 = sphi 0, %s403
    %s404 = sphi 0, %s401
    %s405 = sphi 0, %s404
    %s421 = sphi 0, %s405
  $region4: #{_lambda_.4} parent=0 // loop_header_branch
    %23 = sbr.rel (%p21) target = $region8
  $region5: #{_lambda_.4} parent=0 // loop_body
    %s25 = ssub.s32 %s20, 1
    %s26 = ssub.s32 %s20, 2
    %s33 = sadd.s32 1, %s28
    %p34 = scmp.ge.s32.totalorder %s33, 2
    %s35 = scalar_select %p34, 0, %s33
    %s36 = sadd.s32 1, %s27
    %s37 = scalar_select %p34, %s36, %s27
    %p38 = scmp.ge.s32.totalorder %s37, 2
    %s39 = scalar_select %p38, 0, %s37
    %s40 = ssub.s32 %s27, %s39
    %p41 = scmp.eq.s32.totalorder %s40, 0
    %s43 = sadd.s32 %s42, 1
    %s44 = scalar_select %p41, %s42, %s43
    %p47 = pneg %p41
    %p48 = scmp.eq.s32.totalorder %s20, 3
    %p49 = por %p47, %p48
    %p50 = scmp.ne.s32.totalorder %s42, %s45
    %p51 = scmp.eq.s32.totalorder %s20, 0
    %p52 = por %p50, %p51
    %p53 = scmp.ne.s32.totalorder %s42, %s45
    %p54 = scmp.eq.s32.totalorder %s25, 3
    %p55 = por %p53, %p54
    %p56 = scmp.ne.s32.totalorder %s45, %s46
    %p57 = scmp.eq.s32.totalorder %s25, 0
    %p58 = por %p56, %p57
    %p59 = scmp.ne.s32.totalorder %s45, %s46
    %p60 = scmp.eq.s32.totalorder %s26, 3
    %p61 = por %p59, %p60
    %p63 = scmp.ne.s32.totalorder %s46, %s62
    %p64 = scmp.eq.s32.totalorder %s26, 0
    %p65 = por %p63, %p64
    %s66 = ssub.s32 %s27, %s39
    %p67 = scmp.eq.s32.totalorder %s66, 0
    %s69 = sadd.s32 %s68, 1
    %s70 = scalar_select %p67, %s68, %s69
    %p73 = pneg %p67
    %p74 = scmp.eq.s32.totalorder %s20, 3
    %p75 = por %p73, %p74
    %p76 = scmp.ne.s32.totalorder %s68, %s71
    %p77 = scmp.eq.s32.totalorder %s20, 0
    %p78 = por %p76, %p77
    %p79 = scmp.ne.s32.totalorder %s68, %s71
    %p80 = scmp.eq.s32.totalorder %s25, 3
    %p81 = por %p79, %p80
    %p82 = scmp.ne.s32.totalorder %s71, %s72
    %p83 = scmp.eq.s32.totalorder %s25, 0
    %p84 = por %p82, %p83
    %p85 = scmp.ne.s32.totalorder %s71, %s72
    %p86 = scmp.eq.s32.totalorder %s26, 3
    %p87 = por %p85, %p86
    %p89 = scmp.ne.s32.totalorder %s72, %s88
    %p90 = scmp.eq.s32.totalorder %s26, 0
    %p91 = por %p89, %p90
    %s93 = sadd.s32 %s92, 1
    %p96 = scmp.eq.s32.totalorder %s20, 3
    %p97 = scmp.ne.s32.totalorder %s92, %s94
    %p98 = scmp.eq.s32.totalorder %s20, 0
    %p99 = por %p97, %p98
    %p100 = scmp.ne.s32.totalorder %s92, %s94
    %p101 = scmp.eq.s32.totalorder %s25, 3
    %p102 = por %p100, %p101
    %p103 = scmp.ne.s32.totalorder %s94, %s95
    %p104 = scmp.eq.s32.totalorder %s25, 0
    %p105 = por %p103, %p104
    %p106 = scmp.ne.s32.totalorder %s94, %s95
    %p107 = scmp.eq.s32.totalorder %s26, 3
    %p108 = por %p106, %p107
    %p110 = scmp.ne.s32.totalorder %s95, %s109
    %p111 = scmp.eq.s32.totalorder %s26, 0
    %p112 = por %p110, %p111
    %s113 = ssub.s32 %s27, %s39
    %p114 = scmp.eq.s32.totalorder %s113, 0
    %s116 = sadd.s32 %s115, 1
    %s117 = scalar_select %p114, %s115, %s116
    %p120 = pneg %p114
    %p121 = scmp.eq.s32.totalorder %s20, 3
    %p122 = por %p120, %p121
    %p123 = scmp.ne.s32.totalorder %s115, %s118
    %p124 = scmp.eq.s32.totalorder %s20, 0
    %p125 = por %p123, %p124
    %p126 = scmp.ne.s32.totalorder %s115, %s118
    %p127 = scmp.eq.s32.totalorder %s25, 3
    %p128 = por %p126, %p127
    %p129 = scmp.ne.s32.totalorder %s118, %s119
    %p130 = scmp.eq.s32.totalorder %s25, 0
    %p131 = por %p129, %p130
    %p132 = scmp.ne.s32.totalorder %s118, %s119
    %p133 = scmp.eq.s32.totalorder %s26, 3
    %p134 = por %p132, %p133
    %p136 = scmp.ne.s32.totalorder %s119, %s135
    %p137 = scmp.eq.s32.totalorder %s26, 0
    %p138 = por %p136, %p137
    %s139 = ssub.s32 %s28, %s35
    %p140 = scmp.eq.s32.totalorder %s139, 0
    %s142 = sadd.s32 %s141, 1
    %s143 = scalar_select %p140, %s141, %s142
    %p146 = pneg %p140
    %p147 = scmp.eq.s32.totalorder %s20, 3
    %p148 = por %p146, %p147
    %p149 = scmp.ne.s32.totalorder %s141, %s144
    %p150 = scmp.eq.s32.totalorder %s20, 0
    %p151 = por %p149, %p150
    %p152 = scmp.ne.s32.totalorder %s141, %s144
    %p153 = scmp.eq.s32.totalorder %s25, 3
    %p154 = por %p152, %p153
    %p155 = scmp.ne.s32.totalorder %s144, %s145
    %p156 = scmp.eq.s32.totalorder %s25, 0
    %p157 = por %p155, %p156
    %p158 = scmp.ne.s32.totalorder %s144, %s145
    %p159 = scmp.eq.s32.totalorder %s26, 3
    %p160 = por %p158, %p159
    %p162 = scmp.ne.s32.totalorder %s145, %s161
    %p163 = scmp.eq.s32.totalorder %s26, 0
    %p164 = por %p162, %p163
    %s165 = ssub.s32 %s28, %s35
    %p166 = scmp.eq.s32.totalorder %s165, 0
    %s168 = sadd.s32 %s167, 1
    %s169 = scalar_select %p166, %s167, %s168
    %p172 = pneg %p166
    %p173 = scmp.eq.s32.totalorder %s20, 3
    %p174 = por %p172, %p173
    %p175 = scmp.ne.s32.totalorder %s167, %s170
    %p176 = scmp.eq.s32.totalorder %s20, 0
    %p177 = por %p175, %p176
    %p178 = scmp.ne.s32.totalorder %s167, %s170
    %p179 = scmp.eq.s32.totalorder %s25, 3
    %p180 = por %p178, %p179
    %p181 = scmp.ne.s32.totalorder %s170, %s171
    %p182 = scmp.eq.s32.totalorder %s25, 0
    %p183 = por %p181, %p182
    %p184 = scmp.ne.s32.totalorder %s170, %s171
    %p185 = scmp.eq.s32.totalorder %s26, 3
    %p186 = por %p184, %p185
    %p188 = scmp.ne.s32.totalorder %s171, %s187
    %p189 = scmp.eq.s32.totalorder %s26, 0
    %p190 = por %p188, %p189
    %s191 = ssub.s32 %s28, %s35
    %p192 = scmp.eq.s32.totalorder %s191, 0
    %s194 = sadd.s32 %s193, 1
    %s195 = scalar_select %p192, %s193, %s194
    %p198 = pneg %p192
    %p199 = scmp.eq.s32.totalorder %s20, 3
    %p200 = por %p198, %p199
    %p201 = scmp.ne.s32.totalorder %s193, %s196
    %p202 = scmp.eq.s32.totalorder %s20, 0
    %p203 = por %p201, %p202
    %p204 = scmp.ne.s32.totalorder %s193, %s196
    %p205 = scmp.eq.s32.totalorder %s25, 3
    %p206 = por %p204, %p205
    %p207 = scmp.ne.s32.totalorder %s196, %s197
    %p208 = scmp.eq.s32.totalorder %s25, 0
    %p209 = por %p207, %p208
    %p210 = scmp.ne.s32.totalorder %s196, %s197
    %p211 = scmp.eq.s32.totalorder %s26, 3
    %p212 = por %p210, %p211
    %p214 = scmp.ne.s32.totalorder %s197, %s213
    %p215 = scmp.eq.s32.totalorder %s26, 0
    %p216 = por %p214, %p215
    %s217 = ssub.s32 %s28, %s35
    %p218 = scmp.eq.s32.totalorder %s217, 0
    %s220 = sadd.s32 %s219, 1
    %s221 = scalar_select %p218, %s219, %s220
    %p224 = pneg %p218
    %p225 = scmp.eq.s32.totalorder %s20, 3
    %p226 = por %p224, %p225
    %p227 = scmp.ne.s32.totalorder %s219, %s222
    %p228 = scmp.eq.s32.totalorder %s20, 0
    %p229 = por %p227, %p228
    %p230 = scmp.ne.s32.totalorder %s219, %s222
    %p231 = scmp.eq.s32.totalorder %s25, 3
    %p232 = por %p230, %p231
    %p233 = scmp.ne.s32.totalorder %s222, %s223
    %p234 = scmp.eq.s32.totalorder %s25, 0
    %p235 = por %p233, %p234
    %p236 = scmp.ne.s32.totalorder %s222, %s223
    %p237 = scmp.eq.s32.totalorder %s26, 3
    %p238 = por %p236, %p237
    %p240 = scmp.ne.s32.totalorder %s223, %s239
    %p241 = scmp.eq.s32.totalorder %s26, 0
    %p242 = por %p240, %p241
    %s243 = ssub.s32 %s28, %s35
    %p244 = scmp.eq.s32.totalorder %s243, 0
    %s246 = sadd.s32 %s245, 1
    %s247 = scalar_select %p244, %s245, %s246
    %p250 = pneg %p244
    %p251 = scmp.eq.s32.totalorder %s20, 3
    %p252 = por %p250, %p251
    %p253 = scmp.ne.s32.totalorder %s245, %s248
    %p254 = scmp.eq.s32.totalorder %s20, 0
    %p255 = por %p253, %p254
    %p256 = scmp.ne.s32.totalorder %s245, %s248
    %p257 = scmp.eq.s32.totalorder %s25, 3
    %p258 = por %p256, %p257
    %p259 = scmp.ne.s32.totalorder %s248, %s249
    %p260 = scmp.eq.s32.totalorder %s25, 0
    %p261 = por %p259, %p260
    %p262 = scmp.ne.s32.totalorder %s248, %s249
    %p263 = scmp.eq.s32.totalorder %s26, 3
    %p264 = por %p262, %p263
    %p266 = scmp.ne.s32.totalorder %s249, %s265
    %p267 = scmp.eq.s32.totalorder %s26, 0
    %p268 = por %p266, %p267
    %s269 = ssub.s32 %s28, %s35
    %p270 = scmp.eq.s32.totalorder %s269, 0
    %s272 = sadd.s32 %s271, 1
    %s273 = scalar_select %p270, %s271, %s272
    %p276 = pneg %p270
    %p277 = scmp.eq.s32.totalorder %s20, 3
    %p278 = por %p276, %p277
    %p279 = scmp.ne.s32.totalorder %s271, %s274
    %p280 = scmp.eq.s32.totalorder %s20, 0
    %p281 = por %p279, %p280
    %p282 = scmp.ne.s32.totalorder %s271, %s274
    %p283 = scmp.eq.s32.totalorder %s25, 3
    %p284 = por %p282, %p283
    %p285 = scmp.ne.s32.totalorder %s274, %s275
    %p286 = scmp.eq.s32.totalorder %s25, 0
    %p287 = por %p285, %p286
    %p288 = scmp.ne.s32.totalorder %s274, %s275
    %p289 = scmp.eq.s32.totalorder %s26, 3
    %p290 = por %p288, %p289
    %p292 = scmp.ne.s32.totalorder %s275, %s291
    %p293 = scmp.eq.s32.totalorder %s26, 0
    %p294 = por %p292, %p293
    %s295 = ssub.s32 %s28, %s35
    %p296 = scmp.eq.s32.totalorder %s295, 0
    %s298 = sadd.s32 %s297, 1
    %s299 = scalar_select %p296, %s297, %s298
    %p302 = pneg %p296
    %p303 = scmp.eq.s32.totalorder %s20, 3
    %p304 = por %p302, %p303
    %p305 = scmp.ne.s32.totalorder %s297, %s300
    %p306 = scmp.eq.s32.totalorder %s20, 0
    %p307 = por %p305, %p306
    %p308 = scmp.ne.s32.totalorder %s297, %s300
    %p309 = scmp.eq.s32.totalorder %s25, 3
    %p310 = por %p308, %p309
    %p311 = scmp.ne.s32.totalorder %s300, %s301
    %p312 = scmp.eq.s32.totalorder %s25, 0
    %p313 = por %p311, %p312
    %p314 = scmp.ne.s32.totalorder %s300, %s301
    %p315 = scmp.eq.s32.totalorder %s26, 3
    %p316 = por %p314, %p315
    %p318 = scmp.ne.s32.totalorder %s301, %s317
    %p319 = scmp.eq.s32.totalorder %s26, 0
    %p320 = por %p318, %p319
    %s321 = ssub.s32 %s28, %s35
    %p322 = scmp.eq.s32.totalorder %s321, 0
    %s324 = sadd.s32 %s323, 1
    %s325 = scalar_select %p322, %s323, %s324
    %p328 = pneg %p322
    %p329 = scmp.eq.s32.totalorder %s20, 3
    %p330 = por %p328, %p329
    %p331 = scmp.ne.s32.totalorder %s323, %s326
    %p332 = scmp.eq.s32.totalorder %s20, 0
    %p333 = por %p331, %p332
    %p334 = scmp.ne.s32.totalorder %s323, %s326
    %p335 = scmp.eq.s32.totalorder %s25, 3
    %p336 = por %p334, %p335
    %p337 = scmp.ne.s32.totalorder %s326, %s327
    %p338 = scmp.eq.s32.totalorder %s25, 0
    %p339 = por %p337, %p338
    %p340 = scmp.ne.s32.totalorder %s326, %s327
    %p341 = scmp.eq.s32.totalorder %s26, 3
    %p342 = por %p340, %p341
    %p344 = scmp.ne.s32.totalorder %s327, %s343
    %p345 = scmp.eq.s32.totalorder %s26, 0
    %p346 = por %p344, %p345
    %s347 = ssub.s32 %s28, %s35
    %p348 = scmp.eq.s32.totalorder %s347, 0
    %s350 = sadd.s32 %s349, 1
    %s351 = scalar_select %p348, %s349, %s350
    %p354 = pneg %p348
    %p355 = scmp.eq.s32.totalorder %s20, 3
    %p356 = por %p354, %p355
    %p357 = scmp.ne.s32.totalorder %s349, %s352
    %p358 = scmp.eq.s32.totalorder %s20, 0
    %p359 = por %p357, %p358
    %p360 = scmp.ne.s32.totalorder %s349, %s352
    %p361 = scmp.eq.s32.totalorder %s25, 3
    %p362 = por %p360, %p361
    %p363 = scmp.ne.s32.totalorder %s352, %s353
    %p364 = scmp.eq.s32.totalorder %s25, 0
    %p365 = por %p363, %p364
    %p366 = scmp.ne.s32.totalorder %s352, %s353
    %p367 = scmp.eq.s32.totalorder %s26, 3
    %p368 = por %p366, %p367
    %p370 = scmp.ne.s32.totalorder %s353, %s369
    %p371 = scmp.eq.s32.totalorder %s26, 0
    %p372 = por %p370, %p371
    %s373 = ssub.s32 %s28, %s35
    %p374 = scmp.eq.s32.totalorder %s373, 0
    %s376 = sadd.s32 %s375, 1
    %s377 = scalar_select %p374, %s375, %s376
    %p380 = pneg %p374
    %p381 = scmp.eq.s32.totalorder %s20, 3
    %p382 = por %p380, %p381
    %p383 = scmp.ne.s32.totalorder %s375, %s378
    %p384 = scmp.eq.s32.totalorder %s20, 0
    %p385 = por %p383, %p384
    %p386 = scmp.ne.s32.totalorder %s375, %s378
    %p387 = scmp.eq.s32.totalorder %s25, 3
    %p388 = por %p386, %p387
    %p389 = scmp.ne.s32.totalorder %s378, %s379
    %p390 = scmp.eq.s32.totalorder %s25, 0
    %p391 = por %p389, %p390
    %p392 = scmp.ne.s32.totalorder %s378, %s379
    %p393 = scmp.eq.s32.totalorder %s26, 3
    %p394 = por %p392, %p393
    %p396 = scmp.ne.s32.totalorder %s379, %s395
    %p397 = scmp.eq.s32.totalorder %s26, 0
    %p398 = por %p396, %p397
    %s399 = ssub.s32 %s27, %s39
    %p400 = scmp.eq.s32.totalorder %s399, 0
    %s402 = sadd.s32 %s401, 1
    %s403 = scalar_select %p400, %s401, %s402
    %p406 = pneg %p400
    %p407 = scmp.eq.s32.totalorder %s20, 3
    %p408 = por %p406, %p407
    %p409 = scmp.ne.s32.totalorder %s401, %s404
    %p410 = scmp.eq.s32.totalorder %s20, 0
    %p411 = por %p409, %p410
    %p412 = scmp.ne.s32.totalorder %s401, %s404
    %p413 = scmp.eq.s32.totalorder %s25, 3
    %p414 = por %p412, %p413
    %p415 = scmp.ne.s32.totalorder %s404, %s405
    %p416 = scmp.eq.s32.totalorder %s25, 0
    %p417 = por %p415, %p416
    %p418 = scmp.ne.s32.totalorder %s404, %s405
    %p419 = scmp.eq.s32.totalorder %s26, 3
    %p420 = por %p418, %p419
    %p422 = scmp.ne.s32.totalorder %s405, %s421
    %p423 = scmp.eq.s32.totalorder %s26, 0
    %p424 = por %p422, %p423
    %p425 = scmp.le.s32.totalorder 1, %s20
    %p426 = scmp.lt.s32.totalorder %s20, 5
    %p427 = pnand %p425, %p426
    %p428 = pneg %p427
    // Predicated region
    $region9: #{_lambda_.4} parent=5 // pred_check
      _
    $region10: #{_lambda_.4} parent=5 // pred_check_branch
      %430 = sbr.rel (%p427) target = $region12
    $region11: #{_lambda_.4} parent=5 // pred_region
      %s431 = ssub.s32 %s20, 1
      // Predicated region
      $region13: #{_lambda_.4} parent=11 // pred_check
        %p432 = pneg %p105
      $region14: #{_lambda_.4} parent=11 // pred_check_branch
        %434 = sbr.rel (%p432) target = $region16
      $region15: #{_lambda_.4} parent=11 // pred_region
        _
      $region16: #{_lambda_.4} parent=11 // pred_fallthru
        _
    $region12: #{_lambda_.4} parent=5 // pred_fallthru
      _
    %p435 = scmp.lt.s32.totalorder %s20, 4
    // Predicated region
    $region17: #{_lambda_.4} parent=5 // pred_check
      %p436 = pneg %p435
    $region18: #{_lambda_.4} parent=5 // pred_check_branch
      %438 = sbr.rel (%p436) target = $region20
    $region19: #{_lambda_.4} parent=5 // pred_region
      // Predicated region
      $region21: #{_lambda_.4} parent=19 // pred_check
        %p439 = pneg %p52
      $region22: #{_lambda_.4} parent=19 // pred_check_branch
        %441 = sbr.rel (%p439) target = $region24
      $region23: #{_lambda_.4} parent=19 // pred_region
        %p442 = scmp.lt.s32.totalorder %s27, 1
        %s443 = scalar_select %p442, %s27, 1
        %s444 = smul.addr %s443, 8
        %s445 = scalar_lea.vmem %s0, %s444
      $region24: #{_lambda_.4} parent=19 // pred_fallthru
        _
      // Predicated region
      $region25: #{_lambda_.4} parent=19 // pred_check
        %p446 = pneg %p78
      $region26: #{_lambda_.4} parent=19 // pred_check_branch
        %448 = sbr.rel (%p446) target = $region28
      $region27: #{_lambda_.4} parent=19 // pred_region
        %p449 = scmp.lt.s32.totalorder %s27, 1
        %s450 = scalar_select %p449, %s27, 1
        %s451 = smul.addr %s450, 8
        %s452 = scalar_lea.vmem %s1, %s451
      $region28: #{_lambda_.4} parent=19 // pred_fallthru
        _
      // Predicated region
      $region29: #{_lambda_.4} parent=19 // pred_check
        %p453 = pneg %p125
      $region30: #{_lambda_.4} parent=19 // pred_check_branch
        %455 = sbr.rel (%p453) target = $region32
      $region31: #{_lambda_.4} parent=19 // pred_region
        %p456 = scmp.lt.s32.totalorder %s27, 1
        %s457 = scalar_select %p456, %s27, 1
        %s458 = scalar_lea.vmem %s3, %s457
      $region32: #{_lambda_.4} parent=19 // pred_fallthru
        _
      // Predicated region
      $region33: #{_lambda_.4} parent=19 // pred_check
        %p459 = pneg %p151
      $region34: #{_lambda_.4} parent=19 // pred_check_branch
        %461 = sbr.rel (%p459) target = $region36
      $region35: #{_lambda_.4} parent=19 // pred_region
        %p462 = scmp.lt.s32.totalorder %s28, 1
        %s463 = scalar_select %p462, %s28, 1
        %s464 = scalar_lea.vmem %s4, %s463
      $region36: #{_lambda_.4} parent=19 // pred_fallthru
        _
      // Predicated region
      $region37: #{_lambda_.4} parent=19 // pred_check
        %p465 = pneg %p177
      $region38: #{_lambda_.4} parent=19 // pred_check_branch
        %467 = sbr.rel (%p465) target = $region40
      $region39: #{_lambda_.4} parent=19 // pred_region
        %p468 = scmp.lt.s32.totalorder %s28, 1
        %s469 = scalar_select %p468, %s28, 1
        %s470 = smul.addr %s469, 8
        %s471 = smul.addr %s470, 4
        %s472 = scalar_lea.vmem %s5, %s471
      $region40: #{_lambda_.4} parent=19 // pred_fallthru
        _
      // Predicated region
      $region41: #{_lambda_.4} parent=19 // pred_check
        %p473 = pneg %p203
      $region42: #{_lambda_.4} parent=19 // pred_check_branch
        %475 = sbr.rel (%p473) target = $region44
      $region43: #{_lambda_.4} parent=19 // pred_region
        %p476 = scmp.lt.s32.totalorder %s28, 1
        %s477 = scalar_select %p476, %s28, 1
        %s478 = smul.addr %s477, 4
        %s479 = smul.addr %s478, 4
        %s480 = scalar_lea.vmem %s6, %s479
      $region44: #{_lambda_.4} parent=19 // pred_fallthru
        _
      // Predicated region
      $region45: #{_lambda_.4} parent=19 // pred_check
        %p481 = pneg %p229
      $region46: #{_lambda_.4} parent=19 // pred_check_branch
        %483 = sbr.rel (%p481) target = $region48
      $region47: #{_lambda_.4} parent=19 // pred_region
        %p484 = scmp.lt.s32.totalorder %s28, 1
        %s485 = scalar_select %p484, %s28, 1
        %s486 = scalar_lea.vmem %s7, %s485
      $region48: #{_lambda_.4} parent=19 // pred_fallthru
        _
      // Predicated region
      $region49: #{_lambda_.4} parent=19 // pred_check
        %p487 = pneg %p255
      $region50: #{_lambda_.4} parent=19 // pred_check_branch
        %489 = sbr.rel (%p487) target = $region52
      $region51: #{_lambda_.4} parent=19 // pred_region
        %p490 = scmp.lt.s32.totalorder %s28, 1
        %s491 = scalar_select %p490, %s28, 1
        %s492 = smul.addr %s491, 8
        %s493 = smul.addr %s492, 4
        %s494 = scalar_lea.vmem %s8, %s493
      $region52: #{_lambda_.4} parent=19 // pred_fallthru
        _
      // Predicated region
      $region53: #{_lambda_.4} parent=19 // pred_check
        %p495 = pneg %p281
      $region54: #{_lambda_.4} parent=19 // pred_check_branch
        %497 = sbr.rel (%p495) target = $region56
      $region55: #{_lambda_.4} parent=19 // pred_region
        %p498 = scmp.lt.s32.totalorder %s28, 1
        %s499 = scalar_select %p498, %s28, 1
        %s500 = smul.addr %s499, 8
        %s501 = smul.addr %s500, 4
        %s502 = scalar_lea.vmem %s9, %s501
      $region56: #{_lambda_.4} parent=19 // pred_fallthru
        _
      // Predicated region
      $region57: #{_lambda_.4} parent=19 // pred_check
        %p503 = pneg %p307
      $region58: #{_lambda_.4} parent=19 // pred_check_branch
        %505 = sbr.rel (%p503) target = $region60
      $region59: #{_lambda_.4} parent=19 // pred_region
        %p506 = scmp.lt.s32.totalorder %s28, 1
        %s507 = scalar_select %p506, %s28, 1
        %s508 = smul.addr %s507, 4
        %s509 = smul.addr %s508, 4
        %s510 = scalar_lea.vmem %s10, %s509
      $region60: #{_lambda_.4} parent=19 // pred_fallthru
        _
      // Predicated region
      $region61: #{_lambda_.4} parent=19 // pred_check
        %p511 = pneg %p333
      $region62: #{_lambda_.4} parent=19 // pred_check_branch
        %513 = sbr.rel (%p511) target = $region64
      $region63: #{_lambda_.4} parent=19 // pred_region
        %p514 = scmp.lt.s32.totalorder %s28, 1
        %s515 = scalar_select %p514, %s28, 1
        %s516 = scalar_lea.vmem %s11, %s515
      $region64: #{_lambda_.4} parent=19 // pred_fallthru
        _
      // Predicated region
      $region65: #{_lambda_.4} parent=19 // pred_check
        %p517 = pneg %p359
      $region66: #{_lambda_.4} parent=19 // pred_check_branch
        %519 = sbr.rel (%p517) target = $region68
      $region67: #{_lambda_.4} parent=19 // pred_region
        %p520 = scmp.lt.s32.totalorder %s28, 1
        %s521 = scalar_select %p520, %s28, 1
        %s522 = smul.addr %s521, 4
        %s523 = smul.addr %s522, 4
        %s524 = scalar_lea.vmem %s12, %s523
      $region68: #{_lambda_.4} parent=19 // pred_fallthru
        _
      // Predicated region
      $region69: #{_lambda_.4} parent=19 // pred_check
        %p525 = pneg %p385
      $region70: #{_lambda_.4} parent=19 // pred_check_branch
        %527 = sbr.rel (%p525) target = $region72
      $region71: #{_lambda_.4} parent=19 // pred_region
        %p528 = scmp.lt.s32.totalorder %s28, 1
        %s529 = scalar_select %p528, %s28, 1
        %s530 = smul.addr %s529, 8
        %s531 = smul.addr %s530, 4
        %s532 = scalar_lea.vmem %s13, %s531
      $region72: #{_lambda_.4} parent=19 // pred_fallthru
        _
    $region20: #{_lambda_.4} parent=5 // pred_fallthru
      _
    %p533 = scmp.le.s32.totalorder 1, %s20
    %p534 = scmp.lt.s32.totalorder %s20, 5
    %p535 = pnand %p533, %p534
    %p536 = pneg %p535
    // Predicated region
    $region73: #{_lambda_.4} parent=5 // pred_check
      _
    $region74: #{_lambda_.4} parent=5 // pred_check_branch
      %538 = sbr.rel (%p535) target = $region76
    $region75: #{_lambda_.4} parent=5 // pred_region
      %s539 = ssub.s32 %s20, 1
      %p540 = scmp.lt.s32.totalorder %s29, 1
      %s541 = scalar_select %p540, %s29, 1
      %s542 = smul.addr %s541, 8
      %s543 = scalar_lea.vmem %s0, %s542
      %p544 = pneg %p58
      %p545 = pneg %p55
      %p546 = scmp.lt.s32.totalorder %s29, 1
      %s547 = scalar_select %p546, %s29, 1
      %s548 = smul.addr %s547, 8
      %s549 = scalar_lea.vmem %s1, %s548
      %p550 = pneg %p84
      %p551 = pneg %p81
      %p552 = pneg %p105
      %p553 = pneg %p102
      %p554 = scmp.lt.s32.totalorder %s29, 1
      %s555 = scalar_select %p554, %s29, 1
      %s556 = scalar_lea.vmem %s3, %s555
      %p557 = pneg %p131
      %p558 = pneg %p128
      %p559 = scmp.lt.s32.totalorder %s30, 1
      %s560 = scalar_select %p559, %s30, 1
      %s561 = scalar_lea.vmem %s4, %s560
      %p562 = pneg %p157
      %p563 = pneg %p154
      %p564 = scmp.lt.s32.totalorder %s30, 1
      %s565 = scalar_select %p564, %s30, 1
      %s566 = smul.addr %s565, 8
      %s567 = smul.addr %s566, 4
      %s568 = scalar_lea.vmem %s5, %s567
      %p569 = pneg %p183
      %p570 = pneg %p180
      %p571 = scmp.lt.s32.totalorder %s30, 1
      %s572 = scalar_select %p571, %s30, 1
      %s573 = smul.addr %s572, 4
      %s574 = smul.addr %s573, 4
      %s575 = scalar_lea.vmem %s6, %s574
      %p576 = pneg %p209
      %p577 = pneg %p206
      %p578 = scmp.lt.s32.totalorder %s30, 1
      %s579 = scalar_select %p578, %s30, 1
      %s580 = scalar_lea.vmem %s7, %s579
      %p581 = pneg %p235
      %p582 = pneg %p232
      %p583 = scmp.lt.s32.totalorder %s30, 1
      %s584 = scalar_select %p583, %s30, 1
      %s585 = smul.addr %s584, 8
      %s586 = smul.addr %s585, 4
      %s587 = scalar_lea.vmem %s8, %s586
      %p588 = pneg %p261
      %p589 = pneg %p258
      %p590 = scmp.lt.s32.totalorder %s30, 1
      %s591 = scalar_select %p590, %s30, 1
      %s592 = smul.addr %s591, 8
      %s593 = smul.addr %s592, 4
      %s594 = scalar_lea.vmem %s9, %s593
      %p595 = pneg %p287
      %p596 = pneg %p284
      %p597 = scmp.lt.s32.totalorder %s30, 1
      %s598 = scalar_select %p597, %s30, 1
      %s599 = smul.addr %s598, 4
      %s600 = smul.addr %s599, 4
      %s601 = scalar_lea.vmem %s10, %s600
      %p602 = pneg %p313
      %p603 = pneg %p310
      %p604 = scmp.lt.s32.totalorder %s30, 1
      %s605 = scalar_select %p604, %s30, 1
      %s606 = scalar_lea.vmem %s11, %s605
      %p607 = pneg %p339
      %p608 = pneg %p336
      %p609 = scmp.lt.s32.totalorder %s30, 1
      %s610 = scalar_select %p609, %s30, 1
      %s611 = smul.addr %s610, 4
      %s612 = smul.addr %s611, 4
      %s613 = scalar_lea.vmem %s12, %s612
      %p614 = pneg %p365
      %p615 = pneg %p362
      %p616 = scmp.lt.s32.totalorder %s30, 1
      %s617 = scalar_select %p616, %s30, 1
      %s618 = smul.addr %s617, 8
      %s619 = smul.addr %s618, 4
      %s620 = scalar_lea.vmem %s13, %s619
      %p621 = pneg %p391
      %p622 = pneg %p388
      %p623 = pneg %p417
      %p624 = pneg %p414
      %p625 = scmp.lt.s32.totalorder %s29, 1
      %s626 = scalar_select %p625, %s29, 1
      %s627 = smul.addr %s626, 8
      %s628 = scalar_lea.vmem %s14, %s627
      %p629 = scmp.lt.s32.totalorder %s29, 1
      %s630 = scalar_select %p629, %s29, 1
      %s631 = smul.addr %s630, 8
      %s632 = scalar_lea.vmem %s0, %s631
      %p633 = scmp.lt.s32.totalorder %s29, 1
      %s634 = scalar_select %p633, %s29, 1
      %s635 = smul.addr %s634, 8
      %s636 = scalar_lea.vmem %s1, %s635
      %p637 = scmp.lt.s32.totalorder %s29, 1
      %s638 = scalar_select %p637, %s29, 1
      %s639 = scalar_lea.vmem %s3, %s638
      %p640 = scmp.lt.s32.totalorder %s30, 1
      %s641 = scalar_select %p640, %s30, 1
      %s642 = scalar_lea.vmem %s4, %s641
      %p643 = scmp.lt.s32.totalorder %s30, 1
      %s644 = scalar_select %p643, %s30, 1
      %s645 = smul.addr %s644, 8
      %s646 = smul.addr %s645, 4
      %s647 = scalar_lea.vmem %s5, %s646
      %p648 = scmp.lt.s32.totalorder %s30, 1
      %s649 = scalar_select %p648, %s30, 1
      %s650 = smul.addr %s649, 4
      %s651 = smul.addr %s650, 4
      %s652 = scalar_lea.vmem %s6, %s651
      %p653 = scmp.lt.s32.totalorder %s30, 1
      %s654 = scalar_select %p653, %s30, 1
      %s655 = scalar_lea.vmem %s7, %s654
      %p656 = scmp.lt.s32.totalorder %s30, 1
      %s657 = scalar_select %p656, %s30, 1
      %s658 = smul.addr %s657, 8
      %s659 = smul.addr %s658, 4
      %s660 = scalar_lea.vmem %s8, %s659
      %p661 = scmp.lt.s32.totalorder %s30, 1
      %s662 = scalar_select %p661, %s30, 1
      %s663 = smul.addr %s662, 8
      %s664 = smul.addr %s663, 4
      %s665 = scalar_lea.vmem %s9, %s664
      %p666 = scmp.lt.s32.totalorder %s30, 1
      %s667 = scalar_select %p666, %s30, 1
      %s668 = smul.addr %s667, 4
      %s669 = smul.addr %s668, 4
      %s670 = scalar_lea.vmem %s10, %s669
      %p671 = scmp.lt.s32.totalorder %s30, 1
      %s672 = scalar_select %p671, %s30, 1
      %s673 = scalar_lea.vmem %s11, %s672
      %p674 = scmp.lt.s32.totalorder %s30, 1
      %s675 = scalar_select %p674, %s30, 1
      %s676 = smul.addr %s675, 4
      %s677 = smul.addr %s676, 4
      %s678 = scalar_lea.vmem %s12, %s677
      %p679 = scmp.lt.s32.totalorder %s30, 1
      %s680 = scalar_select %p679, %s30, 1
      %s681 = smul.addr %s680, 8
      %s682 = smul.addr %s681, 4
      %s683 = scalar_lea.vmem %s13, %s682
      %p684 = scmp.lt.s32.totalorder %s29, 1
      %s685 = scalar_select %p684, %s29, 1
      %s686 = smul.addr %s685, 8
      %s687 = scalar_lea.vmem %s14, %s686
      %p689 = scmp.eq.s32.totalorder %s30, 0
      // Predicated region
      $region77: #{_lambda_.4} parent=75 // pred_check
        %p690 = pneg %p689
      $region78: #{_lambda_.4} parent=75 // pred_check_branch
        %692 = sbr.rel (%p690) target = $region80
      $region79: #{_lambda_.4} parent=75 // pred_region
        %v693 = vld [vmem:[%s632] sm:$0xff]
        %vm694 = vcmask 261120
        %695 = vst.msk [vmem:[#allocation2] sm:$0xff] %vm694, %v693
      $region80: #{_lambda_.4} parent=75 // pred_fallthru
        _
      %v696 = vld [vmem:[#allocation2] sm:$0xff]
      %v697 = vld [vmem:[%s636] sm:$0xff]
      %v698 = vld [vmem:[%s2] sm:$0xff]
      %v699 = vld [vmem:[%s2 + $0x8] sm:$0xff]
      %v700 = vld [vmem:[%s639] sm:$0x1]
      %v701 = vld [vmem:[%s642] sm:$0x1]
      %v702 = vmul.f32 %v696, %v696
      %vm703 = vcmask 261120
      %v704 = vsel %vm703, %v702, 0.0
      %705 = vadd.xlane.f32.xlu0 %v704
      %v706 = vpop.xlane.xlu0 %705
      %v707 = vrcp.pop 32.0
      %v708 = vmul.f32 32.0, %v707
      %v709 = vsub.f32 1.0, %v708
      %v710 = vmul.f32 %v707, %v709
      %v711 = vadd.f32 %v707, %v710
      %vm712 = vweird.f32 %v707
      %v713 = vsel %vm712, %v707, %v711
      %v714 = vmul.f32 %v706, %v713
      %v715 = vadd.f32 %v714, 1e-06
      %v716 = vrsqrt.pop %v715
      %v717 = vmul.f32 %v716, %v715
      %v718 = vmul.f32 %v717, %v716
      %v719 = vmul.f32 0.5, %v718
      %v720 = vsub.f32 1.5, %v719
      %v721 = vmul.f32 %v716, %v720
      %vm722 = vweird.f32 %v715
      %vm723 = vweird.f32 %v716
      %vm724 = vmor %vm722, %vm723
      %v725 = vsel %vm724, %v716, %v721
      %v726 = vmul.f32 %v696, %v725
      %v728 = vperm.slane %v701, 0
      %v730 = vmul.f32 %v726, %v728
      %v731 = vld [vmem:[%s647] sm:$0xf]
      %v732 = vld [vmem:[%s647 + $0x4] sm:$0xf]
      %v733 = vld [vmem:[%s647 + $0x8] sm:$0xf]
      %v734 = vld [vmem:[%s647 + $0xc] sm:$0xf]
      %v735 = vld [vmem:[%s647 + $0x10] sm:$0xf]
      %v736 = vld [vmem:[%s647 + $0x14] sm:$0xf]
      %v737 = vld [vmem:[%s647 + $0x18] sm:$0xf]
      %v738 = vld [vmem:[%s647 + $0x1c] sm:$0xf]
      %v739 = vpack.c.bf16 %v730, %v730
      %v744 = vunpack.c.l.b16 %v731
      %v745 = vunpack.c.l.b16 %v732
      %v746 = vunpack.c.l.b16 %v733
      %v747 = vunpack.c.l.b16 %v734
      %v748 = vpack.c.b16 %v745, %v744
      %v749 = vpack.c.b16 %v747, %v746
      %v753 = vsel %vm703, %v739, 0
      %755 = vmatpush.bf16.msra.mxu0 0
      %756 = vmatpush.bf16.msra.mxu0 0
      %757 = vmatpush.bf16.msra.mxu0 0
      %758 = vmatpush.bf16.msra.mxu0 0
      %759 = vmatpush.bf16.msra.mxu0 0
      %760 = vmatpush.bf16.msra.mxu0 0
      %761 = vmatpush.bf16.msra.mxu0 %v749
      %762 = vmatpush.bf16.msra.mxu0 %v748
      %763 = vmatmul.bf16.gmra.mxu0 %v753
      %v764 = vpop.f32.mrf.mxu0
      %v765 = vadd.f32 0.0, %v764
      %v766 = vpop.f32.mrf.mxu0
      %767 = vdwg.mxu0
      %v772 = vunpack.c.l.b16 %v735
      %v773 = vunpack.c.l.b16 %v736
      %v774 = vunpack.c.l.b16 %v737
      %v775 = vunpack.c.l.b16 %v738
      %v776 = vpack.c.b16 %v773, %v772
      %v777 = vpack.c.b16 %v775, %v774
      %780 = vmatpush.bf16.msra.mxu0 0
      %781 = vmatpush.bf16.msra.mxu0 0
      %782 = vmatpush.bf16.msra.mxu0 0
      %783 = vmatpush.bf16.msra.mxu0 0
      %784 = vmatpush.bf16.msra.mxu0 0
      %785 = vmatpush.bf16.msra.mxu0 0
      %786 = vmatpush.bf16.msra.mxu0 %v777
      %787 = vmatpush.bf16.msra.mxu0 %v776
      %788 = vmatmul.bf16.gmra.mxu0 %v753
      %v789 = vpop.f32.mrf.mxu0
      %v790 = vadd.f32 0.0, %v789
      %v791 = vpop.f32.mrf.mxu0
      %792 = vdwg.mxu0
      %v793 = vpack.c.bf16 %v765, %v765
      %v794 = vpack.c.bf16 %v790, %v790
      %v796 = vunpack.c.l.b16 %v793
      %v797 = vpack.c.b16 %v796, %v796
      %798 = vrot.lane.b32.xlu0 %v797, 112
      %v799 = vpop.permute.xlu0 %798
      %vm800 = vcmask 130048
      %v802 = vsel %vm800, %v793, 0
      %v805 = vsel %vm800, %v799, 0
      %807 = vmatpush.bf16.xpose.msra.mxu0 0
      %808 = vmatpush.bf16.xpose.msra.mxu0 0
      %809 = vmatpush.bf16.xpose.msra.mxu0 0
      %810 = vmatpush.bf16.xpose.msra.mxu0 0
      %811 = vmatpush.bf16.xpose.msra.mxu0 0
      %812 = vmatpush.bf16.xpose.msra.mxu0 0
      %813 = vmatpush.bf16.xpose.msra.mxu0 0
      %814 = vmatpush.bf16.xpose.msra.mxu0 %v805
      %815 = vmatmul.bf16.gmra.mxu0 %v802
      %v816 = vpop.f32.mrf.mxu0
      %v817 = vadd.f32 %v698, %v816
      %v818 = vpop.f32.mrf.mxu0
      %819 = vdwg.mxu0
      %v821 = vunpack.c.l.b16 %v794
      %v822 = vpack.c.b16 %v821, %v821
      %823 = vrot.lane.b32.xlu0 %v822, 112
      %v824 = vpop.permute.xlu0 %823
      %v826 = vsel %vm800, %v794, 0
      %v829 = vsel %vm800, %v824, 0
      %831 = vmatpush.bf16.xpose.msra.mxu0 0
      %832 = vmatpush.bf16.xpose.msra.mxu0 0
      %833 = vmatpush.bf16.xpose.msra.mxu0 0
      %834 = vmatpush.bf16.xpose.msra.mxu0 0
      %835 = vmatpush.bf16.xpose.msra.mxu0 0
      %836 = vmatpush.bf16.xpose.msra.mxu0 0
      %837 = vmatpush.bf16.xpose.msra.mxu0 0
      %838 = vmatpush.bf16.xpose.msra.mxu0 %v829
      %839 = vmatmul.bf16.gmra.mxu0 %v826
      %v840 = vpop.f32.mrf.mxu0
      %v841 = vadd.f32 %v699, %v840
      %v842 = vpop.f32.mrf.mxu0
      %843 = vdwg.mxu0
      %vm844 = vcmask 64512
      %v845 = vsel %vm844, %v817, -inf
      %846 = vmax.xlane.f32.xlu0 %v845
      %v847 = vpop.xlane.xlu0 %846
      %v848 = vsel %vm844, %v841, -inf
      %849 = vmax.xlane.f32.xlu0 %v848
      %v850 = vpop.xlane.xlu0 %849
      %v851 = vsub.f32 %v817, %v847
      %v852 = vsub.f32 %v841, %v850
      %v853 = vmul.f32 %v851, 1.442695
      %v854 = vpow.pop %v853
      %v855 = vmul.f32 %v852, 1.442695
      %v856 = vpow.pop %v855
      %v857 = vsel %vm844, %v854, 0.0
      %858 = vadd.xlane.f32.xlu0 %v857
      %v859 = vpop.xlane.xlu0 %858
      %v860 = vsel %vm844, %v856, 0.0
      %861 = vadd.xlane.f32.xlu0 %v860
      %v862 = vpop.xlane.xlu0 %861
      %v863 = vrcp.pop %v859
      %v864 = vrcp.pop %v862
      %v865 = vmul.f32 %v854, %v863
      %v866 = vmul.f32 %v856, %v864
      %v867 = vpack.c.bf16 %v865, %v865
      %v868 = vpack.c.bf16 %v866, %v866
      %869 = vrot.lane.b32.xlu0 %v797, 96
      %v870 = vpop.permute.xlu0 %869
      %v872 = vsel %vm844, %v867, 0
      %vm874 = vcmask 1043456
      %v876 = vsel %vm874, %v870, 0
      %878 = vmatpush.bf16.msra.mxu0 0
      %879 = vmatpush.bf16.msra.mxu0 0
      %880 = vmatpush.bf16.msra.mxu0 0
      %881 = vmatpush.bf16.msra.mxu0 0
      %882 = vmatpush.bf16.msra.mxu0 0
      %883 = vmatpush.bf16.msra.mxu0 0
      %884 = vmatpush.bf16.msra.mxu0 0
      %885 = vmatpush.bf16.msra.mxu0 %v876
      %886 = vmatmul.bf16.gmra.mxu0 %v872
      %v887 = vpop.f32.mrf.mxu0
      %v888 = vadd.f32 0.0, %v887
      %v889 = vpop.f32.mrf.mxu0
      %890 = vdwg.mxu0
      %891 = vrot.lane.b32.xlu0 %v822, 96
      %v892 = vpop.permute.xlu0 %891
      %v894 = vsel %vm844, %v868, 0
      %v897 = vsel %vm874, %v892, 0
      %899 = vmatpush.bf16.msra.mxu0 0
      %900 = vmatpush.bf16.msra.mxu0 0
      %901 = vmatpush.bf16.msra.mxu0 0
      %902 = vmatpush.bf16.msra.mxu0 0
      %903 = vmatpush.bf16.msra.mxu0 0
      %904 = vmatpush.bf16.msra.mxu0 0
      %905 = vmatpush.bf16.msra.mxu0 0
      %906 = vmatpush.bf16.msra.mxu0 %v897
      %907 = vmatmul.bf16.gmra.mxu0 %v894
      %v908 = vpop.f32.mrf.mxu0
      %v909 = vadd.f32 0.0, %v908
      %v910 = vpop.f32.mrf.mxu0
      %911 = vdwg.mxu0
      %v912 = vld [vmem:[%s652] sm:$0xf]
      %v913 = vld [vmem:[%s652 + $0x4] sm:$0xf]
      %v914 = vld [vmem:[%s652 + $0x8] sm:$0xf]
      %v915 = vld [vmem:[%s652 + $0xc] sm:$0xf]
      %v916 = vpack.c.bf16 %v888, %v888
      %v917 = vpack.c.bf16 %v909, %v909
      %v920 = vunpack.c.l.b16 %v912
      %v921 = vunpack.c.l.b16 %v913
      %v922 = vpack.c.b16 %v921, %v920
      %v925 = vsel %vm800, %v916, 0
      %927 = vmatpush.bf16.msra.mxu0 0
      %928 = vmatpush.bf16.msra.mxu0 0
      %929 = vmatpush.bf16.msra.mxu0 0
      %930 = vmatpush.bf16.msra.mxu0 0
      %931 = vmatpush.bf16.msra.mxu0 0
      %932 = vmatpush.bf16.msra.mxu0 0
      %933 = vmatpush.bf16.msra.mxu0 0
      %934 = vmatpush.bf16.msra.mxu0 %v922
      %935 = vmatmul.bf16.gmra.mxu0 %v925
      %v936 = vpop.f32.mrf.mxu0
      %v937 = vadd.f32 0.0, %v936
      %v938 = vpop.f32.mrf.mxu0
      %939 = vdwg.mxu0
      %v942 = vunpack.c.l.b16 %v914
      %v943 = vunpack.c.l.b16 %v915
      %v944 = vpack.c.b16 %v943, %v942
      %v947 = vsel %vm800, %v917, 0
      %949 = vmatpush.bf16.msra.mxu0 0
      %950 = vmatpush.bf16.msra.mxu0 0
      %951 = vmatpush.bf16.msra.mxu0 0
      %952 = vmatpush.bf16.msra.mxu0 0
      %953 = vmatpush.bf16.msra.mxu0 0
      %954 = vmatpush.bf16.msra.mxu0 0
      %955 = vmatpush.bf16.msra.mxu0 0
      %956 = vmatpush.bf16.msra.mxu0 %v944
      %957 = vmatmul.bf16.gmra.mxu0 %v947
      %v958 = vpop.f32.mrf.mxu0
      %v959 = vadd.f32 0.0, %v958
      %v960 = vpop.f32.mrf.mxu0
      %961 = vdwg.mxu0
      %v962 = vsel %vm703, %v937, 0.0
      %v963 = vsel %vm703, %v959, 0.0
      %v964 = vadd.f32 %v962, %v963
      %v965 = vadd.f32 %v696, %v964
      %v966 = vld [vmem:[%s655] sm:$0x1]
      %v967 = vmul.f32 %v965, %v965
      %v968 = vsel %vm703, %v967, 0.0
      %969 = vadd.xlane.f32.xlu0 %v968
      %v970 = vpop.xlane.xlu0 %969
      %v971 = vmul.f32 %v970, %v713
      %v972 = vadd.f32 %v971, 1e-06
      %v973 = vrsqrt.pop %v972
      %v974 = vmul.f32 %v973, %v972
      %v975 = vmul.f32 %v974, %v973
      %v976 = vmul.f32 0.5, %v975
      %v977 = vsub.f32 1.5, %v976
      %v978 = vmul.f32 %v973, %v977
      %vm979 = vweird.f32 %v972
      %vm980 = vweird.f32 %v973
      %vm981 = vmor %vm979, %vm980
      %v982 = vsel %vm981, %v973, %v978
      %v983 = vmul.f32 %v965, %v982
      %v985 = vperm.slane %v966, 0
      %v987 = vmul.f32 %v983, %v985
      %v988 = vld [vmem:[%s660] sm:$0xf]
      %v989 = vld [vmem:[%s660 + $0x4] sm:$0xf]
      %v990 = vld [vmem:[%s660 + $0x8] sm:$0xf]
      %v991 = vld [vmem:[%s660 + $0xc] sm:$0xf]
      %v992 = vld [vmem:[%s660 + $0x10] sm:$0xf]
      %v993 = vld [vmem:[%s660 + $0x14] sm:$0xf]
      %v994 = vld [vmem:[%s660 + $0x18] sm:$0xf]
      %v995 = vld [vmem:[%s660 + $0x1c] sm:$0xf]
      %v996 = vpack.c.bf16 %v987, %v987
      %v1001 = vunpack.c.l.b16 %v988
      %v1002 = vunpack.c.l.b16 %v989
      %v1003 = vunpack.c.l.b16 %v990
      %v1004 = vunpack.c.l.b16 %v991
      %v1005 = vpack.c.b16 %v1002, %v1001
      %v1006 = vpack.c.b16 %v1004, %v1003
      %v1010 = vsel %vm703, %v996, 0
      %1012 = vmatpush.bf16.msra.mxu0 0
      %1013 = vmatpush.bf16.msra.mxu0 0
      %1014 = vmatpush.bf16.msra.mxu0 0
      %1015 = vmatpush.bf16.msra.mxu0 0
      %1016 = vmatpush.bf16.msra.mxu0 0
      %1017 = vmatpush.bf16.msra.mxu0 0
      %1018 = vmatpush.bf16.msra.mxu0 %v1006
      %1019 = vmatpush.bf16.msra.mxu0 %v1005
      %1020 = vmatmul.bf16.gmra.mxu0 %v1010
      %v1021 = vpop.f32.mrf.mxu0
      %v1022 = vadd.f32 0.0, %v1021
      %v1023 = vpop.f32.mrf.mxu0
      %1024 = vdwg.mxu0
      %v1029 = vunpack.c.l.b16 %v992
      %v1030 = vunpack.c.l.b16 %v993
      %v1031 = vunpack.c.l.b16 %v994
      %v1032 = vunpack.c.l.b16 %v995
      %v1033 = vpack.c.b16 %v1030, %v1029
      %v1034 = vpack.c.b16 %v1032, %v1031
      %1037 = vmatpush.bf16.msra.mxu0 0
      %1038 = vmatpush.bf16.msra.mxu0 0
      %1039 = vmatpush.bf16.msra.mxu0 0
      %1040 = vmatpush.bf16.msra.mxu0 0
      %1041 = vmatpush.bf16.msra.mxu0 0
      %1042 = vmatpush.bf16.msra.mxu0 0
      %1043 = vmatpush.bf16.msra.mxu0 %v1034
      %1044 = vmatpush.bf16.msra.mxu0 %v1033
      %1045 = vmatmul.bf16.gmra.mxu0 %v1010
      %v1046 = vpop.f32.mrf.mxu0
      %v1047 = vadd.f32 0.0, %v1046
      %v1048 = vpop.f32.mrf.mxu0
      %1049 = vdwg.mxu0
      %v1050 = vld [vmem:[%s665] sm:$0xf]
      %v1051 = vld [vmem:[%s665 + $0x4] sm:$0xf]
      %v1052 = vld [vmem:[%s665 + $0x8] sm:$0xf]
      %v1053 = vld [vmem:[%s665 + $0xc] sm:$0xf]
      %v1054 = vld [vmem:[%s665 + $0x10] sm:$0xf]
      %v1055 = vld [vmem:[%s665 + $0x14] sm:$0xf]
      %v1056 = vld [vmem:[%s665 + $0x18] sm:$0xf]
      %v1057 = vld [vmem:[%s665 + $0x1c] sm:$0xf]
      %v1058 = vpack.c.bf16 %v697, %v697
      %v1063 = vunpack.c.l.b16 %v1050
      %v1064 = vunpack.c.l.b16 %v1051
      %v1065 = vunpack.c.l.b16 %v1052
      %v1066 = vunpack.c.l.b16 %v1053
      %v1067 = vpack.c.b16 %v1064, %v1063
      %v1068 = vpack.c.b16 %v1066, %v1065
      %v1072 = vsel %vm703, %v1058, 0
      %1074 = vmatpush.bf16.msra.mxu0 0
      %1075 = vmatpush.bf16.msra.mxu0 0
      %1076 = vmatpush.bf16.msra.mxu0 0
      %1077 = vmatpush.bf16.msra.mxu0 0
      %1078 = vmatpush.bf16.msra.mxu0 0
      %1079 = vmatpush.bf16.msra.mxu0 0
      %1080 = vmatpush.bf16.msra.mxu0 %v1068
      %1081 = vmatpush.bf16.msra.mxu0 %v1067
      %1082 = vmatmul.bf16.gmra.mxu0 %v1072
      %v1083 = vpop.f32.mrf.mxu0
      %v1084 = vadd.f32 0.0, %v1083
      %v1085 = vpop.f32.mrf.mxu0
      %1086 = vdwg.mxu0
      %v1091 = vunpack.c.l.b16 %v1054
      %v1092 = vunpack.c.l.b16 %v1055
      %v1093 = vunpack.c.l.b16 %v1056
      %v1094 = vunpack.c.l.b16 %v1057
      %v1095 = vpack.c.b16 %v1092, %v1091
      %v1096 = vpack.c.b16 %v1094, %v1093
      %1099 = vmatpush.bf16.msra.mxu0 0
      %1100 = vmatpush.bf16.msra.mxu0 0
      %1101 = vmatpush.bf16.msra.mxu0 0
      %1102 = vmatpush.bf16.msra.mxu0 0
      %1103 = vmatpush.bf16.msra.mxu0 0
      %1104 = vmatpush.bf16.msra.mxu0 0
      %1105 = vmatpush.bf16.msra.mxu0 %v1096
      %1106 = vmatpush.bf16.msra.mxu0 %v1095
      %1107 = vmatmul.bf16.gmra.mxu0 %v1072
      %v1108 = vpop.f32.mrf.mxu0
      %v1109 = vadd.f32 0.0, %v1108
      %v1110 = vpop.f32.mrf.mxu0
      %1111 = vdwg.mxu0
      %v1112 = vpack.c.bf16 %v1022, %v1022
      %v1113 = vpack.c.bf16 %v1047, %v1047
      %v1114 = vpack.c.bf16 %v1084, %v1084
      %v1115 = vpack.c.bf16 %v1109, %v1109
      %v1117 = vperm.slane %v700, 0
      %v1120 = vsel %vm800, %v1112, 0
      %v1123 = vsel %vm800, %v1114, 0
      %1125 = vmatpush.bf16.xpose.msra.mxu0 0
      %1126 = vmatpush.bf16.xpose.msra.mxu0 0
      %1127 = vmatpush.bf16.xpose.msra.mxu0 0
      %1128 = vmatpush.bf16.xpose.msra.mxu0 0
      %1129 = vmatpush.bf16.xpose.msra.mxu0 0
      %1130 = vmatpush.bf16.xpose.msra.mxu0 0
      %1131 = vmatpush.bf16.xpose.msra.mxu0 0
      %1132 = vmatpush.bf16.xpose.msra.mxu0 %v1123
      %1133 = vmatmul.bf16.gmra.mxu0 %v1120
      %v1134 = vpop.f32.mrf.mxu0
      %v1135 = vadd.f32 %v1117, %v1134
      %v1136 = vpop.f32.mrf.mxu0
      %1137 = vdwg.mxu0
      %v1139 = vsel %vm800, %v1113, 0
      %v1142 = vsel %vm800, %v1115, 0
      %1144 = vmatpush.bf16.xpose.msra.mxu0 0
      %1145 = vmatpush.bf16.xpose.msra.mxu0 0
      %1146 = vmatpush.bf16.xpose.msra.mxu0 0
      %1147 = vmatpush.bf16.xpose.msra.mxu0 0
      %1148 = vmatpush.bf16.xpose.msra.mxu0 0
      %1149 = vmatpush.bf16.xpose.msra.mxu0 0
      %1150 = vmatpush.bf16.xpose.msra.mxu0 0
      %1151 = vmatpush.bf16.xpose.msra.mxu0 %v1142
      %1152 = vmatmul.bf16.gmra.mxu0 %v1139
      %v1153 = vpop.f32.mrf.mxu0
      %v1154 = vadd.f32 %v1117, %v1153
      %v1155 = vpop.f32.mrf.mxu0
      %1156 = vdwg.mxu0
      %v1157 = vsel %vm844, %v1135, -inf
      %1158 = vmax.xlane.f32.xlu0 %v1157
      %v1159 = vpop.xlane.xlu0 %1158
      %v1160 = vsel %vm844, %v1154, -inf
      %1161 = vmax.xlane.f32.xlu0 %v1160
      %v1162 = vpop.xlane.xlu0 %1161
      %v1163 = vsub.f32 %v1135, %v1159
      %v1164 = vsub.f32 %v1154, %v1162
      %v1165 = vmul.f32 %v1163, 1.442695
      %v1166 = vpow.pop %v1165
      %v1167 = vmul.f32 %v1164, 1.442695
      %v1168 = vpow.pop %v1167
      %v1169 = vsel %vm844, %v1166, 0.0
      %1170 = vadd.xlane.f32.xlu0 %v1169
      %v1171 = vpop.xlane.xlu0 %1170
      %v1172 = vsel %vm844, %v1168, 0.0
      %1173 = vadd.xlane.f32.xlu0 %v1172
      %v1174 = vpop.xlane.xlu0 %1173
      %v1175 = vrcp.pop %v1171
      %v1176 = vrcp.pop %v1174
      %v1177 = vmul.f32 %v1166, %v1175
      %v1178 = vmul.f32 %v1168, %v1176
      %v1179 = vpack.c.bf16 %v1177, %v1177
      %v1180 = vpack.c.bf16 %v1178, %v1178
      %v1182 = vunpack.c.l.b16 %v1114
      %v1183 = vpack.c.b16 %v1182, %v1182
      %1184 = vrot.lane.b32.xlu0 %v1183, 112
      %v1185 = vpop.permute.xlu0 %1184
      %v1187 = vsel %vm844, %v1179, 0
      %v1190 = vsel %vm874, %v1185, 0
      %1192 = vmatpush.bf16.msra.mxu0 0
      %1193 = vmatpush.bf16.msra.mxu0 0
      %1194 = vmatpush.bf16.msra.mxu0 0
      %1195 = vmatpush.bf16.msra.mxu0 0
      %1196 = vmatpush.bf16.msra.mxu0 0
      %1197 = vmatpush.bf16.msra.mxu0 0
      %1198 = vmatpush.bf16.msra.mxu0 0
      %1199 = vmatpush.bf16.msra.mxu0 %v1190
      %1200 = vmatmul.bf16.gmra.mxu0 %v1187
      %v1201 = vpop.f32.mrf.mxu0
      %v1202 = vadd.f32 0.0, %v1201
      %v1203 = vpop.f32.mrf.mxu0
      %1204 = vdwg.mxu0
      %v1206 = vunpack.c.l.b16 %v1115
      %v1207 = vpack.c.b16 %v1206, %v1206
      %1208 = vrot.lane.b32.xlu0 %v1207, 112
      %v1209 = vpop.permute.xlu0 %1208
      %v1211 = vsel %vm844, %v1180, 0
      %v1214 = vsel %vm874, %v1209, 0
      %1216 = vmatpush.bf16.msra.mxu0 0
      %1217 = vmatpush.bf16.msra.mxu0 0
      %1218 = vmatpush.bf16.msra.mxu0 0
      %1219 = vmatpush.bf16.msra.mxu0 0
      %1220 = vmatpush.bf16.msra.mxu0 0
      %1221 = vmatpush.bf16.msra.mxu0 0
      %1222 = vmatpush.bf16.msra.mxu0 0
      %1223 = vmatpush.bf16.msra.mxu0 %v1214
      %1224 = vmatmul.bf16.gmra.mxu0 %v1211
      %v1225 = vpop.f32.mrf.mxu0
      %v1226 = vadd.f32 0.0, %v1225
      %v1227 = vpop.f32.mrf.mxu0
      %1228 = vdwg.mxu0
      %v1229 = vld [vmem:[%s670] sm:$0xf]
      %v1230 = vld [vmem:[%s670 + $0x4] sm:$0xf]
      %v1231 = vld [vmem:[%s670 + $0x8] sm:$0xf]
      %v1232 = vld [vmem:[%s670 + $0xc] sm:$0xf]
      %v1233 = vpack.c.bf16 %v1202, %v1202
      %v1234 = vpack.c.bf16 %v1226, %v1226
      %v1237 = vunpack.c.l.b16 %v1229
      %v1238 = vunpack.c.l.b16 %v1230
      %v1239 = vpack.c.b16 %v1238, %v1237
      %v1242 = vsel %vm800, %v1233, 0
      %1244 = vmatpush.bf16.msra.mxu0 0
      %1245 = vmatpush.bf16.msra.mxu0 0
      %1246 = vmatpush.bf16.msra.mxu0 0
      %1247 = vmatpush.bf16.msra.mxu0 0
      %1248 = vmatpush.bf16.msra.mxu0 0
      %1249 = vmatpush.bf16.msra.mxu0 0
      %1250 = vmatpush.bf16.msra.mxu0 0
      %1251 = vmatpush.bf16.msra.mxu0 %v1239
      %1252 = vmatmul.bf16.gmra.mxu0 %v1242
      %v1253 = vpop.f32.mrf.mxu0
      %v1254 = vadd.f32 0.0, %v1253
      %v1255 = vpop.f32.mrf.mxu0
      %1256 = vdwg.mxu0
      %v1259 = vunpack.c.l.b16 %v1231
      %v1260 = vunpack.c.l.b16 %v1232
      %v1261 = vpack.c.b16 %v1260, %v1259
      %v1264 = vsel %vm800, %v1234, 0
      %1266 = vmatpush.bf16.msra.mxu0 0
      %1267 = vmatpush.bf16.msra.mxu0 0
      %1268 = vmatpush.bf16.msra.mxu0 0
      %1269 = vmatpush.bf16.msra.mxu0 0
      %1270 = vmatpush.bf16.msra.mxu0 0
      %1271 = vmatpush.bf16.msra.mxu0 0
      %1272 = vmatpush.bf16.msra.mxu0 0
      %1273 = vmatpush.bf16.msra.mxu0 %v1261
      %1274 = vmatmul.bf16.gmra.mxu0 %v1264
      %v1275 = vpop.f32.mrf.mxu0
      %v1276 = vadd.f32 0.0, %v1275
      %v1277 = vpop.f32.mrf.mxu0
      %1278 = vdwg.mxu0
      %v1279 = vsel %vm703, %v1254, 0.0
      %v1280 = vsel %vm703, %v1276, 0.0
      %v1281 = vadd.f32 %v1279, %v1280
      %v1282 = vadd.f32 %v965, %v1281
      %v1283 = vld [vmem:[%s673] sm:$0x1]
      %v1284 = vmul.f32 %v1282, %v1282
      %v1285 = vsel %vm703, %v1284, 0.0
      %1286 = vadd.xlane.f32.xlu0 %v1285
      %v1287 = vpop.xlane.xlu0 %1286
      %v1288 = vmul.f32 %v1287, %v713
      %v1289 = vadd.f32 %v1288, 1e-06
      %v1290 = vrsqrt.pop %v1289
      %v1291 = vmul.f32 %v1290, %v1289
      %v1292 = vmul.f32 %v1291, %v1290
      %v1293 = vmul.f32 0.5, %v1292
      %v1294 = vsub.f32 1.5, %v1293
      %v1295 = vmul.f32 %v1290, %v1294
      %vm1296 = vweird.f32 %v1289
      %vm1297 = vweird.f32 %v1290
      %vm1298 = vmor %vm1296, %vm1297
      %v1299 = vsel %vm1298, %v1290, %v1295
      %v1300 = vmul.f32 %v1282, %v1299
      %v1302 = vperm.slane %v1283, 0
      %v1304 = vmul.f32 %v1300, %v1302
      %v1305 = vld [vmem:[%s678] sm:$0xf]
      %v1306 = vld [vmem:[%s678 + $0x4] sm:$0xf]
      %v1307 = vld [vmem:[%s678 + $0x8] sm:$0xf]
      %v1308 = vld [vmem:[%s678 + $0xc] sm:$0xf]
      %v1309 = vpack.c.bf16 %v1304, %v1304
      %v1314 = vunpack.c.l.b16 %v1305
      %v1315 = vunpack.c.l.b16 %v1306
      %v1316 = vunpack.c.l.b16 %v1307
      %v1317 = vunpack.c.l.b16 %v1308
      %v1318 = vpack.c.b16 %v1315, %v1314
      %v1319 = vpack.c.b16 %v1317, %v1316
      %v1323 = vsel %vm703, %v1309, 0
      %1325 = vmatpush.bf16.msra.mxu0 0
      %1326 = vmatpush.bf16.msra.mxu0 0
      %1327 = vmatpush.bf16.msra.mxu0 0
      %1328 = vmatpush.bf16.msra.mxu0 0
      %1329 = vmatpush.bf16.msra.mxu0 0
      %1330 = vmatpush.bf16.msra.mxu0 0
      %1331 = vmatpush.bf16.msra.mxu0 %v1319
      %1332 = vmatpush.bf16.msra.mxu0 %v1318
      %1333 = vmatmul.bf16.gmra.mxu0 %v1323
      %v1334 = vpop.f32.mrf.mxu0
      %v1335 = vadd.f32 0.0, %v1334
      %v1336 = vpop.f32.mrf.mxu0
      %1337 = vdwg.mxu0
      %v1338 = vmax.f32 %v1335, 0.0
      %v1339 = vld [vmem:[%s683] sm:$0xf]
      %v1340 = vld [vmem:[%s683 + $0x4] sm:$0xf]
      %v1341 = vld [vmem:[%s683 + $0x8] sm:$0xf]
      %v1342 = vld [vmem:[%s683 + $0xc] sm:$0xf]
      %v1343 = vld [vmem:[%s683 + $0x10] sm:$0xf]
      %v1344 = vld [vmem:[%s683 + $0x14] sm:$0xf]
      %v1345 = vld [vmem:[%s683 + $0x18] sm:$0xf]
      %v1346 = vld [vmem:[%s683 + $0x1c] sm:$0xf]
      %v1347 = vpack.c.bf16 %v1338, %v1338
      %v1356 = vunpack.c.l.b16 %v1339
      %v1357 = vunpack.c.l.b16 %v1340
      %v1358 = vunpack.c.l.b16 %v1341
      %v1359 = vunpack.c.l.b16 %v1342
      %v1360 = vunpack.c.l.b16 %v1343
      %v1361 = vunpack.c.l.b16 %v1344
      %v1362 = vunpack.c.l.b16 %v1345
      %v1363 = vunpack.c.l.b16 %v1346
      %v1364 = vpack.c.b16 %v1357, %v1356
      %v1365 = vpack.c.b16 %v1359, %v1358
      %v1366 = vpack.c.b16 %v1361, %v1360
      %v1367 = vpack.c.b16 %v1363, %v1362
      %vm1372 = vcmask 523264
      %v1374 = vsel %vm1372, %v1347, 0
      %1376 = vmatpush.bf16.msra.mxu0 0
      %1377 = vmatpush.bf16.msra.mxu0 0
      %1378 = vmatpush.bf16.msra.mxu0 0
      %1379 = vmatpush.bf16.msra.mxu0 0
      %1380 = vmatpush.bf16.msra.mxu0 %v1367
      %1381 = vmatpush.bf16.msra.mxu0 %v1366
      %1382 = vmatpush.bf16.msra.mxu0 %v1365
      %1383 = vmatpush.bf16.msra.mxu0 %v1364
      %1384 = vmatmul.bf16.gmra.mxu0 %v1374
      %v1385 = vpop.f32.mrf.mxu0
      %v1386 = vadd.f32 0.0, %v1385
      %v1387 = vpop.f32.mrf.mxu0
      %1388 = vdwg.mxu0
      %v1389 = vadd.f32 %v1282, %v1386
      %1390 = vst.msk [vmem:[#allocation2] sm:$0xff] %vm703, %v1389
      %1391 = vst.msk [vmem:[%s687] sm:$0xff] %vm703, %v1389
      %p1392 = scmp.lt.s32.totalorder %s29, 1
      %s1393 = scalar_select %p1392, %s29, 1
      %s1394 = smul.addr %s1393, 8
      %s1395 = scalar_lea.vmem %s14, %s1394
      // Predicated region
      $region81: #{_lambda_.4} parent=75 // pred_check
        %p1396 = pneg %p414
      $region82: #{_lambda_.4} parent=75 // pred_check_branch
        %1398 = sbr.rel (%p1396) target = $region84
      $region83: #{_lambda_.4} parent=75 // pred_region
        _
      $region84: #{_lambda_.4} parent=75 // pred_fallthru
        _
    $region76: #{_lambda_.4} parent=5 // pred_fallthru
      _
    %p1399 = scmp.le.s32.totalorder 2, %s20
    // Predicated region
    $region85: #{_lambda_.4} parent=5 // pred_check
      %p1400 = pneg %p1399
    $region86: #{_lambda_.4} parent=5 // pred_check_branch
      %1402 = sbr.rel (%p1400) target = $region88
    $region87: #{_lambda_.4} parent=5 // pred_region
      %s1403 = ssub.s32 %s20, 2
      // Predicated region
      $region89: #{_lambda_.4} parent=87 // pred_check
        %p1404 = pneg %p420
      $region90: #{_lambda_.4} parent=87 // pred_check_branch
        %1406 = sbr.rel (%p1404) target = $region92
      $region91: #{_lambda_.4} parent=87 // pred_region
        %p1407 = scmp.lt.s32.totalorder %s31, 1
        %s1408 = scalar_select %p1407, %s31, 1
        %s1409 = smul.addr %s1408, 8
        %s1410 = scalar_lea.vmem %s14, %s1409
      $region92: #{_lambda_.4} parent=87 // pred_fallthru
        _
    $region88: #{_lambda_.4} parent=5 // pred_fallthru
      _
  $region6: #{_lambda_.4} parent=0 // loop_footer
    %s24 = sadd.s32 1, %s20
  $region7: #{_lambda_.4} parent=0 // loop_footer_branch
    %19 = sbr.rel target = $region3
  $region8: #{_lambda_.4} parent=0 // loop_exit
    _

</llo_original>
